<compile_context>
chip_gen: v6e
topology: v6e:2x2x1
jax: 0.10.0
libtpu: 0.0.40
codegen_flags: <defaults>
</compile_context>

<pallas_src>
import numpy as np
import jax
import jax.numpy as jnp
from jax.experimental import pallas as pl
from jax.experimental.pallas import tpu as pltpu


# ----------------------------------------------------------------------------
# Anchor utilities (host-side glue, mirror the reference helpers)
# ----------------------------------------------------------------------------
def generate_anchor_base(base_size=16, ratios=(0.5, 1, 2), scales=(8, 16, 32)):
    py = base_size / 2.0
    px = base_size / 2.0
    anchor_base = np.zeros((len(ratios) * len(scales), 4), dtype=np.float32)
    for i, r in enumerate(ratios):
        for j, s in enumerate(scales):
            h = base_size * s * np.sqrt(r)
            w = base_size * s * np.sqrt(1.0 / r)
            idx = i * len(scales) + j
            anchor_base[idx, 0] = py - h / 2.0
            anchor_base[idx, 1] = px - w / 2.0
            anchor_base[idx, 2] = py + h / 2.0
            anchor_base[idx, 3] = px + w / 2.0
    return anchor_base


def enumerate_shifted_anchor(anchor_base, feat_stride, feature_size):
    hh, ww = feature_size
    shift_y = np.arange(0, hh * feat_stride, feat_stride)
    shift_x = np.arange(0, ww * feat_stride, feat_stride)
    shift_x, shift_y = np.meshgrid(shift_x, shift_y)
    shift = np.stack((shift_y.ravel(), shift_x.ravel(),
                      shift_y.ravel(), shift_x.ravel()), axis=1).astype(np.float32)
    A = anchor_base.shape[0]
    K = shift.shape[0]
    anchors = anchor_base.reshape((1, A, 4)) + shift.reshape((K, 1, 4))
    return anchors.reshape((K * A, 4)).astype(np.float32)


# ----------------------------------------------------------------------------
# ProposalLayer (host-side numpy; the reference does this on CPU/numpy too)
# ----------------------------------------------------------------------------
def offset2bbox(anchors, offsets):
    h = anchors[:, 2] - anchors[:, 0]
    w = anchors[:, 3] - anchors[:, 1]
    cy = anchors[:, 0] + 0.5 * h
    cx = anchors[:, 1] + 0.5 * w
    dy, dx, dh, dw = offsets[:, 0], offsets[:, 1], offsets[:, 2], offsets[:, 3]
    ncy = dy * h + cy
    ncx = dx * w + cx
    nh = np.exp(dh) * h
    nw = np.exp(dw) * w
    roi = np.zeros_like(anchors)
    roi[:, 0] = ncy - 0.5 * nh
    roi[:, 1] = ncx - 0.5 * nw
    roi[:, 2] = ncy + 0.5 * nh
    roi[:, 3] = ncx + 0.5 * nw
    return roi


def nms_numpy(boxes, scores, thresh):
    y1, x1, y2, x2 = boxes[:, 0], boxes[:, 1], boxes[:, 2], boxes[:, 3]
    areas = (y2 - y1) * (x2 - x1)
    order = scores.argsort()[::-1]
    keep = []
    while order.size > 0:
        i = order[0]
        keep.append(i)
        yy1 = np.maximum(y1[i], y1[order[1:]])
        xx1 = np.maximum(x1[i], x1[order[1:]])
        yy2 = np.minimum(y2[i], y2[order[1:]])
        xx2 = np.minimum(x2[i], x2[order[1:]])
        inter = np.maximum(0.0, yy2 - yy1) * np.maximum(0.0, xx2 - xx1)
        iou = inter / (areas[i] + areas[order[1:]] - inter + 1e-9)
        order = order[1:][iou <= thresh]
    return np.asarray(keep, dtype=np.int64)


class ProposalLayer:
    # TODO(synk): NMS / proposal selection is data-dependent (variable output
    # size) and has no clean Pallas equivalent; kept on host in numpy exactly
    # like the reference (which calls .cpu().numpy() before proposing).
    def __init__(self, nms_thresh=0.7, n_train_pre_nms=12000,
                 n_train_post_nms=2000, min_size=16):
        self.nms_thresh = nms_thresh
        self.min_size = min_size
        # nn.Module.__init__ sets training=True, so the reference picks the
        # train sizes.
        self.n_pre_nms = n_train_pre_nms
        self.n_post_nms = n_train_post_nms

    def __call__(self, anchors, rpn_bbox_offset, rpn_softmax_scores, img_size, scale):
        roi = offset2bbox(anchors, rpn_bbox_offset)
        roi[:, 0] = np.clip(roi[:, 0], 0, img_size[0])
        roi[:, 2] = np.clip(roi[:, 2], 0, img_size[0])
        roi[:, 1] = np.clip(roi[:, 1], 0, img_size[1])
        roi[:, 3] = np.clip(roi[:, 3], 0, img_size[1])
        min_size = self.min_size * scale
        roi_h = roi[:, 2] - roi[:, 0]
        roi_w = roi[:, 3] - roi[:, 1]
        index_keep = np.where((roi_h >= min_size) & (roi_w >= min_size))[0]
        roi = roi[index_keep, :]
        scores = rpn_softmax_scores[index_keep]
        order = scores.ravel().argsort()[::-1]
        index_keep = order[:self.n_pre_nms]
        roi = roi[index_keep, :]
        scores = scores[index_keep]
        keep = nms_numpy(roi, scores, self.nms_thresh)[:self.n_post_nms]
        return roi[keep, :]


# ----------------------------------------------------------------------------
# Pallas kernel: 3x3 conv (im2col, one long-K matmul) + ReLU + fused heads
# ----------------------------------------------------------------------------
def make_rpn_kernel(TH, W, Cin, Cmid, NPAD):
    TW = TH * W

    def kernel(x_main_ref, x_halo_ref, w1_ref, b1_ref, wh_ref, bh_ref,
               out_ref, xp_s, patch_s):
        # Assemble this tile's (TH+2, W+2, Cin) padded row-slab from the main
        # block (TH padded rows) and the 2-row halo block, so the 3x3 conv
        # never reads outside its own tile.
        xp_s[0:TH, :, :] = x_main_ref[0]
        xp_s[TH:TH + 2, :, :] = x_halo_ref[0]

        # im2col: pack the 9 shifted taps along the K axis so the whole 3x3
        # conv becomes ONE long-K (9*Cin) MXU matmul instead of 9 short-K ones.
        for dy in range(3):
            for dx in range(3):
                tap = dy * 3 + dx
                patch_s[:, tap * Cin:(tap + 1) * Cin] = (
                    xp_s[dy:dy + TH, dx:dx + W, :].reshape(TW, Cin))

        # conv3x3 + bias + ReLU (bf16 operands, f32 accumulation on the MXU).
        hidden = jnp.dot(patch_s[...], w1_ref[...],
                         preferred_element_type=jnp.float32) + b1_ref[...]
        hidden = jnp.maximum(hidden, 0.0).astype(jnp.bfloat16)

        # Fused heads [bg(A) | fg(A) | loc(4A) | zero-pad] -> one 128-lane-dense
        # matmul + unmasked store.
        out_ref[0, :, :] = jnp.dot(hidden, wh_ref[...],
                                   preferred_element_type=jnp.float32) + bh_ref[...]

    return kernel


def _pick_row_tile(H, W):
    # Largest even row tile that divides H, keeps (TH*W) sublane-aligned and
    # gives at least 2 tiles (so v7x's 2 TensorCores both get work even at
    # batch size 1); otherwise the largest valid tile.
    cands = [t for t in (32, 16, 8, 4, 2) if H % t == 0 and (t * W) % 8 == 0]
    if not cands:
        raise ValueError(f"feature-map height {H} has no usable even row tile")
    for t in cands:
        if H // t >= 2:
            return t
    return cands[-1]


def _weight_spec(shape, single_buffer):
    index_map = lambda b, t: (0,) * len(shape)
    if single_buffer:
        # Grid-invariant operand: a single VMEM buffer is enough (it is never
        # re-DMAed) — saves ~half the weight VMEM at production sizes.
        return pl.BlockSpec(shape, index_map, pipeline_mode=pl.Buffered(1))
    return pl.BlockSpec(shape, index_map)


def rpn_heads_pallas(x_nchw, prepared, row_tile=None):
    """Conv3x3+ReLU + fused cls/loc heads. Returns (s_bg, s_fg, p_fg, loc)."""
    bs, Cin, H, W = x_nchw.shape
    w1, b1 = prepared["w1"], prepared["b1"]
    wh, bh = prepared["w_heads"], prepared["b_heads"]
    A, NPAD = prepared["n_anchor"], prepared["n_pad"]
    Cmid = w1.shape[-1]
    HW = H * W

    TH = row_tile if row_tile is not None else _pick_row_tile(H, W)
    if H % TH or TH % 2 or ((TH * W) % 8 and TH * W != HW):
        raise ValueError(f"bad row tile {TH} for feature map {H}x{W}")
    n_tiles = H // TH
    TW = TH * W

    # NCHW -> NHWC, bf16, zero pad (pad=1).
    # TODO(synk): if the backbone kept its feature map in NHWC/bf16 upstream,
    # this transpose+pad (one extra HBM round trip) would disappear.
    x_pad = jnp.pad(jnp.transpose(x_nchw, (0, 2, 3, 1)).astype(jnp.bfloat16),
                    ((0, 0), (1, 1), (1, 1), (0, 0)))

    kernel = make_rpn_kernel(TH, W, Cin, Cmid, NPAD)

    # Advisory cost so XLA schedules the surrounding reshapes sensibly.
    flops = 2 * bs * HW * (9 * Cin) * Cmid + 2 * bs * HW * Cmid * NPAD
    bytes_accessed = (x_pad.size * 2 + w1.size * 2 + wh.size * 2
                      + (b1.size + bh.size) * 4 + bs * HW * NPAD * 4)
    cost = pl.CostEstimate(flops=int(flops), transcendentals=0,
                           bytes_accessed=int(bytes_accessed))

    # Scoped-VMEM limit sized from the actual buffers (budget 2 buffers for the
    # weights in case single-buffering is not honored), with headroom;
    # raises v5e's 16 MiB default, stays within v7x's 64 MiB.
    bf, f4 = 2, 4
    need = (2 * (TH + 2) * (W + 2) * Cin * bf            # input main+halo, 2 bufs
            + 2 * TW * NPAD * f4                         # output slab, 2 bufs
            + 2 * (9 * Cin * Cmid + Cmid * NPAD) * bf    # weights (worst case)
            + 2 * (Cmid + NPAD) * f4                     # biases
            + ((TH + 2) * (W + 2) * Cin + TW * 9 * Cin) * bf)  # VMEM scratch
    vmem_limit = int(min(64 * 2 ** 20, max(4 * need, 32 * 2 ** 20)))

    def run(single_buffer_weights):
        in_specs = [
            # TH padded rows of this tile ...
            pl.BlockSpec((1, TH, W + 2, Cin), lambda b, t: (b, t, 0, 0)),
            # ... plus the next 2 padded rows (halo) as a second Blocked view
            # of the same padded array (TH is even, so the halo start
            # t*TH + TH is 2-aligned).
            pl.BlockSpec((1, 2, W + 2, Cin),
                         lambda b, t: (b, t * (TH // 2) + (TH // 2), 0, 0)),
            _weight_spec((9 * Cin, Cmid), single_buffer_weights),
            _weight_spec((1, Cmid), single_buffer_weights),
            _weight_spec((Cmid, NPAD), single_buffer_weights),
            _weight_spec((1, NPAD), single_buffer_weights),
        ]
        f = pl.pallas_call(
            kernel,
            out_shape=jax.ShapeDtypeStruct((bs, HW, NPAD), jnp.float32),
            grid=(bs, n_tiles),
            in_specs=in_specs,
            out_specs=pl.BlockSpec((1, TW, NPAD), lambda b, t: (b, t, 0)),
            scratch_shapes=[
                pltpu.VMEM((TH + 2, W + 2, Cin), jnp.bfloat16),  # halo-assembled tile
                pltpu.VMEM((TW, 9 * Cin), jnp.bfloat16),         # im2col patches
            ],
            compiler_params=pltpu.CompilerParams(
                dimension_semantics=("parallel", "parallel"),
                vmem_limit_bytes=vmem_limit),
            cost_estimate=cost,
        )
        # x_pad is passed twice: once for the main rows, once for the halo rows.
        return f(x_pad, x_pad, w1, b1, wh, bh)

    try:
        slab = run(single_buffer_weights=True)
    except Exception:
        # pl.Buffered(1) not supported by this JAX build: fall back to default
        # double-buffered weights (identical numerics).
        slab = run(single_buffer_weights=False)

    s_bg = slab[:, :, 0:A]
    s_fg = slab[:, :, A:2 * A]
    loc = slab[:, :, 2 * A:6 * A]
    # 2-class softmax fg prob == sigmoid(s_fg - s_bg); computed in the wrapper
    # so the kernel keeps a single lane-dense output.
    p_fg = jax.nn.sigmoid(s_fg - s_bg)
    return s_bg, s_fg, p_fg, loc


def rpn_heads_reference(x_nchw, prepared):
    """Pure-JAX/XLA reference mirroring the kernel math (bf16 matmuls, f32 acc)."""
    A = prepared["n_anchor"]
    bs, Cin, H, W = x_nchw.shape
    xp = jnp.pad(jnp.transpose(x_nchw, (0, 2, 3, 1)).astype(jnp.bfloat16),
                 ((0, 0), (1, 1), (1, 1), (0, 0)))
    taps = [xp[:, dy:dy + H, dx:dx + W, :].reshape(bs, H * W, Cin)
            for dy in range(3) for dx in range(3)]
    patch = jnp.concatenate(taps, axis=-1)
    hidden = jnp.einsum("bpk,km->bpm", patch, prepared["w1"],
                        preferred_element_type=jnp.float32) + prepared["b1"]
    hidden = jnp.maximum(hidden, 0.0).astype(jnp.bfloat16)
    slab = jnp.einsum("bpm,mn->bpn", hidden, prepared["w_heads"],
                      preferred_element_type=jnp.float32) + prepared["b_heads"]
    s_bg = slab[:, :, 0:A]
    s_fg = slab[:, :, A:2 * A]
    loc = slab[:, :, 2 * A:6 * A]
    return s_bg, s_fg, jax.nn.sigmoid(s_fg - s_bg), loc


# ----------------------------------------------------------------------------
# Parameter init (deterministic, mirrors kaiming_uniform_(a=1) / normal(0.01))
# and one-time fusion / flattening / bf16 cast of the weights.
# ----------------------------------------------------------------------------
def init_params(key, in_channels, mid_channels, n_anchor):
    k1, k2, k3 = jax.random.split(key, 3)
    fan_in = in_channels * 3 * 3
    bound = float(np.sqrt(3.0 / fan_in))  # kaiming_uniform_ with a=1
    return dict(
        # PyTorch conv weight layouts: (Cout, Cin, kh, kw) / (Cout, Cin)
        w_conv=jax.random.uniform(k1, (mid_channels, in_channels, 3, 3),
                                  jnp.float32, -bound, bound),
        b_conv=jnp.zeros((mid_channels,), jnp.float32),
        w_cls=0.01 * jax.random.normal(k2, (2 * n_anchor, mid_channels), jnp.float32),
        b_cls=jnp.zeros((2 * n_anchor,), jnp.float32),
        w_loc=0.01 * jax.random.normal(k3, (4 * n_anchor, mid_channels), jnp.float32),
        b_loc=jnp.zeros((4 * n_anchor,), jnp.float32),
    )


def prepare_params(params, n_anchor):
    """Fuse, flatten, zero-pad to 128 lanes and cast the RPN weights (once)."""
    A = n_anchor
    Cmid, Cin, _, _ = params["w_conv"].shape
    npad = max(128, ((6 * A + 127) // 128) * 128)
    # 3x3 conv -> im2col layout (9*Cin, Cmid); tap index = dy*3 + dx.
    w1 = jnp.transpose(params["w_conv"], (2, 3, 1, 0)).reshape(9 * Cin, Cmid)
    # cls conv channel layout is (anchor, {bg, fg}) interleaved: channel = 2a+k.
    w_bg = params["w_cls"][0::2].T
    w_fg = params["w_cls"][1::2].T
    w_loc = params["w_loc"].T
    w_heads = jnp.zeros((Cmid, npad), jnp.float32)
    w_heads = w_heads.at[:, 0:A].set(w_bg)
    w_heads = w_heads.at[:, A:2 * A].set(w_fg)
    w_heads = w_heads.at[:, 2 * A:6 * A].set(w_loc)
    b_heads = jnp.zeros((npad,), jnp.float32)
    b_heads = b_heads.at[0:A].set(params["b_cls"][0::2])
    b_heads = b_heads.at[A:2 * A].set(params["b_cls"][1::2])
    b_heads = b_heads.at[2 * A:6 * A].set(params["b_loc"])
    return dict(
        w1=w1.astype(jnp.bfloat16),
        b1=params["b_conv"].reshape(1, Cmid),
        w_heads=w_heads.astype(jnp.bfloat16),
        b_heads=b_heads.reshape(1, npad),
        n_anchor=A,
        n_pad=npad,
    )


# ----------------------------------------------------------------------------
# Full forward (matches RegionProposalNetwork.forward return signature)
# ----------------------------------------------------------------------------
def region_proposal_network_forward(x, img_size, scale, prepared, anchor_base,
                                    feat_stride=16):
    bs, _, hh, ww = x.shape
    anchors = enumerate_shifted_anchor(anchor_base, feat_stride, (hh, ww))
    A = anchor_base.shape[0]

    s_bg, s_fg, p_fg, loc = rpn_heads_pallas(x, prepared)

    rpn_cls_scores = jnp.stack([s_bg, s_fg], axis=-1).reshape(bs, hh * ww * A, 2)
    rpn_softmax_scores = p_fg.reshape(bs, hh * ww * A)
    rpn_offsets = loc.reshape(bs, hh * ww * A, 4)

    proposal_layer = ProposalLayer()
    # The reference ProposalLayer explicitly moves to CPU/numpy, so this
    # device->host sync is inherent to the module being reproduced.
    off_np = np.asarray(rpn_offsets)
    sc_np = np.asarray(rpn_softmax_scores)
    rois, rois_index = [], []
    for i in range(bs):
        roi = proposal_layer(anchors, off_np[i], sc_np[i], img_size, scale)
        rois.append(roi)
        rois_index.append(i * np.ones((roi.shape[0],), dtype=np.int32))
    rois = np.concatenate(rois, axis=0)
    rois_index = np.concatenate(rois_index, axis=0)

    return rois, rois_index, rpn_offsets, rpn_cls_scores, anchors


# ----------------------------------------------------------------------------
if __name__ == "__main__":
    # Small shapes consistent with the module: NCHW feature map into the RPN.
    bs, in_channels, mid_channels = 2, 16, 32
    hh = ww = 16
    feat_stride = 16
    anchor_base = generate_anchor_base(ratios=(0.5, 1, 2), scales=(8, 16, 32))
    n_anchor = anchor_base.shape[0]  # 9

    key = jax.random.PRNGKey(0)
    kx, kp = jax.random.split(key)
    x = jax.random.normal(kx, (bs, in_channels, hh, ww), jnp.float32)
    raw_params = init_params(kp, in_channels, mid_channels, n_anchor)
    prepared = prepare_params(raw_params, n_anchor)

    img_size = (hh * feat_stride, ww * feat_stride)
    scale = 1.0

    rois, rois_index, rpn_offsets, rpn_cls_scores, anchors = \
        region_proposal_network_forward(x, img_size, scale, prepared,
                                        anchor_base, feat_stride=feat_stride)
    jax.block_until_ready((rpn_offsets, rpn_cls_scores))

    # Numerics check of the Pallas path against a pure-JAX reference.
    got = rpn_heads_pallas(x, prepared)
    ref = rpn_heads_reference(x, prepared)
    for g, r in zip(got, ref):
        np.testing.assert_allclose(np.asarray(g), np.asarray(r),
                                   rtol=2e-2, atol=2e-3)

    assert rpn_offsets.shape == (bs, hh * ww * n_anchor, 4)
    assert rpn_cls_scores.shape == (bs, hh * ww * n_anchor, 2)
    assert anchors.shape == (hh * ww * n_anchor, 4)
    assert rois.shape[1] == 4 and rois_index.shape[0] == rois.shape[0]

    print("KERNEL_OK")
</pallas_src>

<mosaic_0001>
module attributes {stable_mosaic.version = 11 : i64} {
  func.func @kernel(%arg0: i32, %arg1: i32, %arg2: memref<1x8x18x16xbf16, #tpu.memory_space<vmem>>, %arg3: memref<1x2x18x16xbf16, #tpu.memory_space<vmem>>, %arg4: memref<144x32xbf16, #tpu.memory_space<vmem>>, %arg5: memref<1x32xf32, #tpu.memory_space<vmem>>, %arg6: memref<32x128xbf16, #tpu.memory_space<vmem>>, %arg7: memref<1x128xf32, #tpu.memory_space<vmem>>, %arg8: memref<1x128x128xf32, #tpu.memory_space<vmem>>, %arg9: memref<10x18x16xbf16, #tpu.memory_space<vmem>>, %arg10: memref<128x144xbf16, #tpu.memory_space<vmem>>) attributes {dimension_semantics = [#tpu.dimension_semantics<parallel>, #tpu.dimension_semantics<parallel>], iteration_bounds = array<i64: 2, 2>, scalar_prefetch = 0 : i64, scratch_operands = 2 : i64, tpu.core_type = #tpu.core_type<tc>, window_params = [{transform_indices = @transform_0, window_bounds = array<i64: 1, 8, 18, 16>}, {transform_indices = @transform_1, window_bounds = array<i64: 1, 2, 18, 16>}, {pipeline_mode = #tpu.pipeline_mode<synchronous>, transform_indices = @transform_2, window_bounds = array<i64: 144, 32>}, {pipeline_mode = #tpu.pipeline_mode<synchronous>, transform_indices = @transform_3, window_bounds = array<i64: 1, 32>}, {pipeline_mode = #tpu.pipeline_mode<synchronous>, transform_indices = @transform_4, window_bounds = array<i64: 32, 128>}, {pipeline_mode = #tpu.pipeline_mode<synchronous>, transform_indices = @transform_5, window_bounds = array<i64: 1, 128>}, {transform_indices = @transform_6, window_bounds = array<i64: 1, 128, 128>}]} {
    %c0 = arith.constant 0 : index
    %c0_0 = arith.constant 0 : index
    %c0_1 = arith.constant 0 : index
    %c0_2 = arith.constant 0 : index
    %0 = vector.load %arg2[%c0, %c0_0, %c0_1, %c0_2] : memref<1x8x18x16xbf16, #tpu.memory_space<vmem>>, vector<1x8x18x16xbf16>
    %1 = vector.shape_cast %0 : vector<1x8x18x16xbf16> to vector<8x18x16xbf16>
    %c0_3 = arith.constant 0 : index
    %c0_4 = arith.constant 0 : index
    %c0_5 = arith.constant 0 : index
    %2 = vector.load %arg9[%c0_3, %c0_4, %c0_5] : memref<10x18x16xbf16, #tpu.memory_space<vmem>>, vector<8x18x16xbf16>
    tpu.vector_store %arg9[%c0_3, %c0_4, %c0_5], %1 {strides = array<i32>} : memref<10x18x16xbf16, #tpu.memory_space<vmem>>, vector<8x18x16xbf16>,
    %c0_6 = arith.constant 0 : index
    %c0_7 = arith.constant 0 : index
    %c0_8 = arith.constant 0 : index
    %c0_9 = arith.constant 0 : index
    %3 = vector.load %arg3[%c0_6, %c0_7, %c0_8, %c0_9] : memref<1x2x18x16xbf16, #tpu.memory_space<vmem>>, vector<1x2x18x16xbf16>
    %4 = vector.shape_cast %3 : vector<1x2x18x16xbf16> to vector<2x18x16xbf16>
    %c8 = arith.constant 8 : index
    %c0_10 = arith.constant 0 : index
    %c0_11 = arith.constant 0 : index
    %5 = vector.load %arg9[%c8, %c0_10, %c0_11] : memref<10x18x16xbf16, #tpu.memory_space<vmem>>, vector<2x18x16xbf16>
    tpu.vector_store %arg9[%c8, %c0_10, %c0_11], %4 {strides = array<i32>} : memref<10x18x16xbf16, #tpu.memory_space<vmem>>, vector<2x18x16xbf16>,
    %c0_12 = arith.constant 0 : index
    %c0_13 = arith.constant 0 : index
    %c0_14 = arith.constant 0 : index
    %6 = vector.load %arg9[%c0_12, %c0_13, %c0_14] : memref<10x18x16xbf16, #tpu.memory_space<vmem>>, vector<8x16x16xbf16>
    %7 = vector.shape_cast %6 : vector<8x16x16xbf16> to vector<128x16xbf16>
    %c0_15 = arith.constant 0 : index
    %c0_16 = arith.constant 0 : index
    %8 = vector.load %arg10[%c0_15, %c0_16] : memref<128x144xbf16, #tpu.memory_space<vmem>>, vector<128x16xbf16>
    tpu.vector_store %arg10[%c0_15, %c0_16], %7 {strides = array<i32>} : memref<128x144xbf16, #tpu.memory_space<vmem>>, vector<128x16xbf16>,
    %c0_17 = arith.constant 0 : index
    %c1 = arith.constant 1 : index
    %c0_18 = arith.constant 0 : index
    %9 = vector.load %arg9[%c0_17, %c1, %c0_18] : memref<10x18x16xbf16, #tpu.memory_space<vmem>>, vector<8x16x16xbf16>
    %10 = vector.shape_cast %9 : vector<8x16x16xbf16> to vector<128x16xbf16>
    %c0_19 = arith.constant 0 : index
    %c16 = arith.constant 16 : index
    %11 = vector.load %arg10[%c0_19, %c16] : memref<128x144xbf16, #tpu.memory_space<vmem>>, vector<128x16xbf16>
    tpu.vector_store %arg10[%c0_19, %c16], %10 {strides = array<i32>} : memref<128x144xbf16, #tpu.memory_space<vmem>>, vector<128x16xbf16>,
    %c0_20 = arith.constant 0 : index
    %c2 = arith.constant 2 : index
    %c0_21 = arith.constant 0 : index
    %12 = vector.load %arg9[%c0_20, %c2, %c0_21] : memref<10x18x16xbf16, #tpu.memory_space<vmem>>, vector<8x16x16xbf16>
    %13 = vector.shape_cast %12 : vector<8x16x16xbf16> to vector<128x16xbf16>
    %c0_22 = arith.constant 0 : index
    %c32 = arith.constant 32 : index
    %14 = vector.load %arg10[%c0_22, %c32] : memref<128x144xbf16, #tpu.memory_space<vmem>>, vector<128x16xbf16>
    tpu.vector_store %arg10[%c0_22, %c32], %13 {strides = array<i32>} : memref<128x144xbf16, #tpu.memory_space<vmem>>, vector<128x16xbf16>,
    %c1_23 = arith.constant 1 : index
    %c0_24 = arith.constant 0 : index
    %c0_25 = arith.constant 0 : index
    %15 = vector.load %arg9[%c1_23, %c0_24, %c0_25] : memref<10x18x16xbf16, #tpu.memory_space<vmem>>, vector<8x16x16xbf16>
    %16 = vector.shape_cast %15 : vector<8x16x16xbf16> to vector<128x16xbf16>
    %c0_26 = arith.constant 0 : index
    %c48 = arith.constant 48 : index
    %17 = vector.load %arg10[%c0_26, %c48] : memref<128x144xbf16, #tpu.memory_space<vmem>>, vector<128x16xbf16>
    tpu.vector_store %arg10[%c0_26, %c48], %16 {strides = array<i32>} : memref<128x144xbf16, #tpu.memory_space<vmem>>, vector<128x16xbf16>,
    %c1_27 = arith.constant 1 : index
    %c1_28 = arith.constant 1 : index
    %c0_29 = arith.constant 0 : index
    %18 = vector.load %arg9[%c1_27, %c1_28, %c0_29] : memref<10x18x16xbf16, #tpu.memory_space<vmem>>, vector<8x16x16xbf16>
    %19 = vector.shape_cast %18 : vector<8x16x16xbf16> to vector<128x16xbf16>
    %c0_30 = arith.constant 0 : index
    %c64 = arith.constant 64 : index
    %20 = vector.load %arg10[%c0_30, %c64] : memref<128x144xbf16, #tpu.memory_space<vmem>>, vector<128x16xbf16>
    tpu.vector_store %arg10[%c0_30, %c64], %19 {strides = array<i32>} : memref<128x144xbf16, #tpu.memory_space<vmem>>, vector<128x16xbf16>,
    %c1_31 = arith.constant 1 : index
    %c2_32 = arith.constant 2 : index
    %c0_33 = arith.constant 0 : index
    %21 = vector.load %arg9[%c1_31, %c2_32, %c0_33] : memref<10x18x16xbf16, #tpu.memory_space<vmem>>, vector<8x16x16xbf16>
    %22 = vector.shape_cast %21 : vector<8x16x16xbf16> to vector<128x16xbf16>
    %c0_34 = arith.constant 0 : index
    %c80 = arith.constant 80 : index
    %23 = vector.load %arg10[%c0_34, %c80] : memref<128x144xbf16, #tpu.memory_space<vmem>>, vector<128x16xbf16>
    tpu.vector_store %arg10[%c0_34, %c80], %22 {strides = array<i32>} : memref<128x144xbf16, #tpu.memory_space<vmem>>, vector<128x16xbf16>,
    %c2_35 = arith.constant 2 : index
    %c0_36 = arith.constant 0 : index
    %c0_37 = arith.constant 0 : index
    %24 = vector.load %arg9[%c2_35, %c0_36, %c0_37] : memref<10x18x16xbf16, #tpu.memory_space<vmem>>, vector<8x16x16xbf16>
    %25 = vector.shape_cast %24 : vector<8x16x16xbf16> to vector<128x16xbf16>
    %c0_38 = arith.constant 0 : index
    %c96 = arith.constant 96 : index
    %26 = vector.load %arg10[%c0_38, %c96] : memref<128x144xbf16, #tpu.memory_space<vmem>>, vector<128x16xbf16>
    tpu.vector_store %arg10[%c0_38, %c96], %25 {strides = array<i32>} : memref<128x144xbf16, #tpu.memory_space<vmem>>, vector<128x16xbf16>,
    %c2_39 = arith.constant 2 : index
    %c1_40 = arith.constant 1 : index
    %c0_41 = arith.constant 0 : index
    %27 = vector.load %arg9[%c2_39, %c1_40, %c0_41] : memref<10x18x16xbf16, #tpu.memory_space<vmem>>, vector<8x16x16xbf16>
    %28 = vector.shape_cast %27 : vector<8x16x16xbf16> to vector<128x16xbf16>
    %c0_42 = arith.constant 0 : index
    %c112 = arith.constant 112 : index
    %29 = vector.load %arg10[%c0_42, %c112] : memref<128x144xbf16, #tpu.memory_space<vmem>>, vector<128x16xbf16>
    tpu.vector_store %arg10[%c0_42, %c112], %28 {strides = array<i32>} : memref<128x144xbf16, #tpu.memory_space<vmem>>, vector<128x16xbf16>,
    %c2_43 = arith.constant 2 : index
    %c2_44 = arith.constant 2 : index
    %c0_45 = arith.constant 0 : index
    %30 = vector.load %arg9[%c2_43, %c2_44, %c0_45] : memref<10x18x16xbf16, #tpu.memory_space<vmem>>, vector<8x16x16xbf16>
    %31 = vector.shape_cast %30 : vector<8x16x16xbf16> to vector<128x16xbf16>
    %c0_46 = arith.constant 0 : index
    %c128 = arith.constant 128 : index
    %32 = vector.load %arg10[%c0_46, %c128] : memref<128x144xbf16, #tpu.memory_space<vmem>>, vector<128x16xbf16>
    tpu.vector_store %arg10[%c0_46, %c128], %31 {strides = array<i32>} : memref<128x144xbf16, #tpu.memory_space<vmem>>, vector<128x16xbf16>,
    %c0_47 = arith.constant 0 : index
    %c0_48 = arith.constant 0 : index
    %33 = vector.load %arg10[%c0_47, %c0_48] : memref<128x144xbf16, #tpu.memory_space<vmem>>, vector<128x144xbf16>
    %c0_49 = arith.constant 0 : index
    %c0_50 = arith.constant 0 : index
    %34 = vector.load %arg4[%c0_49, %c0_50] : memref<144x32xbf16, #tpu.memory_space<vmem>>, vector<144x32xbf16>
    %cst = arith.constant dense<0.000000e+00> : vector<128x32xf32>
    %35 = tpu.matmul %33, %34, %cst {dimension_numbers = #tpu.dot_dimension_numbers<[1], [0], [0], [1], [0, 0, 1, 1], [], []>} : vector<128x144xbf16>, vector<144x32xbf16>, vector<128x32xf32> -> vector<128x32xf32>
    %c0_51 = arith.constant 0 : index
    %c0_52 = arith.constant 0 : index
    %36 = vector.load %arg5[%c0_51, %c0_52] : memref<1x32xf32, #tpu.memory_space<vmem>>, vector<1x32xf32>
    %37 = vector.broadcast %36 : vector<1x32xf32> to vector<128x32xf32>
    %38 = arith.addf %35, %37 : vector<128x32xf32>
    %cst_53 = arith.constant 0.000000e+00 : f32
    %39 = vector.broadcast %cst_53 : f32 to vector<128x32xf32>
    %40 = arith.maximumf %38, %39 : vector<128x32xf32>
    %41 = arith.truncf %40 : vector<128x32xf32> to vector<128x32xbf16>
    %c0_54 = arith.constant 0 : index
    %c0_55 = arith.constant 0 : index
    %42 = vector.load %arg6[%c0_54, %c0_55] : memref<32x128xbf16, #tpu.memory_space<vmem>>, vector<32x128xbf16>
    %cst_56 = arith.constant dense<0.000000e+00> : vector<128x128xf32>
    %43 = tpu.matmul %41, %42, %cst_56 {dimension_numbers = #tpu.dot_dimension_numbers<[1], [0], [0], [1], [0, 0, 1, 1], [], []>} : vector<128x32xbf16>, vector<32x128xbf16>, vector<128x128xf32> -> vector<128x128xf32>
    %c0_57 = arith.constant 0 : index
    %c0_58 = arith.constant 0 : index
    %44 = vector.load %arg7[%c0_57, %c0_58] : memref<1x128xf32, #tpu.memory_space<vmem>>, vector<1x128xf32>
    %45 = vector.broadcast %44 : vector<1x128xf32> to vector<128x128xf32>
    %46 = arith.addf %43, %45 : vector<128x128xf32>
    %c0_59 = arith.constant 0 : index
    %c0_60 = arith.constant 0 : index
    %c0_61 = arith.constant 0 : index
    %47 = vector.load %arg8[%c0_59, %c0_60, %c0_61] : memref<1x128x128xf32, #tpu.memory_space<vmem>>, vector<1x128x128xf32>
    %48 = vector.shape_cast %47 : vector<1x128x128xf32> to vector<128x128xf32>
    %49 = vector.shape_cast %46 : vector<128x128xf32> to vector<1x128x128xf32>
    tpu.vector_store %arg8[%c0_59, %c0_60, %c0_61], %49 {strides = array<i32>} : memref<1x128x128xf32, #tpu.memory_space<vmem>>, vector<1x128x128xf32>,
    return
  }
  func.func @transform_0(%arg0: i32, %arg1: i32) -> (i32, i32, i32, i32) {
    %c0_i32 = arith.constant 0 : i32
    %c0_i32_0 = arith.constant 0 : i32
    %c0_i32_1 = arith.constant 0 : i32
    return %arg0, %arg1, %c0_i32, %c0_i32_0 : i32, i32, i32, i32
  }
  func.func @transform_1(%arg0: i32, %arg1: i32) -> (i32, i32, i32, i32) {
    %c4_i32 = arith.constant 4 : i32
    %0 = arith.muli %arg1, %c4_i32 : i32
    %c4_i32_0 = arith.constant 4 : i32
    %1 = arith.addi %0, %c4_i32_0 : i32
    %c0_i32 = arith.constant 0 : i32
    %c0_i32_1 = arith.constant 0 : i32
    %c0_i32_2 = arith.constant 0 : i32
    return %arg0, %1, %c0_i32, %c0_i32_1 : i32, i32, i32, i32
  }
  func.func @transform_2(%arg0: i32, %arg1: i32) -> (i32, i32) {
    %c0_i32 = arith.constant 0 : i32
    %c0_i32_0 = arith.constant 0 : i32
    %c0_i32_1 = arith.constant 0 : i32
    return %c0_i32, %c0_i32_0 : i32, i32
  }
  func.func @transform_3(%arg0: i32, %arg1: i32) -> (i32, i32) {
    %c0_i32 = arith.constant 0 : i32
    %c0_i32_0 = arith.constant 0 : i32
    %c0_i32_1 = arith.constant 0 : i32
    return %c0_i32, %c0_i32_0 : i32, i32
  }
  func.func @transform_4(%arg0: i32, %arg1: i32) -> (i32, i32) {
    %c0_i32 = arith.constant 0 : i32
    %c0_i32_0 = arith.constant 0 : i32
    %c0_i32_1 = arith.constant 0 : i32
    return %c0_i32, %c0_i32_0 : i32, i32
  }
  func.func @transform_5(%arg0: i32, %arg1: i32) -> (i32, i32) {
    %c0_i32 = arith.constant 0 : i32
    %c0_i32_0 = arith.constant 0 : i32
    %c0_i32_1 = arith.constant 0 : i32
    return %c0_i32, %c0_i32_0 : i32, i32
  }
  func.func @transform_6(%arg0: i32, %arg1: i32) -> (i32, i32, i32) {
    %c0_i32 = arith.constant 0 : i32
    %c0_i32_0 = arith.constant 0 : i32
    return %arg0, %arg1, %c0_i32 : i32, i32, i32
  }
}

module attributes {stable_mosaic.version = 11 : i64} {
  func.func @kernel(%arg0: i32, %arg1: i32, %arg2: memref<1x8x18x16xbf16, #tpu.memory_space<vmem>>, %arg3: memref<1x2x18x16xbf16, #tpu.memory_space<vmem>>, %arg4: memref<144x32xbf16, #tpu.memory_space<vmem>>, %arg5: memref<1x32xf32, #tpu.memory_space<vmem>>, %arg6: memref<32x128xbf16, #tpu.memory_space<vmem>>, %arg7: memref<1x128xf32, #tpu.memory_space<vmem>>, %arg8: memref<1x128x128xf32, #tpu.memory_space<vmem>>, %arg9: memref<10x18x16xbf16, #tpu.memory_space<vmem>>, %arg10: memref<128x144xbf16, #tpu.memory_space<vmem>>) attributes {dimension_semantics = [#tpu.dimension_semantics<parallel>, #tpu.dimension_semantics<parallel>], iteration_bounds = array<i64: 2, 2>, scalar_prefetch = 0 : i64, scratch_operands = 2 : i64, tpu.core_type = #tpu.core_type<tc>, window_params = [{transform_indices = @transform_0, window_bounds = array<i64: 1, 8, 18, 16>}, {transform_indices = @transform_1, window_bounds = array<i64: 1, 2, 18, 16>}, {pipeline_mode = #tpu.pipeline_mode<synchronous>, transform_indices = @transform_2, window_bounds = array<i64: 144, 32>}, {pipeline_mode = #tpu.pipeline_mode<synchronous>, transform_indices = @transform_3, window_bounds = array<i64: 1, 32>}, {pipeline_mode = #tpu.pipeline_mode<synchronous>, transform_indices = @transform_4, window_bounds = array<i64: 32, 128>}, {pipeline_mode = #tpu.pipeline_mode<synchronous>, transform_indices = @transform_5, window_bounds = array<i64: 1, 128>}, {transform_indices = @transform_6, window_bounds = array<i64: 1, 128, 128>}]} {
    %c0 = arith.constant 0 : index
    %c0_0 = arith.constant 0 : index
    %c0_1 = arith.constant 0 : index
    %c0_2 = arith.constant 0 : index
    %0 = vector.load %arg2[%c0, %c0_0, %c0_1, %c0_2] : memref<1x8x18x16xbf16, #tpu.memory_space<vmem>>, vector<1x8x18x16xbf16>
    %1 = vector.shape_cast %0 : vector<1x8x18x16xbf16> to vector<8x18x16xbf16>
    %c0_3 = arith.constant 0 : index
    %c0_4 = arith.constant 0 : index
    %c0_5 = arith.constant 0 : index
    %2 = vector.load %arg9[%c0_3, %c0_4, %c0_5] : memref<10x18x16xbf16, #tpu.memory_space<vmem>>, vector<8x18x16xbf16>
    tpu.vector_store %arg9[%c0_3, %c0_4, %c0_5], %1 {strides = array<i32>} : memref<10x18x16xbf16, #tpu.memory_space<vmem>>, vector<8x18x16xbf16>,
    %c0_6 = arith.constant 0 : index
    %c0_7 = arith.constant 0 : index
    %c0_8 = arith.constant 0 : index
    %c0_9 = arith.constant 0 : index
    %3 = vector.load %arg3[%c0_6, %c0_7, %c0_8, %c0_9] : memref<1x2x18x16xbf16, #tpu.memory_space<vmem>>, vector<1x2x18x16xbf16>
    %4 = vector.shape_cast %3 : vector<1x2x18x16xbf16> to vector<2x18x16xbf16>
    %c8 = arith.constant 8 : index
    %c0_10 = arith.constant 0 : index
    %c0_11 = arith.constant 0 : index
    %5 = vector.load %arg9[%c8, %c0_10, %c0_11] : memref<10x18x16xbf16, #tpu.memory_space<vmem>>, vector<2x18x16xbf16>
    tpu.vector_store %arg9[%c8, %c0_10, %c0_11], %4 {strides = array<i32>} : memref<10x18x16xbf16, #tpu.memory_space<vmem>>, vector<2x18x16xbf16>,
    %c0_12 = arith.constant 0 : index
    %c0_13 = arith.constant 0 : index
    %c0_14 = arith.constant 0 : index
    %6 = vector.load %arg9[%c0_12, %c0_13, %c0_14] : memref<10x18x16xbf16, #tpu.memory_space<vmem>>, vector<8x16x16xbf16>
    %7 = vector.shape_cast %6 : vector<8x16x16xbf16> to vector<128x16xbf16>
    %c0_15 = arith.constant 0 : index
    %c0_16 = arith.constant 0 : index
    %8 = vector.load %arg10[%c0_15, %c0_16] : memref<128x144xbf16, #tpu.memory_space<vmem>>, vector<128x16xbf16>
    tpu.vector_store %arg10[%c0_15, %c0_16], %7 {strides = array<i32>} : memref<128x144xbf16, #tpu.memory_space<vmem>>, vector<128x16xbf16>,
    %c0_17 = arith.constant 0 : index
    %c1 = arith.constant 1 : index
    %c0_18 = arith.constant 0 : index
    %9 = vector.load %arg9[%c0_17, %c1, %c0_18] : memref<10x18x16xbf16, #tpu.memory_space<vmem>>, vector<8x16x16xbf16>
    %10 = vector.shape_cast %9 : vector<8x16x16xbf16> to vector<128x16xbf16>
    %c0_19 = arith.constant 0 : index
    %c16 = arith.constant 16 : index
    %11 = vector.load %arg10[%c0_19, %c16] : memref<128x144xbf16, #tpu.memory_space<vmem>>, vector<128x16xbf16>
    tpu.vector_store %arg10[%c0_19, %c16], %10 {strides = array<i32>} : memref<128x144xbf16, #tpu.memory_space<vmem>>, vector<128x16xbf16>,
    %c0_20 = arith.constant 0 : index
    %c2 = arith.constant 2 : index
    %c0_21 = arith.constant 0 : index
    %12 = vector.load %arg9[%c0_20, %c2, %c0_21] : memref<10x18x16xbf16, #tpu.memory_space<vmem>>, vector<8x16x16xbf16>
    %13 = vector.shape_cast %12 : vector<8x16x16xbf16> to vector<128x16xbf16>
    %c0_22 = arith.constant 0 : index
    %c32 = arith.constant 32 : index
    %14 = vector.load %arg10[%c0_22, %c32] : memref<128x144xbf16, #tpu.memory_space<vmem>>, vector<128x16xbf16>
    tpu.vector_store %arg10[%c0_22, %c32], %13 {strides = array<i32>} : memref<128x144xbf16, #tpu.memory_space<vmem>>, vector<128x16xbf16>,
    %c1_23 = arith.constant 1 : index
    %c0_24 = arith.constant 0 : index
    %c0_25 = arith.constant 0 : index
    %15 = vector.load %arg9[%c1_23, %c0_24, %c0_25] : memref<10x18x16xbf16, #tpu.memory_space<vmem>>, vector<8x16x16xbf16>
    %16 = vector.shape_cast %15 : vector<8x16x16xbf16> to vector<128x16xbf16>
    %c0_26 = arith.constant 0 : index
    %c48 = arith.constant 48 : index
    %17 = vector.load %arg10[%c0_26, %c48] : memref<128x144xbf16, #tpu.memory_space<vmem>>, vector<128x16xbf16>
    tpu.vector_store %arg10[%c0_26, %c48], %16 {strides = array<i32>} : memref<128x144xbf16, #tpu.memory_space<vmem>>, vector<128x16xbf16>,
    %c1_27 = arith.constant 1 : index
    %c1_28 = arith.constant 1 : index
    %c0_29 = arith.constant 0 : index
    %18 = vector.load %arg9[%c1_27, %c1_28, %c0_29] : memref<10x18x16xbf16, #tpu.memory_space<vmem>>, vector<8x16x16xbf16>
    %19 = vector.shape_cast %18 : vector<8x16x16xbf16> to vector<128x16xbf16>
    %c0_30 = arith.constant 0 : index
    %c64 = arith.constant 64 : index
    %20 = vector.load %arg10[%c0_30, %c64] : memref<128x144xbf16, #tpu.memory_space<vmem>>, vector<128x16xbf16>
    tpu.vector_store %arg10[%c0_30, %c64], %19 {strides = array<i32>} : memref<128x144xbf16, #tpu.memory_space<vmem>>, vector<128x16xbf16>,
    %c1_31 = arith.constant 1 : index
    %c2_32 = arith.constant 2 : index
    %c0_33 = arith.constant 0 : index
    %21 = vector.load %arg9[%c1_31, %c2_32, %c0_33] : memref<10x18x16xbf16, #tpu.memory_space<vmem>>, vector<8x16x16xbf16>
    %22 = vector.shape_cast %21 : vector<8x16x16xbf16> to vector<128x16xbf16>
    %c0_34 = arith.constant 0 : index
    %c80 = arith.constant 80 : index
    %23 = vector.load %arg10[%c0_34, %c80] : memref<128x144xbf16, #tpu.memory_space<vmem>>, vector<128x16xbf16>
    tpu.vector_store %arg10[%c0_34, %c80], %22 {strides = array<i32>} : memref<128x144xbf16, #tpu.memory_space<vmem>>, vector<128x16xbf16>,
    %c2_35 = arith.constant 2 : index
    %c0_36 = arith.constant 0 : index
    %c0_37 = arith.constant 0 : index
    %24 = vector.load %arg9[%c2_35, %c0_36, %c0_37] : memref<10x18x16xbf16, #tpu.memory_space<vmem>>, vector<8x16x16xbf16>
    %25 = vector.shape_cast %24 : vector<8x16x16xbf16> to vector<128x16xbf16>
    %c0_38 = arith.constant 0 : index
    %c96 = arith.constant 96 : index
    %26 = vector.load %arg10[%c0_38, %c96] : memref<128x144xbf16, #tpu.memory_space<vmem>>, vector<128x16xbf16>
    tpu.vector_store %arg10[%c0_38, %c96], %25 {strides = array<i32>} : memref<128x144xbf16, #tpu.memory_space<vmem>>, vector<128x16xbf16>,
    %c2_39 = arith.constant 2 : index
    %c1_40 = arith.constant 1 : index
    %c0_41 = arith.constant 0 : index
    %27 = vector.load %arg9[%c2_39, %c1_40, %c0_41] : memref<10x18x16xbf16, #tpu.memory_space<vmem>>, vector<8x16x16xbf16>
    %28 = vector.shape_cast %27 : vector<8x16x16xbf16> to vector<128x16xbf16>
    %c0_42 = arith.constant 0 : index
    %c112 = arith.constant 112 : index
    %29 = vector.load %arg10[%c0_42, %c112] : memref<128x144xbf16, #tpu.memory_space<vmem>>, vector<128x16xbf16>
    tpu.vector_store %arg10[%c0_42, %c112], %28 {strides = array<i32>} : memref<128x144xbf16, #tpu.memory_space<vmem>>, vector<128x16xbf16>,
    %c2_43 = arith.constant 2 : index
    %c2_44 = arith.constant 2 : index
    %c0_45 = arith.constant 0 : index
    %30 = vector.load %arg9[%c2_43, %c2_44, %c0_45] : memref<10x18x16xbf16, #tpu.memory_space<vmem>>, vector<8x16x16xbf16>
    %31 = vector.shape_cast %30 : vector<8x16x16xbf16> to vector<128x16xbf16>
    %c0_46 = arith.constant 0 : index
    %c128 = arith.constant 128 : index
    %32 = vector.load %arg10[%c0_46, %c128] : memref<128x144xbf16, #tpu.memory_space<vmem>>, vector<128x16xbf16>
    tpu.vector_store %arg10[%c0_46, %c128], %31 {strides = array<i32>} : memref<128x144xbf16, #tpu.memory_space<vmem>>, vector<128x16xbf16>,
    %c0_47 = arith.constant 0 : index
    %c0_48 = arith.constant 0 : index
    %33 = vector.load %arg10[%c0_47, %c0_48] : memref<128x144xbf16, #tpu.memory_space<vmem>>, vector<128x144xbf16>
    %c0_49 = arith.constant 0 : index
    %c0_50 = arith.constant 0 : index
    %34 = vector.load %arg4[%c0_49, %c0_50] : memref<144x32xbf16, #tpu.memory_space<vmem>>, vector<144x32xbf16>
    %cst = arith.constant dense<0.000000e+00> : vector<128x32xf32>
    %35 = tpu.matmul %33, %34, %cst {dimension_numbers = #tpu.dot_dimension_numbers<[1], [0], [0], [1], [0, 0, 1, 1], [], []>} : vector<128x144xbf16>, vector<144x32xbf16>, vector<128x32xf32> -> vector<128x32xf32>
    %c0_51 = arith.constant 0 : index
    %c0_52 = arith.constant 0 : index
    %36 = vector.load %arg5[%c0_51, %c0_52] : memref<1x32xf32, #tpu.memory_space<vmem>>, vector<1x32xf32>
    %37 = vector.broadcast %36 : vector<1x32xf32> to vector<128x32xf32>
    %38 = arith.addf %35, %37 : vector<128x32xf32>
    %cst_53 = arith.constant 0.000000e+00 : f32
    %39 = vector.broadcast %cst_53 : f32 to vector<128x32xf32>
    %40 = arith.maximumf %38, %39 : vector<128x32xf32>
    %41 = arith.truncf %40 : vector<128x32xf32> to vector<128x32xbf16>
    %c0_54 = arith.constant 0 : index
    %c0_55 = arith.constant 0 : index
    %42 = vector.load %arg6[%c0_54, %c0_55] : memref<32x128xbf16, #tpu.memory_space<vmem>>, vector<32x128xbf16>
    %cst_56 = arith.constant dense<0.000000e+00> : vector<128x128xf32>
    %43 = tpu.matmul %41, %42, %cst_56 {dimension_numbers = #tpu.dot_dimension_numbers<[1], [0], [0], [1], [0, 0, 1, 1], [], []>} : vector<128x32xbf16>, vector<32x128xbf16>, vector<128x128xf32> -> vector<128x128xf32>
    %c0_57 = arith.constant 0 : index
    %c0_58 = arith.constant 0 : index
    %44 = vector.load %arg7[%c0_57, %c0_58] : memref<1x128xf32, #tpu.memory_space<vmem>>, vector<1x128xf32>
    %45 = vector.broadcast %44 : vector<1x128xf32> to vector<128x128xf32>
    %46 = arith.addf %43, %45 : vector<128x128xf32>
    %c0_59 = arith.constant 0 : index
    %c0_60 = arith.constant 0 : index
    %c0_61 = arith.constant 0 : index
    %47 = vector.load %arg8[%c0_59, %c0_60, %c0_61] : memref<1x128x128xf32, #tpu.memory_space<vmem>>, vector<1x128x128xf32>
    %48 = vector.shape_cast %47 : vector<1x128x128xf32> to vector<128x128xf32>
    %49 = vector.shape_cast %46 : vector<128x128xf32> to vector<1x128x128xf32>
    tpu.vector_store %arg8[%c0_59, %c0_60, %c0_61], %49 {strides = array<i32>} : memref<1x128x128xf32, #tpu.memory_space<vmem>>, vector<1x128x128xf32>,
    return
  }
  func.func @transform_0(%arg0: i32, %arg1: i32) -> (i32, i32, i32, i32) {
    %c0_i32 = arith.constant 0 : i32
    %c0_i32_0 = arith.constant 0 : i32
    %c0_i32_1 = arith.constant 0 : i32
    return %arg0, %arg1, %c0_i32, %c0_i32_0 : i32, i32, i32, i32
  }
  func.func @transform_1(%arg0: i32, %arg1: i32) -> (i32, i32, i32, i32) {
    %c4_i32 = arith.constant 4 : i32
    %0 = arith.muli %arg1, %c4_i32 : i32
    %c4_i32_0 = arith.constant 4 : i32
    %1 = arith.addi %0, %c4_i32_0 : i32
    %c0_i32 = arith.constant 0 : i32
    %c0_i32_1 = arith.constant 0 : i32
    %c0_i32_2 = arith.constant 0 : i32
    return %arg0, %1, %c0_i32, %c0_i32_1 : i32, i32, i32, i32
  }
  func.func @transform_2(%arg0: i32, %arg1: i32) -> (i32, i32) {
    %c0_i32 = arith.constant 0 : i32
    %c0_i32_0 = arith.constant 0 : i32
    %c0_i32_1 = arith.constant 0 : i32
    return %c0_i32, %c0_i32_0 : i32, i32
  }
  func.func @transform_3(%arg0: i32, %arg1: i32) -> (i32, i32) {
    %c0_i32 = arith.constant 0 : i32
    %c0_i32_0 = arith.constant 0 : i32
    %c0_i32_1 = arith.constant 0 : i32
    return %c0_i32, %c0_i32_0 : i32, i32
  }
  func.func @transform_4(%arg0: i32, %arg1: i32) -> (i32, i32) {
    %c0_i32 = arith.constant 0 : i32
    %c0_i32_0 = arith.constant 0 : i32
    %c0_i32_1 = arith.constant 0 : i32
    return %c0_i32, %c0_i32_0 : i32, i32
  }
  func.func @transform_5(%arg0: i32, %arg1: i32) -> (i32, i32) {
    %c0_i32 = arith.constant 0 : i32
    %c0_i32_0 = arith.constant 0 : i32
    %c0_i32_1 = arith.constant 0 : i32
    return %c0_i32, %c0_i32_0 : i32, i32
  }
  func.func @transform_6(%arg0: i32, %arg1: i32) -> (i32, i32, i32) {
    %c0_i32 = arith.constant 0 : i32
    %c0_i32_0 = arith.constant 0 : i32
    return %arg0, %arg1, %c0_i32 : i32, i32, i32
  }
}

</mosaic_0001>

<llo_original>
// kernel: tpu_custom_call.1
$region0: #{tpu_custom_call.1}
  #allocation0 [shape = 'u32[]', space=smem, size = 0x4, offset = 0x4, fixed_abs, tag = 'smem constant byte address 0x4 - core index']
  #allocation1 [shape = 'u32[144,128]{1,0:T(1,128)}', space=vmem, size = 0x12000, scoped, tag = 'internal scratch']
  #allocation2 [shape = 'bf16[10,18,16]{2,1,0:T(8,128)(2,1)}', space=vmem, size = 0xf000, scoped, tag = 'scratch operand']
  #allocation3 [shape = 'bf16[128,144]{1,0:T(8,128)(2,1)}', space=vmem, size = 0x10000, scoped, tag = 'scratch operand']
  %s0 = inlined_call_operand.vmem [shape: bf16[2,18,18,16], index: 0, kind: input, shape index: {}]
  %s1 = inlined_call_operand.vmem [shape: bf16[2,18,18,16], index: 1, kind: input, shape index: {}]
  %s2 = inlined_call_operand.vmem [shape: bf16[144,32], index: 2, kind: input, shape index: {}]
  %s3 = inlined_call_operand.vmem [shape: f32[1,32], index: 3, kind: input, shape index: {}]
  %s4 = inlined_call_operand.vmem [shape: bf16[32,128], index: 4, kind: input, shape index: {}]
  %s5 = inlined_call_operand.vmem [shape: f32[1,128], index: 5, kind: input, shape index: {}]
  %s6 = inlined_call_operand.hbm [shape: f32[2,256,128], index: 6, kind: output, shape index: {}]
  %s7 = sld [smem:[#allocation0]]
  $region57: #{tpu_custom_call.1} parent=0
    _
  %s9 = ssub.s32 1, %s7
  %s10 = scalar_select 0, %s9, %s7
  $region1: #{tpu_custom_call.1} parent=0
    #allocation4 [shape = 'u8[131072]{0}', space=vmem, size = 0x20000, scoped, tag = 'output window, operand 0']
    #allocation5 [shape = 's32[2]{0}', space=sflag, size = 0x8, scoped, tag = 'scoped memory for tpu_custom_call.1']
    %11 = vsyncpa [#allocation5], 0
    %s12 = scalar_lea.sflag [#allocation5], 1
    %13 = vsyncpa %s12, 0
    loop: start=0, step=1, limit=6
    $region2: #{tpu_custom_call.1} parent=1 // loop_pre_header
      _
    $region3: #{tpu_custom_call.1} parent=1 // loop_header
      %s15 = sphi 0, %s19
      %p16 = scmp.ge.s32.totalorder %s15, 6
      %s22 = sphi 0, %s34
      %s23 = sphi 0, %s30
      %s24 = sphi 0, %s22
      %s25 = sphi 0, %s23
      %s26 = sphi 0, %s24
      %s27 = sphi 0, %s25
      %s39 = sphi 0, %s41
      %s42 = sphi 0, %s39
      %s43 = sphi 0, %s42
      %s59 = sphi 0, %s43
      %s71 = sphi 0, %s73
      %s74 = sphi 0, %s71
      %s75 = sphi 0, %s74
      %s91 = sphi 0, %s75
      %s95 = sphi 0, %s95
      %s97 = sphi 0, %s95
      %s98 = sphi 0, %s97
      %s112 = sphi 0, %s98
      %s116 = sphi 0, %s116
      %s118 = sphi 0, %s116
      %s119 = sphi 0, %s118
      %s133 = sphi 0, %s119
      %s137 = sphi 0, %s137
      %s139 = sphi 0, %s137
      %s140 = sphi 0, %s139
      %s154 = sphi 0, %s140
      %s158 = sphi 0, %s158
      %s160 = sphi 0, %s158
      %s161 = sphi 0, %s160
      %s175 = sphi 0, %s161
      %s183 = sphi 0, %s185
      %s186 = sphi 0, %s183
      %s187 = sphi 0, %s186
      %s203 = sphi 0, %s187
    $region4: #{tpu_custom_call.1} parent=1 // loop_header_branch
      %18 = sbr.rel (%p16) target = $region8
    $region5: #{tpu_custom_call.1} parent=1 // loop_body
      %s20 = ssub.s32 %s15, 1
      %s21 = ssub.s32 %s15, 2
      %s28 = sadd.s32 1, %s23
      %p29 = scmp.ge.s32.totalorder %s28, 2
      %s30 = scalar_select %p29, 0, %s28
      %s31 = sadd.s32 1, %s22
      %s32 = scalar_select %p29, %s31, %s22
      %p33 = scmp.ge.s32.totalorder %s32, 2
      %s34 = scalar_select %p33, 0, %s32
      %s35 = ssub.s32 %s22, %s34
      %s36 = ssub.s32 %s23, %s30
      %s37 = sor.u32 %s35, %s36
      %p38 = scmp.eq.s32.totalorder %s37, 0
      %s40 = sadd.s32 %s39, 1
      %s41 = scalar_select %p38, %s39, %s40
      %p44 = pneg %p38
      %p45 = scmp.eq.s32.totalorder %s15, 3
      %p46 = por %p44, %p45
      %p47 = scmp.ne.s32.totalorder %s39, %s42
      %p48 = scmp.eq.s32.totalorder %s15, 0
      %p49 = por %p47, %p48
      %p50 = scmp.ne.s32.totalorder %s39, %s42
      %p51 = scmp.eq.s32.totalorder %s20, 3
      %p52 = por %p50, %p51
      %p53 = scmp.ne.s32.totalorder %s42, %s43
      %p54 = scmp.eq.s32.totalorder %s20, 0
      %p55 = por %p53, %p54
      %p56 = scmp.ne.s32.totalorder %s42, %s43
      %p57 = scmp.eq.s32.totalorder %s21, 3
      %p58 = por %p56, %p57
      %p60 = scmp.ne.s32.totalorder %s43, %s59
      %p61 = scmp.eq.s32.totalorder %s21, 0
      %p62 = por %p60, %p61
      %s63 = smul.u32 %s23, 4
      %s64 = sadd.s32 %s63, 4
      %s65 = smul.u32 %s30, 4
      %s66 = sadd.s32 %s65, 4
      %s67 = ssub.s32 %s22, %s34
      %s68 = ssub.s32 %s64, %s66
      %s69 = sor.u32 %s67, %s68
      %p70 = scmp.eq.s32.totalorder %s69, 0
      %s72 = sadd.s32 %s71, 1
      %s73 = scalar_select %p70, %s71, %s72
      %p76 = pneg %p70
      %p77 = scmp.eq.s32.totalorder %s15, 3
      %p78 = por %p76, %p77
      %p79 = scmp.ne.s32.totalorder %s71, %s74
      %p80 = scmp.eq.s32.totalorder %s15, 0
      %p81 = por %p79, %p80
      %p82 = scmp.ne.s32.totalorder %s71, %s74
      %p83 = scmp.eq.s32.totalorder %s20, 3
      %p84 = por %p82, %p83
      %p85 = scmp.ne.s32.totalorder %s74, %s75
      %p86 = scmp.eq.s32.totalorder %s20, 0
      %p87 = por %p85, %p86
      %p88 = scmp.ne.s32.totalorder %s74, %s75
      %p89 = scmp.eq.s32.totalorder %s21, 3
      %p90 = por %p88, %p89
      %p92 = scmp.ne.s32.totalorder %s75, %s91
      %p93 = scmp.eq.s32.totalorder %s21, 0
      %p94 = por %p92, %p93
      %s96 = sadd.s32 %s95, 1
      %p99 = scmp.eq.s32.totalorder %s15, 3
      %p100 = scmp.ne.s32.totalorder %s95, %s97
      %p101 = scmp.eq.s32.totalorder %s15, 0
      %p102 = por %p100, %p101
      %p103 = scmp.ne.s32.totalorder %s95, %s97
      %p104 = scmp.eq.s32.totalorder %s20, 3
      %p105 = por %p103, %p104
      %p106 = scmp.ne.s32.totalorder %s97, %s98
      %p107 = scmp.eq.s32.totalorder %s20, 0
      %p108 = por %p106, %p107
      %p109 = scmp.ne.s32.totalorder %s97, %s98
      %p110 = scmp.eq.s32.totalorder %s21, 3
      %p111 = por %p109, %p110
      %p113 = scmp.ne.s32.totalorder %s98, %s112
      %p114 = scmp.eq.s32.totalorder %s21, 0
      %p115 = por %p113, %p114
      %s117 = sadd.s32 %s116, 1
      %p120 = scmp.eq.s32.totalorder %s15, 3
      %p121 = scmp.ne.s32.totalorder %s116, %s118
      %p122 = scmp.eq.s32.totalorder %s15, 0
      %p123 = por %p121, %p122
      %p124 = scmp.ne.s32.totalorder %s116, %s118
      %p125 = scmp.eq.s32.totalorder %s20, 3
      %p126 = por %p124, %p125
      %p127 = scmp.ne.s32.totalorder %s118, %s119
      %p128 = scmp.eq.s32.totalorder %s20, 0
      %p129 = por %p127, %p128
      %p130 = scmp.ne.s32.totalorder %s118, %s119
      %p131 = scmp.eq.s32.totalorder %s21, 3
      %p132 = por %p130, %p131
      %p134 = scmp.ne.s32.totalorder %s119, %s133
      %p135 = scmp.eq.s32.totalorder %s21, 0
      %p136 = por %p134, %p135
      %s138 = sadd.s32 %s137, 1
      %p141 = scmp.eq.s32.totalorder %s15, 3
      %p142 = scmp.ne.s32.totalorder %s137, %s139
      %p143 = scmp.eq.s32.totalorder %s15, 0
      %p144 = por %p142, %p143
      %p145 = scmp.ne.s32.totalorder %s137, %s139
      %p146 = scmp.eq.s32.totalorder %s20, 3
      %p147 = por %p145, %p146
      %p148 = scmp.ne.s32.totalorder %s139, %s140
      %p149 = scmp.eq.s32.totalorder %s20, 0
      %p150 = por %p148, %p149
      %p151 = scmp.ne.s32.totalorder %s139, %s140
      %p152 = scmp.eq.s32.totalorder %s21, 3
      %p153 = por %p151, %p152
      %p155 = scmp.ne.s32.totalorder %s140, %s154
      %p156 = scmp.eq.s32.totalorder %s21, 0
      %p157 = por %p155, %p156
      %s159 = sadd.s32 %s158, 1
      %p162 = scmp.eq.s32.totalorder %s15, 3
      %p163 = scmp.ne.s32.totalorder %s158, %s160
      %p164 = scmp.eq.s32.totalorder %s15, 0
      %p165 = por %p163, %p164
      %p166 = scmp.ne.s32.totalorder %s158, %s160
      %p167 = scmp.eq.s32.totalorder %s20, 3
      %p168 = por %p166, %p167
      %p169 = scmp.ne.s32.totalorder %s160, %s161
      %p170 = scmp.eq.s32.totalorder %s20, 0
      %p171 = por %p169, %p170
      %p172 = scmp.ne.s32.totalorder %s160, %s161
      %p173 = scmp.eq.s32.totalorder %s21, 3
      %p174 = por %p172, %p173
      %p176 = scmp.ne.s32.totalorder %s161, %s175
      %p177 = scmp.eq.s32.totalorder %s21, 0
      %p178 = por %p176, %p177
      %s179 = ssub.s32 %s22, %s34
      %s180 = ssub.s32 %s23, %s30
      %s181 = sor.u32 %s179, %s180
      %p182 = scmp.eq.s32.totalorder %s181, 0
      %s184 = sadd.s32 %s183, 1
      %s185 = scalar_select %p182, %s183, %s184
      %p188 = pneg %p182
      %p189 = scmp.eq.s32.totalorder %s15, 3
      %p190 = por %p188, %p189
      %p191 = scmp.ne.s32.totalorder %s183, %s186
      %p192 = scmp.eq.s32.totalorder %s15, 0
      %p193 = por %p191, %p192
      %p194 = scmp.ne.s32.totalorder %s183, %s186
      %p195 = scmp.eq.s32.totalorder %s20, 3
      %p196 = por %p194, %p195
      %p197 = scmp.ne.s32.totalorder %s186, %s187
      %p198 = scmp.eq.s32.totalorder %s20, 0
      %p199 = por %p197, %p198
      %p200 = scmp.ne.s32.totalorder %s186, %s187
      %p201 = scmp.eq.s32.totalorder %s21, 3
      %p202 = por %p200, %p201
      %p204 = scmp.ne.s32.totalorder %s187, %s203
      %p205 = scmp.eq.s32.totalorder %s21, 0
      %p206 = por %p204, %p205
      %p207 = scmp.le.s32.totalorder 1, %s15
      %p208 = scmp.lt.s32.totalorder %s15, 5
      %p209 = pnand %p207, %p208
      %p210 = pneg %p209
      // Predicated region
      $region9: #{tpu_custom_call.1} parent=5 // pred_check
        _
      $region10: #{tpu_custom_call.1} parent=5 // pred_check_branch
        %212 = sbr.rel (%p209) target = $region12
      $region11: #{tpu_custom_call.1} parent=5 // pred_region
        %s213 = ssub.s32 %s15, 1
        // Predicated region
        $region13: #{tpu_custom_call.1} parent=11 // pred_check
          %p214 = pneg %p108
        $region14: #{tpu_custom_call.1} parent=11 // pred_check_branch
          %216 = sbr.rel (%p214) target = $region16
        $region15: #{tpu_custom_call.1} parent=11 // pred_region
          _
        $region16: #{tpu_custom_call.1} parent=11 // pred_fallthru
          _
        // Predicated region
        $region17: #{tpu_custom_call.1} parent=11 // pred_check
          %p217 = pneg %p129
        $region18: #{tpu_custom_call.1} parent=11 // pred_check_branch
          %219 = sbr.rel (%p217) target = $region20
        $region19: #{tpu_custom_call.1} parent=11 // pred_region
          _
        $region20: #{tpu_custom_call.1} parent=11 // pred_fallthru
          _
        // Predicated region
        $region21: #{tpu_custom_call.1} parent=11 // pred_check
          %p220 = pneg %p150
        $region22: #{tpu_custom_call.1} parent=11 // pred_check_branch
          %222 = sbr.rel (%p220) target = $region24
        $region23: #{tpu_custom_call.1} parent=11 // pred_region
          _
        $region24: #{tpu_custom_call.1} parent=11 // pred_fallthru
          _
        // Predicated region
        $region25: #{tpu_custom_call.1} parent=11 // pred_check
          %p223 = pneg %p171
        $region26: #{tpu_custom_call.1} parent=11 // pred_check_branch
          %225 = sbr.rel (%p223) target = $region28
        $region27: #{tpu_custom_call.1} parent=11 // pred_region
          _
        $region28: #{tpu_custom_call.1} parent=11 // pred_fallthru
          _
      $region12: #{tpu_custom_call.1} parent=5 // pred_fallthru
        _
      %p226 = scmp.lt.s32.totalorder %s15, 4
      // Predicated region
      $region29: #{tpu_custom_call.1} parent=5 // pred_check
        %p227 = pneg %p226
      $region30: #{tpu_custom_call.1} parent=5 // pred_check_branch
        %229 = sbr.rel (%p227) target = $region32
      $region31: #{tpu_custom_call.1} parent=5 // pred_region
        // Predicated region
        $region33: #{tpu_custom_call.1} parent=31 // pred_check
          %p230 = pneg %p49
        $region34: #{tpu_custom_call.1} parent=31 // pred_check_branch
          %232 = sbr.rel (%p230) target = $region36
        $region35: #{tpu_custom_call.1} parent=31 // pred_region
          %s233 = smul.u32 8, %s23
          %s234 = ssub.s32 18, %s233
          %p235 = scmp.lt.s32.totalorder %s234, 8
          %s236 = scalar_select %p235, %s234, 8
          %s237 = smul.u32 64, %s236
          %s238 = smul.u32 %s237, 3
          %p239 = scmp.lt.s32.totalorder %s22, 1
          %s240 = scalar_select %p239, %s22, 1
          %p241 = scmp.lt.s32.totalorder %s233, 17
          %s242 = scalar_select %p241, %s233, 17
          %s243 = smul.addr %s242, 3
          %s244 = smul.addr %s240, 54
          %s245 = sadd.s32 %s243, %s244
          %s246 = smul.addr %s245, 4
          %s247 = scalar_lea.vmem %s0, %s246
          %s248 = smul.u32 8, %s23
          %s249 = ssub.s32 18, %s248
          %p250 = scmp.lt.s32.totalorder %s249, 8
          %s251 = scalar_select %p250, %s249, 8
          %s252 = smul.u32 64, %s251
          %s253 = smul.u32 %s252, 3
        $region36: #{tpu_custom_call.1} parent=31 // pred_fallthru
          _
        // Predicated region
        $region37: #{tpu_custom_call.1} parent=31 // pred_check
          %p254 = pneg %p81
        $region38: #{tpu_custom_call.1} parent=31 // pred_check_branch
          %256 = sbr.rel (%p254) target = $region40
        $region39: #{tpu_custom_call.1} parent=31 // pred_region
          %s257 = smul.u32 %s23, 4
          %s258 = sadd.s32 %s257, 4
          %s259 = smul.u32 2, %s258
          %p260 = scmp.lt.s32.totalorder %s22, 1
          %s261 = scalar_select %p260, %s22, 1
          %p262 = scmp.lt.s32.totalorder %s259, 17
          %s263 = scalar_select %p262, %s259, 17
          %s264 = smul.addr %s263, 3
          %s265 = smul.addr %s261, 54
          %s266 = sadd.s32 %s264, %s265
          %s267 = smul.addr %s266, 4
          %s268 = scalar_lea.vmem %s1, %s267
          %s269 = smul.u32 %s23, 4
          %s270 = sadd.s32 %s269, 4
          %s271 = smul.u32 2, %s270
        $region40: #{tpu_custom_call.1} parent=31 // pred_fallthru
          _
      $region32: #{tpu_custom_call.1} parent=5 // pred_fallthru
        _
      %p272 = scmp.le.s32.totalorder 1, %s15
      %p273 = scmp.lt.s32.totalorder %s15, 5
      %p274 = pnand %p272, %p273
      %p275 = pneg %p274
      // Predicated region
      $region41: #{tpu_custom_call.1} parent=5 // pred_check
        _
      $region42: #{tpu_custom_call.1} parent=5 // pred_check_branch
        %277 = sbr.rel (%p274) target = $region44
      $region43: #{tpu_custom_call.1} parent=5 // pred_region
        %s278 = ssub.s32 %s15, 1
        %s279 = smul.u32 8, %s25
        %s280 = ssub.s32 18, %s279
        %p281 = scmp.lt.s32.totalorder %s280, 8
        %s282 = scalar_select %p281, %s280, 8
        %s283 = smul.u32 64, %s282
        %s284 = smul.u32 %s283, 3
        %p285 = scmp.lt.s32.totalorder %s24, 1
        %s286 = scalar_select %p285, %s24, 1
        %p287 = scmp.lt.s32.totalorder %s279, 17
        %s288 = scalar_select %p287, %s279, 17
        %s289 = smul.addr %s288, 3
        %s290 = smul.addr %s286, 54
        %s291 = sadd.s32 %s289, %s290
        %s292 = smul.addr %s291, 4
        %s293 = scalar_lea.vmem %s0, %s292
        %p294 = pneg %p55
        %p295 = pneg %p52
        %s296 = smul.u32 %s25, 4
        %s297 = sadd.s32 %s296, 4
        %s298 = smul.u32 2, %s297
        %p299 = scmp.lt.s32.totalorder %s24, 1
        %s300 = scalar_select %p299, %s24, 1
        %p301 = scmp.lt.s32.totalorder %s298, 17
        %s302 = scalar_select %p301, %s298, 17
        %s303 = smul.addr %s302, 3
        %s304 = smul.addr %s300, 54
        %s305 = sadd.s32 %s303, %s304
        %s306 = smul.addr %s305, 4
        %s307 = scalar_lea.vmem %s1, %s306
        %p308 = pneg %p87
        %p309 = pneg %p84
        %p310 = pneg %p108
        %p311 = pneg %p105
        %p312 = pneg %p129
        %p313 = pneg %p126
        %p314 = pneg %p150
        %p315 = pneg %p147
        %p316 = pneg %p171
        %p317 = pneg %p168
        %p318 = pneg %p199
        %p319 = pneg %p196
        %s320 = sand.u32 %s186, 1
        %s321 = scalar_lea.sflag [#allocation5], %s320
        %s322 = sand.u32 %s186, 1
        %s323 = smul.addr %s322, 128
        %s324 = scalar_lea.vmem [#allocation4], %s323
        %s325 = smul.u32 8, %s25
        %s326 = ssub.s32 18, %s325
        %p327 = scmp.lt.s32.totalorder %s326, 8
        %s328 = scalar_select %p327, %s326, 8
        %s329 = smul.u32 64, %s328
        %s330 = smul.u32 %s329, 3
        %p331 = scmp.lt.s32.totalorder %s24, 1
        %s332 = scalar_select %p331, %s24, 1
        %p333 = scmp.lt.s32.totalorder %s325, 17
        %s334 = scalar_select %p333, %s325, 17
        %s335 = smul.addr %s334, 3
        %s336 = smul.addr %s332, 54
        %s337 = sadd.s32 %s335, %s336
        %s338 = smul.addr %s337, 4
        %s339 = scalar_lea.vmem %s0, %s338
        %s340 = smul.u32 8, %s25
        %s341 = ssub.s32 18, %s340
        %p342 = scmp.lt.s32.totalorder %s341, 8
        %s343 = scalar_select %p342, %s341, 8
        %s344 = smul.u32 64, %s343
        %s345 = smul.u32 %s344, 3
        %s346 = smul.u32 %s25, 4
        %s347 = sadd.s32 %s346, 4
        %s348 = smul.u32 2, %s347
        %p349 = scmp.lt.s32.totalorder %s24, 1
        %s350 = scalar_select %p349, %s24, 1
        %p351 = scmp.lt.s32.totalorder %s348, 17
        %s352 = scalar_select %p351, %s348, 17
        %s353 = smul.addr %s352, 3
        %s354 = smul.addr %s350, 54
        %s355 = sadd.s32 %s353, %s354
        %s356 = smul.addr %s355, 4
        %s357 = scalar_lea.vmem %s1, %s356
        %s358 = smul.u32 %s25, 4
        %s359 = sadd.s32 %s358, 4
        %s360 = smul.u32 2, %s359
        %s361 = smul.u32 16, %s25
        %v363 = vld [vmem:[%s339] sm:$0xf]
        %v364 = vld [vmem:[%s339 + $0x4] sm:$0xf]
        %v365 = vld [vmem:[%s339 + $0x8] sm:$0x1]
        %v366 = vld [vmem:[%s339 + $0xc] sm:$0xf]
        %v367 = vld [vmem:[%s339 + $0x10] sm:$0xf]
        %v368 = vld [vmem:[%s339 + $0x14] sm:$0x1]
        %v369 = vld [vmem:[%s339 + $0x18] sm:$0xf]
        %v370 = vld [vmem:[%s339 + $0x1c] sm:$0xf]
        %v371 = vld [vmem:[%s339 + $0x20] sm:$0x1]
        %v372 = vld [vmem:[%s339 + $0x24] sm:$0xf]
        %v373 = vld [vmem:[%s339 + $0x28] sm:$0xf]
        %v374 = vld [vmem:[%s339 + $0x2c] sm:$0x1]
        %v375 = vld [vmem:[%s339 + $0x30] sm:$0xf]
        %v376 = vld [vmem:[%s339 + $0x34] sm:$0xf]
        %v377 = vld [vmem:[%s339 + $0x38] sm:$0x1]
        %v378 = vld [vmem:[%s339 + $0x3c] sm:$0xf]
        %v379 = vld [vmem:[%s339 + $0x40] sm:$0xf]
        %v380 = vld [vmem:[%s339 + $0x44] sm:$0x1]
        %v381 = vld [vmem:[%s339 + $0x48] sm:$0xf]
        %v382 = vld [vmem:[%s339 + $0x4c] sm:$0xf]
        %v383 = vld [vmem:[%s339 + $0x50] sm:$0x1]
        %v384 = vld [vmem:[%s339 + $0x54] sm:$0xf]
        %v385 = vld [vmem:[%s339 + $0x58] sm:$0xf]
        %v386 = vld [vmem:[%s339 + $0x5c] sm:$0x1]
        %vm387 = vcmask 125952
        %388 = vst.msk [vmem:[#allocation2] sm:$0xf] %vm387, %v363
        %389 = vst.msk [vmem:[#allocation2 + $0x4] sm:$0xf] %vm387, %v364
        %vm390 = vcmask 122880
        %391 = vst.msk [vmem:[#allocation2 + $0x8] sm:$0x1] %vm390, %v365
        %392 = vst.msk [vmem:[#allocation2 + $0xc] sm:$0xf] %vm387, %v366
        %393 = vst.msk [vmem:[#allocation2 + $0x10] sm:$0xf] %vm387, %v367
        %394 = vst.msk [vmem:[#allocation2 + $0x14] sm:$0x1] %vm390, %v368
        %395 = vst.msk [vmem:[#allocation2 + $0x18] sm:$0xf] %vm387, %v369
        %396 = vst.msk [vmem:[#allocation2 + $0x1c] sm:$0xf] %vm387, %v370
        %397 = vst.msk [vmem:[#allocation2 + $0x20] sm:$0x1] %vm390, %v371
        %398 = vst.msk [vmem:[#allocation2 + $0x24] sm:$0xf] %vm387, %v372
        %399 = vst.msk [vmem:[#allocation2 + $0x28] sm:$0xf] %vm387, %v373
        %400 = vst.msk [vmem:[#allocation2 + $0x2c] sm:$0x1] %vm390, %v374
        %401 = vst.msk [vmem:[#allocation2 + $0x30] sm:$0xf] %vm387, %v375
        %402 = vst.msk [vmem:[#allocation2 + $0x34] sm:$0xf] %vm387, %v376
        %403 = vst.msk [vmem:[#allocation2 + $0x38] sm:$0x1] %vm390, %v377
        %404 = vst.msk [vmem:[#allocation2 + $0x3c] sm:$0xf] %vm387, %v378
        %405 = vst.msk [vmem:[#allocation2 + $0x40] sm:$0xf] %vm387, %v379
        %406 = vst.msk [vmem:[#allocation2 + $0x44] sm:$0x1] %vm390, %v380
        %407 = vst.msk [vmem:[#allocation2 + $0x48] sm:$0xf] %vm387, %v381
        %408 = vst.msk [vmem:[#allocation2 + $0x4c] sm:$0xf] %vm387, %v382
        %409 = vst.msk [vmem:[#allocation2 + $0x50] sm:$0x1] %vm390, %v383
        %410 = vst.msk [vmem:[#allocation2 + $0x54] sm:$0xf] %vm387, %v384
        %411 = vst.msk [vmem:[#allocation2 + $0x58] sm:$0xf] %vm387, %v385
        %412 = vst.msk [vmem:[#allocation2 + $0x5c] sm:$0x1] %vm390, %v386
        %v413 = vld [vmem:[%s357] sm:$0xf]
        %v414 = vld [vmem:[%s357 + $0x4] sm:$0xf]
        %v415 = vld [vmem:[%s357 + $0x8] sm:$0x1]
        %v416 = vld [vmem:[%s357 + $0xc] sm:$0xf]
        %v417 = vld [vmem:[%s357 + $0x10] sm:$0xf]
        %v418 = vld [vmem:[%s357 + $0x14] sm:$0x1]
        %s419 = scalar_lea.vmem [#allocation2], 96
        %420 = vst.msk [vmem:[%s419] sm:$0xf] %vm387, %v413
        %421 = vst.msk [vmem:[%s419 + $0x4] sm:$0xf] %vm387, %v414
        %422 = vst.msk [vmem:[%s419 + $0x8] sm:$0x1] %vm390, %v415
        %423 = vst.msk [vmem:[%s419 + $0xc] sm:$0xf] %vm387, %v416
        %424 = vst.msk [vmem:[%s419 + $0x10] sm:$0xf] %vm387, %v417
        %425 = vst.msk [vmem:[%s419 + $0x14] sm:$0x1] %vm390, %v418
        %v426 = vld [vmem:[#allocation2] sm:$0xf]
        %v427 = vld [vmem:[#allocation2 + $0x4] sm:$0xf]
        %v428 = vld [vmem:[#allocation2 + $0xc] sm:$0xf]
        %v429 = vld [vmem:[#allocation2 + $0x10] sm:$0xf]
        %v430 = vld [vmem:[#allocation2 + $0x18] sm:$0xf]
        %v431 = vld [vmem:[#allocation2 + $0x1c] sm:$0xf]
        %v432 = vld [vmem:[#allocation2 + $0x24] sm:$0xf]
        %v433 = vld [vmem:[#allocation2 + $0x28] sm:$0xf]
        %v434 = vld [vmem:[#allocation2 + $0x30] sm:$0xf]
        %v435 = vld [vmem:[#allocation2 + $0x34] sm:$0xf]
        %v436 = vld [vmem:[#allocation2 + $0x3c] sm:$0xf]
        %v437 = vld [vmem:[#allocation2 + $0x40] sm:$0xf]
        %v438 = vld [vmem:[#allocation2 + $0x48] sm:$0xf]
        %v439 = vld [vmem:[#allocation2 + $0x4c] sm:$0xf]
        %v440 = vld [vmem:[#allocation2 + $0x54] sm:$0xf]
        %v441 = vld [vmem:[#allocation2 + $0x58] sm:$0xf]
        %442 = vst.msk [vmem:[#allocation3] sm:$0xf] %vm387, %v426
        %443 = vst.msk [vmem:[#allocation3 + $0x8] sm:$0xf] %vm387, %v427
        %444 = vst.msk [vmem:[#allocation3 + $0x10] sm:$0xf] %vm387, %v428
        %445 = vst.msk [vmem:[#allocation3 + $0x18] sm:$0xf] %vm387, %v429
        %446 = vst.msk [vmem:[#allocation3 + $0x20] sm:$0xf] %vm387, %v430
        %447 = vst.msk [vmem:[#allocation3 + $0x28] sm:$0xf] %vm387, %v431
        %448 = vst.msk [vmem:[#allocation3 + $0x30] sm:$0xf] %vm387, %v432
        %449 = vst.msk [vmem:[#allocation3 + $0x38] sm:$0xf] %vm387, %v433
        %450 = vst.msk [vmem:[#allocation3 + $0x40] sm:$0xf] %vm387, %v434
        %451 = vst.msk [vmem:[#allocation3 + $0x48] sm:$0xf] %vm387, %v435
        %452 = vst.msk [vmem:[#allocation3 + $0x50] sm:$0xf] %vm387, %v436
        %453 = vst.msk [vmem:[#allocation3 + $0x58] sm:$0xf] %vm387, %v437
        %454 = vst.msk [vmem:[#allocation3 + $0x60] sm:$0xf] %vm387, %v438
        %455 = vst.msk [vmem:[#allocation3 + $0x68] sm:$0xf] %vm387, %v439
        %456 = vst.msk [vmem:[#allocation3 + $0x70] sm:$0xf] %vm387, %v440
        %457 = vst.msk [vmem:[#allocation3 + $0x78] sm:$0xf] %vm387, %v441
        %v458 = vld [vmem:[#allocation2] sm:$0xf]
        %v459 = vld [vmem:[#allocation2 + $0x4] sm:$0xf]
        %v460 = vld [vmem:[#allocation2 + $0x8] sm:$0x1]
        %v461 = vld [vmem:[#allocation2 + $0xc] sm:$0xf]
        %v462 = vld [vmem:[#allocation2 + $0x10] sm:$0xf]
        %v463 = vld [vmem:[#allocation2 + $0x14] sm:$0x1]
        %v464 = vld [vmem:[#allocation2 + $0x18] sm:$0xf]
        %v465 = vld [vmem:[#allocation2 + $0x1c] sm:$0xf]
        %v466 = vld [vmem:[#allocation2 + $0x20] sm:$0x1]
        %v467 = vld [vmem:[#allocation2 + $0x24] sm:$0xf]
        %v468 = vld [vmem:[#allocation2 + $0x28] sm:$0xf]
        %v469 = vld [vmem:[#allocation2 + $0x2c] sm:$0x1]
        %v470 = vld [vmem:[#allocation2 + $0x30] sm:$0xf]
        %v471 = vld [vmem:[#allocation2 + $0x34] sm:$0xf]
        %v472 = vld [vmem:[#allocation2 + $0x38] sm:$0x1]
        %v473 = vld [vmem:[#allocation2 + $0x3c] sm:$0xf]
        %v474 = vld [vmem:[#allocation2 + $0x40] sm:$0xf]
        %v475 = vld [vmem:[#allocation2 + $0x44] sm:$0x1]
        %v476 = vld [vmem:[#allocation2 + $0x48] sm:$0xf]
        %v477 = vld [vmem:[#allocation2 + $0x4c] sm:$0xf]
        %v478 = vld [vmem:[#allocation2 + $0x50] sm:$0x1]
        %v479 = vld [vmem:[#allocation2 + $0x54] sm:$0xf]
        %v480 = vld [vmem:[#allocation2 + $0x58] sm:$0xf]
        %v481 = vld [vmem:[#allocation2 + $0x5c] sm:$0x1]
        %vm482 = vsmask.f32 3328
        %vm483 = vsmask.f32 7440
        %vm484 = vmor %vm482, %vm483
        %v486 = vshrl.u32 %v458, 16
        %v488 = vrot.slane %v486, 4
        %v489 = vshll.u32 %v458, 16
        %v491 = vrot.slane %v489, 5
        %v492 = vor.u32 %v488, %v491
        %v493 = vrot.slane %v492, 4
        %v495 = vshll.u32 %v459, 16
        %v497 = vrot.slane %v495, 5
        %v498 = vsel %vm484, %v493, %v497
        %v499 = vshrl.u32 %v459, 16
        %v501 = vrot.slane %v499, 4
        %v502 = vor.u32 %v501, %v497
        %v503 = vrot.slane %v502, 4
        %v505 = vshll.u32 %v460, 16
        %v507 = vrot.slane %v505, 5
        %v508 = vsel %vm484, %v503, %v507
        %v510 = vshrl.u32 %v461, 16
        %v512 = vrot.slane %v510, 4
        %v513 = vshll.u32 %v461, 16
        %v515 = vrot.slane %v513, 5
        %v516 = vor.u32 %v512, %v515
        %v517 = vrot.slane %v516, 4
        %v519 = vshll.u32 %v462, 16
        %v521 = vrot.slane %v519, 5
        %v522 = vsel %vm484, %v517, %v521
        %v523 = vshrl.u32 %v462, 16
        %v525 = vrot.slane %v523, 4
        %v526 = vor.u32 %v525, %v521
        %v527 = vrot.slane %v526, 4
        %v529 = vshll.u32 %v463, 16
        %v531 = vrot.slane %v529, 5
        %v532 = vsel %vm484, %v527, %v531
        %v534 = vshrl.u32 %v464, 16
        %v536 = vrot.slane %v534, 4
        %v537 = vshll.u32 %v464, 16
        %v539 = vrot.slane %v537, 5
        %v540 = vor.u32 %v536, %v539
        %v541 = vrot.slane %v540, 4
        %v543 = vshll.u32 %v465, 16
        %v545 = vrot.slane %v543, 5
        %v546 = vsel %vm484, %v541, %v545
        %v547 = vshrl.u32 %v465, 16
        %v549 = vrot.slane %v547, 4
        %v550 = vor.u32 %v549, %v545
        %v551 = vrot.slane %v550, 4
        %v553 = vshll.u32 %v466, 16
        %v555 = vrot.slane %v553, 5
        %v556 = vsel %vm484, %v551, %v555
        %v558 = vshrl.u32 %v467, 16
        %v560 = vrot.slane %v558, 4
        %v561 = vshll.u32 %v467, 16
        %v563 = vrot.slane %v561, 5
        %v564 = vor.u32 %v560, %v563
        %v565 = vrot.slane %v564, 4
        %v567 = vshll.u32 %v468, 16
        %v569 = vrot.slane %v567, 5
        %v570 = vsel %vm484, %v565, %v569
        %v571 = vshrl.u32 %v468, 16
        %v573 = vrot.slane %v571, 4
        %v574 = vor.u32 %v573, %v569
        %v575 = vrot.slane %v574, 4
        %v577 = vshll.u32 %v469, 16
        %v579 = vrot.slane %v577, 5
        %v580 = vsel %vm484, %v575, %v579
        %v582 = vshrl.u32 %v470, 16
        %v584 = vrot.slane %v582, 4
        %v585 = vshll.u32 %v470, 16
        %v587 = vrot.slane %v585, 5
        %v588 = vor.u32 %v584, %v587
        %v589 = vrot.slane %v588, 4
        %v591 = vshll.u32 %v471, 16
        %v593 = vrot.slane %v591, 5
        %v594 = vsel %vm484, %v589, %v593
        %v595 = vshrl.u32 %v471, 16
        %v597 = vrot.slane %v595, 4
        %v598 = vor.u32 %v597, %v593
        %v599 = vrot.slane %v598, 4
        %v601 = vshll.u32 %v472, 16
        %v603 = vrot.slane %v601, 5
        %v604 = vsel %vm484, %v599, %v603
        %v606 = vshrl.u32 %v473, 16
        %v608 = vrot.slane %v606, 4
        %v609 = vshll.u32 %v473, 16
        %v611 = vrot.slane %v609, 5
        %v612 = vor.u32 %v608, %v611
        %v613 = vrot.slane %v612, 4
        %v615 = vshll.u32 %v474, 16
        %v617 = vrot.slane %v615, 5
        %v618 = vsel %vm484, %v613, %v617
        %v619 = vshrl.u32 %v474, 16
        %v621 = vrot.slane %v619, 4
        %v622 = vor.u32 %v621, %v617
        %v623 = vrot.slane %v622, 4
        %v625 = vshll.u32 %v475, 16
        %v627 = vrot.slane %v625, 5
        %v628 = vsel %vm484, %v623, %v627
        %v630 = vshrl.u32 %v476, 16
        %v632 = vrot.slane %v630, 4
        %v633 = vshll.u32 %v476, 16
        %v635 = vrot.slane %v633, 5
        %v636 = vor.u32 %v632, %v635
        %v637 = vrot.slane %v636, 4
        %v639 = vshll.u32 %v477, 16
        %v641 = vrot.slane %v639, 5
        %v642 = vsel %vm484, %v637, %v641
        %v643 = vshrl.u32 %v477, 16
        %v645 = vrot.slane %v643, 4
        %v646 = vor.u32 %v645, %v641
        %v647 = vrot.slane %v646, 4
        %v649 = vshll.u32 %v478, 16
        %v651 = vrot.slane %v649, 5
        %v652 = vsel %vm484, %v647, %v651
        %v654 = vshrl.u32 %v479, 16
        %v656 = vrot.slane %v654, 4
        %v657 = vshll.u32 %v479, 16
        %v659 = vrot.slane %v657, 5
        %v660 = vor.u32 %v656, %v659
        %v661 = vrot.slane %v660, 4
        %v663 = vshll.u32 %v480, 16
        %v665 = vrot.slane %v663, 5
        %v666 = vsel %vm484, %v661, %v665
        %v667 = vshrl.u32 %v480, 16
        %v669 = vrot.slane %v667, 4
        %v670 = vor.u32 %v669, %v665
        %v671 = vrot.slane %v670, 4
        %v673 = vshll.u32 %v481, 16
        %v675 = vrot.slane %v673, 5
        %v676 = vsel %vm484, %v671, %v675
        %677 = vrot.lane.b32.xlu0 %v498, 16
        %v678 = vpop.permute.xlu0 %677
        %679 = vrot.lane.b32.xlu0 %v508, 16
        %v680 = vpop.permute.xlu0 %679
        %681 = vrot.lane.b32.xlu0 %v522, 16
        %v682 = vpop.permute.xlu0 %681
        %683 = vrot.lane.b32.xlu0 %v532, 16
        %v684 = vpop.permute.xlu0 %683
        %685 = vrot.lane.b32.xlu0 %v546, 16
        %v686 = vpop.permute.xlu0 %685
        %687 = vrot.lane.b32.xlu0 %v556, 16
        %v688 = vpop.permute.xlu0 %687
        %689 = vrot.lane.b32.xlu0 %v570, 16
        %v690 = vpop.permute.xlu0 %689
        %691 = vrot.lane.b32.xlu0 %v580, 16
        %v692 = vpop.permute.xlu0 %691
        %693 = vrot.lane.b32.xlu0 %v594, 16
        %v694 = vpop.permute.xlu0 %693
        %695 = vrot.lane.b32.xlu0 %v604, 16
        %v696 = vpop.permute.xlu0 %695
        %697 = vrot.lane.b32.xlu0 %v618, 16
        %v698 = vpop.permute.xlu0 %697
        %699 = vrot.lane.b32.xlu0 %v628, 16
        %v700 = vpop.permute.xlu0 %699
        %701 = vrot.lane.b32.xlu0 %v642, 16
        %v702 = vpop.permute.xlu0 %701
        %703 = vrot.lane.b32.xlu0 %v652, 16
        %v704 = vpop.permute.xlu0 %703
        %705 = vrot.lane.b32.xlu0 %v666, 16
        %v706 = vpop.permute.xlu0 %705
        %707 = vrot.lane.b32.xlu0 %v676, 16
        %v708 = vpop.permute.xlu0 %707
        %vm725 = vcmask 257152
        %726 = vst.msk [vmem:[#allocation3] sm:$0xf] %vm725, %v678
        %727 = vst.msk [vmem:[#allocation3 + $0x8] sm:$0xf] %vm725, %v680
        %728 = vst.msk [vmem:[#allocation3 + $0x10] sm:$0xf] %vm725, %v682
        %729 = vst.msk [vmem:[#allocation3 + $0x18] sm:$0xf] %vm725, %v684
        %730 = vst.msk [vmem:[#allocation3 + $0x20] sm:$0xf] %vm725, %v686
        %731 = vst.msk [vmem:[#allocation3 + $0x28] sm:$0xf] %vm725, %v688
        %732 = vst.msk [vmem:[#allocation3 + $0x30] sm:$0xf] %vm725, %v690
        %733 = vst.msk [vmem:[#allocation3 + $0x38] sm:$0xf] %vm725, %v692
        %734 = vst.msk [vmem:[#allocation3 + $0x40] sm:$0xf] %vm725, %v694
        %735 = vst.msk [vmem:[#allocation3 + $0x48] sm:$0xf] %vm725, %v696
        %736 = vst.msk [vmem:[#allocation3 + $0x50] sm:$0xf] %vm725, %v698
        %737 = vst.msk [vmem:[#allocation3 + $0x58] sm:$0xf] %vm725, %v700
        %738 = vst.msk [vmem:[#allocation3 + $0x60] sm:$0xf] %vm725, %v702
        %739 = vst.msk [vmem:[#allocation3 + $0x68] sm:$0xf] %vm725, %v704
        %740 = vst.msk [vmem:[#allocation3 + $0x70] sm:$0xf] %vm725, %v706
        %741 = vst.msk [vmem:[#allocation3 + $0x78] sm:$0xf] %vm725, %v708
        %v742 = vld [vmem:[#allocation2] sm:$0xe]
        %v743 = vld [vmem:[#allocation2 + $0x4] sm:$0xf]
        %v744 = vld [vmem:[#allocation2 + $0x8] sm:$0x1]
        %v745 = vld [vmem:[#allocation2 + $0xc] sm:$0xe]
        %v746 = vld [vmem:[#allocation2 + $0x10] sm:$0xf]
        %v747 = vld [vmem:[#allocation2 + $0x14] sm:$0x1]
        %v748 = vld [vmem:[#allocation2 + $0x18] sm:$0xe]
        %v749 = vld [vmem:[#allocation2 + $0x1c] sm:$0xf]
        %v750 = vld [vmem:[#allocation2 + $0x20] sm:$0x1]
        %v751 = vld [vmem:[#allocation2 + $0x24] sm:$0xe]
        %v752 = vld [vmem:[#allocation2 + $0x28] sm:$0xf]
        %v753 = vld [vmem:[#allocation2 + $0x2c] sm:$0x1]
        %v754 = vld [vmem:[#allocation2 + $0x30] sm:$0xe]
        %v755 = vld [vmem:[#allocation2 + $0x34] sm:$0xf]
        %v756 = vld [vmem:[#allocation2 + $0x38] sm:$0x1]
        %v757 = vld [vmem:[#allocation2 + $0x3c] sm:$0xe]
        %v758 = vld [vmem:[#allocation2 + $0x40] sm:$0xf]
        %v759 = vld [vmem:[#allocation2 + $0x44] sm:$0x1]
        %v760 = vld [vmem:[#allocation2 + $0x48] sm:$0xe]
        %v761 = vld [vmem:[#allocation2 + $0x4c] sm:$0xf]
        %v762 = vld [vmem:[#allocation2 + $0x50] sm:$0x1]
        %v763 = vld [vmem:[#allocation2 + $0x54] sm:$0xe]
        %v764 = vld [vmem:[#allocation2 + $0x58] sm:$0xf]
        %v765 = vld [vmem:[#allocation2 + $0x5c] sm:$0x1]
        %vm790 = vcmask 1042432
        %vm791 = vcmask 1046532
        %vm792 = vmor %vm790, %vm791
        %v793 = vrot.slane %v742, 5
        %v794 = vrot.slane %v793, 4
        %v795 = vrot.slane %v743, 5
        %v796 = vsel %vm792, %v794, %v795
        %v797 = vrot.slane %v795, 4
        %v798 = vrot.slane %v744, 5
        %v799 = vsel %vm792, %v797, %v798
        %v800 = vrot.slane %v745, 5
        %v801 = vrot.slane %v800, 4
        %v802 = vrot.slane %v746, 5
        %v803 = vsel %vm792, %v801, %v802
        %v804 = vrot.slane %v802, 4
        %v805 = vrot.slane %v747, 5
        %v806 = vsel %vm792, %v804, %v805
        %v807 = vrot.slane %v748, 5
        %v808 = vrot.slane %v807, 4
        %v809 = vrot.slane %v749, 5
        %v810 = vsel %vm792, %v808, %v809
        %v811 = vrot.slane %v809, 4
        %v812 = vrot.slane %v750, 5
        %v813 = vsel %vm792, %v811, %v812
        %v814 = vrot.slane %v751, 5
        %v815 = vrot.slane %v814, 4
        %v816 = vrot.slane %v752, 5
        %v817 = vsel %vm792, %v815, %v816
        %v818 = vrot.slane %v816, 4
        %v819 = vrot.slane %v753, 5
        %v820 = vsel %vm792, %v818, %v819
        %v821 = vrot.slane %v754, 5
        %v822 = vrot.slane %v821, 4
        %v823 = vrot.slane %v755, 5
        %v824 = vsel %vm792, %v822, %v823
        %v825 = vrot.slane %v823, 4
        %v826 = vrot.slane %v756, 5
        %v827 = vsel %vm792, %v825, %v826
        %v828 = vrot.slane %v757, 5
        %v829 = vrot.slane %v828, 4
        %v830 = vrot.slane %v758, 5
        %v831 = vsel %vm792, %v829, %v830
        %v832 = vrot.slane %v830, 4
        %v833 = vrot.slane %v759, 5
        %v834 = vsel %vm792, %v832, %v833
        %v835 = vrot.slane %v760, 5
        %v836 = vrot.slane %v835, 4
        %v837 = vrot.slane %v761, 5
        %v838 = vsel %vm792, %v836, %v837
        %v839 = vrot.slane %v837, 4
        %v840 = vrot.slane %v762, 5
        %v841 = vsel %vm792, %v839, %v840
        %v842 = vrot.slane %v763, 5
        %v843 = vrot.slane %v842, 4
        %v844 = vrot.slane %v764, 5
        %v845 = vsel %vm792, %v843, %v844
        %v846 = vrot.slane %v844, 4
        %v847 = vrot.slane %v765, 5
        %v848 = vsel %vm792, %v846, %v847
        %849 = vrot.lane.b32.xlu0 %v796, 32
        %v850 = vpop.permute.xlu0 %849
        %851 = vrot.lane.b32.xlu0 %v799, 32
        %v852 = vpop.permute.xlu0 %851
        %853 = vrot.lane.b32.xlu0 %v803, 32
        %v854 = vpop.permute.xlu0 %853
        %855 = vrot.lane.b32.xlu0 %v806, 32
        %v856 = vpop.permute.xlu0 %855
        %857 = vrot.lane.b32.xlu0 %v810, 32
        %v858 = vpop.permute.xlu0 %857
        %859 = vrot.lane.b32.xlu0 %v813, 32
        %v860 = vpop.permute.xlu0 %859
        %861 = vrot.lane.b32.xlu0 %v817, 32
        %v862 = vpop.permute.xlu0 %861
        %863 = vrot.lane.b32.xlu0 %v820, 32
        %v864 = vpop.permute.xlu0 %863
        %865 = vrot.lane.b32.xlu0 %v824, 32
        %v866 = vpop.permute.xlu0 %865
        %867 = vrot.lane.b32.xlu0 %v827, 32
        %v868 = vpop.permute.xlu0 %867
        %869 = vrot.lane.b32.xlu0 %v831, 32
        %v870 = vpop.permute.xlu0 %869
        %871 = vrot.lane.b32.xlu0 %v834, 32
        %v872 = vpop.permute.xlu0 %871
        %873 = vrot.lane.b32.xlu0 %v838, 32
        %v874 = vpop.permute.xlu0 %873
        %875 = vrot.lane.b32.xlu0 %v841, 32
        %v876 = vpop.permute.xlu0 %875
        %877 = vrot.lane.b32.xlu0 %v845, 32
        %v878 = vpop.permute.xlu0 %877
        %879 = vrot.lane.b32.xlu0 %v848, 32
        %v880 = vpop.permute.xlu0 %879
        %vm897 = vcmask 388352
        %898 = vst.msk [vmem:[#allocation3] sm:$0xf] %vm897, %v850
        %899 = vst.msk [vmem:[#allocation3 + $0x8] sm:$0xf] %vm897, %v852
        %900 = vst.msk [vmem:[#allocation3 + $0x10] sm:$0xf] %vm897, %v854
        %901 = vst.msk [vmem:[#allocation3 + $0x18] sm:$0xf] %vm897, %v856
        %902 = vst.msk [vmem:[#allocation3 + $0x20] sm:$0xf] %vm897, %v858
        %903 = vst.msk [vmem:[#allocation3 + $0x28] sm:$0xf] %vm897, %v860
        %904 = vst.msk [vmem:[#allocation3 + $0x30] sm:$0xf] %vm897, %v862
        %905 = vst.msk [vmem:[#allocation3 + $0x38] sm:$0xf] %vm897, %v864
        %906 = vst.msk [vmem:[#allocation3 + $0x40] sm:$0xf] %vm897, %v866
        %907 = vst.msk [vmem:[#allocation3 + $0x48] sm:$0xf] %vm897, %v868
        %908 = vst.msk [vmem:[#allocation3 + $0x50] sm:$0xf] %vm897, %v870
        %909 = vst.msk [vmem:[#allocation3 + $0x58] sm:$0xf] %vm897, %v872
        %910 = vst.msk [vmem:[#allocation3 + $0x60] sm:$0xf] %vm897, %v874
        %911 = vst.msk [vmem:[#allocation3 + $0x68] sm:$0xf] %vm897, %v876
        %912 = vst.msk [vmem:[#allocation3 + $0x70] sm:$0xf] %vm897, %v878
        %913 = vst.msk [vmem:[#allocation3 + $0x78] sm:$0xf] %vm897, %v880
        %s914 = scalar_lea.vmem [#allocation2], 12
        %v915 = vld [vmem:[%s914] sm:$0xf]
        %v916 = vld [vmem:[%s914 + $0x4] sm:$0xf]
        %v917 = vld [vmem:[%s914 + $0xc] sm:$0xf]
        %v918 = vld [vmem:[%s914 + $0x10] sm:$0xf]
        %v919 = vld [vmem:[%s914 + $0x18] sm:$0xf]
        %v920 = vld [vmem:[%s914 + $0x1c] sm:$0xf]
        %v921 = vld [vmem:[%s914 + $0x24] sm:$0xf]
        %v922 = vld [vmem:[%s914 + $0x28] sm:$0xf]
        %v923 = vld [vmem:[%s914 + $0x30] sm:$0xf]
        %v924 = vld [vmem:[%s914 + $0x34] sm:$0xf]
        %v925 = vld [vmem:[%s914 + $0x3c] sm:$0xf]
        %v926 = vld [vmem:[%s914 + $0x40] sm:$0xf]
        %v927 = vld [vmem:[%s914 + $0x48] sm:$0xf]
        %v928 = vld [vmem:[%s914 + $0x4c] sm:$0xf]
        %v929 = vld [vmem:[%s914 + $0x54] sm:$0xf]
        %v930 = vld [vmem:[%s914 + $0x58] sm:$0xf]
        %947 = vrot.lane.b32.xlu0 %v915, 48
        %v948 = vpop.permute.xlu0 %947
        %949 = vrot.lane.b32.xlu0 %v916, 48
        %v950 = vpop.permute.xlu0 %949
        %951 = vrot.lane.b32.xlu0 %v917, 48
        %v952 = vpop.permute.xlu0 %951
        %953 = vrot.lane.b32.xlu0 %v918, 48
        %v954 = vpop.permute.xlu0 %953
        %955 = vrot.lane.b32.xlu0 %v919, 48
        %v956 = vpop.permute.xlu0 %955
        %957 = vrot.lane.b32.xlu0 %v920, 48
        %v958 = vpop.permute.xlu0 %957
        %959 = vrot.lane.b32.xlu0 %v921, 48
        %v960 = vpop.permute.xlu0 %959
        %961 = vrot.lane.b32.xlu0 %v922, 48
        %v962 = vpop.permute.xlu0 %961
        %963 = vrot.lane.b32.xlu0 %v923, 48
        %v964 = vpop.permute.xlu0 %963
        %965 = vrot.lane.b32.xlu0 %v924, 48
        %v966 = vpop.permute.xlu0 %965
        %967 = vrot.lane.b32.xlu0 %v925, 48
        %v968 = vpop.permute.xlu0 %967
        %969 = vrot.lane.b32.xlu0 %v926, 48
        %v970 = vpop.permute.xlu0 %969
        %971 = vrot.lane.b32.xlu0 %v927, 48
        %v972 = vpop.permute.xlu0 %971
        %973 = vrot.lane.b32.xlu0 %v928, 48
        %v974 = vpop.permute.xlu0 %973
        %975 = vrot.lane.b32.xlu0 %v929, 48
        %v976 = vpop.permute.xlu0 %975
        %977 = vrot.lane.b32.xlu0 %v930, 48
        %v978 = vpop.permute.xlu0 %977
        %vm995 = vcmask 519552
        %996 = vst.msk [vmem:[#allocation3] sm:$0xf] %vm995, %v948
        %997 = vst.msk [vmem:[#allocation3 + $0x8] sm:$0xf] %vm995, %v950
        %998 = vst.msk [vmem:[#allocation3 + $0x10] sm:$0xf] %vm995, %v952
        %999 = vst.msk [vmem:[#allocation3 + $0x18] sm:$0xf] %vm995, %v954
        %1000 = vst.msk [vmem:[#allocation3 + $0x20] sm:$0xf] %vm995, %v956
        %1001 = vst.msk [vmem:[#allocation3 + $0x28] sm:$0xf] %vm995, %v958
        %1002 = vst.msk [vmem:[#allocation3 + $0x30] sm:$0xf] %vm995, %v960
        %1003 = vst.msk [vmem:[#allocation3 + $0x38] sm:$0xf] %vm995, %v962
        %1004 = vst.msk [vmem:[#allocation3 + $0x40] sm:$0xf] %vm995, %v964
        %1005 = vst.msk [vmem:[#allocation3 + $0x48] sm:$0xf] %vm995, %v966
        %1006 = vst.msk [vmem:[#allocation3 + $0x50] sm:$0xf] %vm995, %v968
        %1007 = vst.msk [vmem:[#allocation3 + $0x58] sm:$0xf] %vm995, %v970
        %1008 = vst.msk [vmem:[#allocation3 + $0x60] sm:$0xf] %vm995, %v972
        %1009 = vst.msk [vmem:[#allocation3 + $0x68] sm:$0xf] %vm995, %v974
        %1010 = vst.msk [vmem:[#allocation3 + $0x70] sm:$0xf] %vm995, %v976
        %1011 = vst.msk [vmem:[#allocation3 + $0x78] sm:$0xf] %vm995, %v978
        %v1012 = vld [vmem:[%s914] sm:$0xf]
        %v1013 = vld [vmem:[%s914 + $0x4] sm:$0xf]
        %v1014 = vld [vmem:[%s914 + $0x8] sm:$0x1]
        %v1015 = vld [vmem:[%s914 + $0xc] sm:$0xf]
        %v1016 = vld [vmem:[%s914 + $0x10] sm:$0xf]
        %v1017 = vld [vmem:[%s914 + $0x14] sm:$0x1]
        %v1018 = vld [vmem:[%s914 + $0x18] sm:$0xf]
        %v1019 = vld [vmem:[%s914 + $0x1c] sm:$0xf]
        %v1020 = vld [vmem:[%s914 + $0x20] sm:$0x1]
        %v1021 = vld [vmem:[%s914 + $0x24] sm:$0xf]
        %v1022 = vld [vmem:[%s914 + $0x28] sm:$0xf]
        %v1023 = vld [vmem:[%s914 + $0x2c] sm:$0x1]
        %v1024 = vld [vmem:[%s914 + $0x30] sm:$0xf]
        %v1025 = vld [vmem:[%s914 + $0x34] sm:$0xf]
        %v1026 = vld [vmem:[%s914 + $0x38] sm:$0x1]
        %v1027 = vld [vmem:[%s914 + $0x3c] sm:$0xf]
        %v1028 = vld [vmem:[%s914 + $0x40] sm:$0xf]
        %v1029 = vld [vmem:[%s914 + $0x44] sm:$0x1]
        %v1030 = vld [vmem:[%s914 + $0x48] sm:$0xf]
        %v1031 = vld [vmem:[%s914 + $0x4c] sm:$0xf]
        %v1032 = vld [vmem:[%s914 + $0x50] sm:$0x1]
        %v1033 = vld [vmem:[%s914 + $0x54] sm:$0xf]
        %v1034 = vld [vmem:[%s914 + $0x58] sm:$0xf]
        %v1035 = vld [vmem:[%s914 + $0x5c] sm:$0x1]
        %v1037 = vshrl.u32 %v1012, 16
        %v1039 = vrot.slane %v1037, 4
        %v1040 = vshll.u32 %v1012, 16
        %v1042 = vrot.slane %v1040, 5
        %v1043 = vor.u32 %v1039, %v1042
        %v1044 = vrot.slane %v1043, 4
        %v1046 = vshll.u32 %v1013, 16
        %v1048 = vrot.slane %v1046, 5
        %v1049 = vsel %vm484, %v1044, %v1048
        %v1050 = vshrl.u32 %v1013, 16
        %v1052 = vrot.slane %v1050, 4
        %v1053 = vor.u32 %v1052, %v1048
        %v1054 = vrot.slane %v1053, 4
        %v1056 = vshll.u32 %v1014, 16
        %v1058 = vrot.slane %v1056, 5
        %v1059 = vsel %vm484, %v1054, %v1058
        %v1061 = vshrl.u32 %v1015, 16
        %v1063 = vrot.slane %v1061, 4
        %v1064 = vshll.u32 %v1015, 16
        %v1066 = vrot.slane %v1064, 5
        %v1067 = vor.u32 %v1063, %v1066
        %v1068 = vrot.slane %v1067, 4
        %v1070 = vshll.u32 %v1016, 16
        %v1072 = vrot.slane %v1070, 5
        %v1073 = vsel %vm484, %v1068, %v1072
        %v1074 = vshrl.u32 %v1016, 16
        %v1076 = vrot.slane %v1074, 4
        %v1077 = vor.u32 %v1076, %v1072
        %v1078 = vrot.slane %v1077, 4
        %v1080 = vshll.u32 %v1017, 16
        %v1082 = vrot.slane %v1080, 5
        %v1083 = vsel %vm484, %v1078, %v1082
        %v1085 = vshrl.u32 %v1018, 16
        %v1087 = vrot.slane %v1085, 4
        %v1088 = vshll.u32 %v1018, 16
        %v1090 = vrot.slane %v1088, 5
        %v1091 = vor.u32 %v1087, %v1090
        %v1092 = vrot.slane %v1091, 4
        %v1094 = vshll.u32 %v1019, 16
        %v1096 = vrot.slane %v1094, 5
        %v1097 = vsel %vm484, %v1092, %v1096
        %v1098 = vshrl.u32 %v1019, 16
        %v1100 = vrot.slane %v1098, 4
        %v1101 = vor.u32 %v1100, %v1096
        %v1102 = vrot.slane %v1101, 4
        %v1104 = vshll.u32 %v1020, 16
        %v1106 = vrot.slane %v1104, 5
        %v1107 = vsel %vm484, %v1102, %v1106
        %v1109 = vshrl.u32 %v1021, 16
        %v1111 = vrot.slane %v1109, 4
        %v1112 = vshll.u32 %v1021, 16
        %v1114 = vrot.slane %v1112, 5
        %v1115 = vor.u32 %v1111, %v1114
        %v1116 = vrot.slane %v1115, 4
        %v1118 = vshll.u32 %v1022, 16
        %v1120 = vrot.slane %v1118, 5
        %v1121 = vsel %vm484, %v1116, %v1120
        %v1122 = vshrl.u32 %v1022, 16
        %v1124 = vrot.slane %v1122, 4
        %v1125 = vor.u32 %v1124, %v1120
        %v1126 = vrot.slane %v1125, 4
        %v1128 = vshll.u32 %v1023, 16
        %v1130 = vrot.slane %v1128, 5
        %v1131 = vsel %vm484, %v1126, %v1130
        %v1133 = vshrl.u32 %v1024, 16
        %v1135 = vrot.slane %v1133, 4
        %v1136 = vshll.u32 %v1024, 16
        %v1138 = vrot.slane %v1136, 5
        %v1139 = vor.u32 %v1135, %v1138
        %v1140 = vrot.slane %v1139, 4
        %v1142 = vshll.u32 %v1025, 16
        %v1144 = vrot.slane %v1142, 5
        %v1145 = vsel %vm484, %v1140, %v1144
        %v1146 = vshrl.u32 %v1025, 16
        %v1148 = vrot.slane %v1146, 4
        %v1149 = vor.u32 %v1148, %v1144
        %v1150 = vrot.slane %v1149, 4
        %v1152 = vshll.u32 %v1026, 16
        %v1154 = vrot.slane %v1152, 5
        %v1155 = vsel %vm484, %v1150, %v1154
        %v1157 = vshrl.u32 %v1027, 16
        %v1159 = vrot.slane %v1157, 4
        %v1160 = vshll.u32 %v1027, 16
        %v1162 = vrot.slane %v1160, 5
        %v1163 = vor.u32 %v1159, %v1162
        %v1164 = vrot.slane %v1163, 4
        %v1166 = vshll.u32 %v1028, 16
        %v1168 = vrot.slane %v1166, 5
        %v1169 = vsel %vm484, %v1164, %v1168
        %v1170 = vshrl.u32 %v1028, 16
        %v1172 = vrot.slane %v1170, 4
        %v1173 = vor.u32 %v1172, %v1168
        %v1174 = vrot.slane %v1173, 4
        %v1176 = vshll.u32 %v1029, 16
        %v1178 = vrot.slane %v1176, 5
        %v1179 = vsel %vm484, %v1174, %v1178
        %v1181 = vshrl.u32 %v1030, 16
        %v1183 = vrot.slane %v1181, 4
        %v1184 = vshll.u32 %v1030, 16
        %v1186 = vrot.slane %v1184, 5
        %v1187 = vor.u32 %v1183, %v1186
        %v1188 = vrot.slane %v1187, 4
        %v1190 = vshll.u32 %v1031, 16
        %v1192 = vrot.slane %v1190, 5
        %v1193 = vsel %vm484, %v1188, %v1192
        %v1194 = vshrl.u32 %v1031, 16
        %v1196 = vrot.slane %v1194, 4
        %v1197 = vor.u32 %v1196, %v1192
        %v1198 = vrot.slane %v1197, 4
        %v1200 = vshll.u32 %v1032, 16
        %v1202 = vrot.slane %v1200, 5
        %v1203 = vsel %vm484, %v1198, %v1202
        %v1205 = vshrl.u32 %v1033, 16
        %v1207 = vrot.slane %v1205, 4
        %v1208 = vshll.u32 %v1033, 16
        %v1210 = vrot.slane %v1208, 5
        %v1211 = vor.u32 %v1207, %v1210
        %v1212 = vrot.slane %v1211, 4
        %v1214 = vshll.u32 %v1034, 16
        %v1216 = vrot.slane %v1214, 5
        %v1217 = vsel %vm484, %v1212, %v1216
        %v1218 = vshrl.u32 %v1034, 16
        %v1220 = vrot.slane %v1218, 4
        %v1221 = vor.u32 %v1220, %v1216
        %v1222 = vrot.slane %v1221, 4
        %v1224 = vshll.u32 %v1035, 16
        %v1226 = vrot.slane %v1224, 5
        %v1227 = vsel %vm484, %v1222, %v1226
        %1228 = vrot.lane.b32.xlu0 %v1049, 64
        %v1229 = vpop.permute.xlu0 %1228
        %1230 = vrot.lane.b32.xlu0 %v1059, 64
        %v1231 = vpop.permute.xlu0 %1230
        %1232 = vrot.lane.b32.xlu0 %v1073, 64
        %v1233 = vpop.permute.xlu0 %1232
        %1234 = vrot.lane.b32.xlu0 %v1083, 64
        %v1235 = vpop.permute.xlu0 %1234
        %1236 = vrot.lane.b32.xlu0 %v1097, 64
        %v1237 = vpop.permute.xlu0 %1236
        %1238 = vrot.lane.b32.xlu0 %v1107, 64
        %v1239 = vpop.permute.xlu0 %1238
        %1240 = vrot.lane.b32.xlu0 %v1121, 64
        %v1241 = vpop.permute.xlu0 %1240
        %1242 = vrot.lane.b32.xlu0 %v1131, 64
        %v1243 = vpop.permute.xlu0 %1242
        %1244 = vrot.lane.b32.xlu0 %v1145, 64
        %v1245 = vpop.permute.xlu0 %1244
        %1246 = vrot.lane.b32.xlu0 %v1155, 64
        %v1247 = vpop.permute.xlu0 %1246
        %1248 = vrot.lane.b32.xlu0 %v1169, 64
        %v1249 = vpop.permute.xlu0 %1248
        %1250 = vrot.lane.b32.xlu0 %v1179, 64
        %v1251 = vpop.permute.xlu0 %1250
        %1252 = vrot.lane.b32.xlu0 %v1193, 64
        %v1253 = vpop.permute.xlu0 %1252
        %1254 = vrot.lane.b32.xlu0 %v1203, 64
        %v1255 = vpop.permute.xlu0 %1254
        %1256 = vrot.lane.b32.xlu0 %v1217, 64
        %v1257 = vpop.permute.xlu0 %1256
        %1258 = vrot.lane.b32.xlu0 %v1227, 64
        %v1259 = vpop.permute.xlu0 %1258
        %vm1276 = vcmask 650752
        %1277 = vst.msk [vmem:[#allocation3] sm:$0xf] %vm1276, %v1229
        %1278 = vst.msk [vmem:[#allocation3 + $0x8] sm:$0xf] %vm1276, %v1231
        %1279 = vst.msk [vmem:[#allocation3 + $0x10] sm:$0xf] %vm1276, %v1233
        %1280 = vst.msk [vmem:[#allocation3 + $0x18] sm:$0xf] %vm1276, %v1235
        %1281 = vst.msk [vmem:[#allocation3 + $0x20] sm:$0xf] %vm1276, %v1237
        %1282 = vst.msk [vmem:[#allocation3 + $0x28] sm:$0xf] %vm1276, %v1239
        %1283 = vst.msk [vmem:[#allocation3 + $0x30] sm:$0xf] %vm1276, %v1241
        %1284 = vst.msk [vmem:[#allocation3 + $0x38] sm:$0xf] %vm1276, %v1243
        %1285 = vst.msk [vmem:[#allocation3 + $0x40] sm:$0xf] %vm1276, %v1245
        %1286 = vst.msk [vmem:[#allocation3 + $0x48] sm:$0xf] %vm1276, %v1247
        %1287 = vst.msk [vmem:[#allocation3 + $0x50] sm:$0xf] %vm1276, %v1249
        %1288 = vst.msk [vmem:[#allocation3 + $0x58] sm:$0xf] %vm1276, %v1251
        %1289 = vst.msk [vmem:[#allocation3 + $0x60] sm:$0xf] %vm1276, %v1253
        %1290 = vst.msk [vmem:[#allocation3 + $0x68] sm:$0xf] %vm1276, %v1255
        %1291 = vst.msk [vmem:[#allocation3 + $0x70] sm:$0xf] %vm1276, %v1257
        %1292 = vst.msk [vmem:[#allocation3 + $0x78] sm:$0xf] %vm1276, %v1259
        %v1293 = vld [vmem:[%s914] sm:$0xe]
        %v1294 = vld [vmem:[%s914 + $0x4] sm:$0xf]
        %v1295 = vld [vmem:[%s914 + $0x8] sm:$0x1]
        %v1296 = vld [vmem:[%s914 + $0xc] sm:$0xe]
        %v1297 = vld [vmem:[%s914 + $0x10] sm:$0xf]
        %v1298 = vld [vmem:[%s914 + $0x14] sm:$0x1]
        %v1299 = vld [vmem:[%s914 + $0x18] sm:$0xe]
        %v1300 = vld [vmem:[%s914 + $0x1c] sm:$0xf]
        %v1301 = vld [vmem:[%s914 + $0x20] sm:$0x1]
        %v1302 = vld [vmem:[%s914 + $0x24] sm:$0xe]
        %v1303 = vld [vmem:[%s914 + $0x28] sm:$0xf]
        %v1304 = vld [vmem:[%s914 + $0x2c] sm:$0x1]
        %v1305 = vld [vmem:[%s914 + $0x30] sm:$0xe]
        %v1306 = vld [vmem:[%s914 + $0x34] sm:$0xf]
        %v1307 = vld [vmem:[%s914 + $0x38] sm:$0x1]
        %v1308 = vld [vmem:[%s914 + $0x3c] sm:$0xe]
        %v1309 = vld [vmem:[%s914 + $0x40] sm:$0xf]
        %v1310 = vld [vmem:[%s914 + $0x44] sm:$0x1]
        %v1311 = vld [vmem:[%s914 + $0x48] sm:$0xe]
        %v1312 = vld [vmem:[%s914 + $0x4c] sm:$0xf]
        %v1313 = vld [vmem:[%s914 + $0x50] sm:$0x1]
        %v1314 = vld [vmem:[%s914 + $0x54] sm:$0xe]
        %v1315 = vld [vmem:[%s914 + $0x58] sm:$0xf]
        %v1316 = vld [vmem:[%s914 + $0x5c] sm:$0x1]
        %v1341 = vrot.slane %v1293, 5
        %v1342 = vrot.slane %v1341, 4
        %v1343 = vrot.slane %v1294, 5
        %v1344 = vsel %vm792, %v1342, %v1343
        %v1345 = vrot.slane %v1343, 4
        %v1346 = vrot.slane %v1295, 5
        %v1347 = vsel %vm792, %v1345, %v1346
        %v1348 = vrot.slane %v1296, 5
        %v1349 = vrot.slane %v1348, 4
        %v1350 = vrot.slane %v1297, 5
        %v1351 = vsel %vm792, %v1349, %v1350
        %v1352 = vrot.slane %v1350, 4
        %v1353 = vrot.slane %v1298, 5
        %v1354 = vsel %vm792, %v1352, %v1353
        %v1355 = vrot.slane %v1299, 5
        %v1356 = vrot.slane %v1355, 4
        %v1357 = vrot.slane %v1300, 5
        %v1358 = vsel %vm792, %v1356, %v1357
        %v1359 = vrot.slane %v1357, 4
        %v1360 = vrot.slane %v1301, 5
        %v1361 = vsel %vm792, %v1359, %v1360
        %v1362 = vrot.slane %v1302, 5
        %v1363 = vrot.slane %v1362, 4
        %v1364 = vrot.slane %v1303, 5
        %v1365 = vsel %vm792, %v1363, %v1364
        %v1366 = vrot.slane %v1364, 4
        %v1367 = vrot.slane %v1304, 5
        %v1368 = vsel %vm792, %v1366, %v1367
        %v1369 = vrot.slane %v1305, 5
        %v1370 = vrot.slane %v1369, 4
        %v1371 = vrot.slane %v1306, 5
        %v1372 = vsel %vm792, %v1370, %v1371
        %v1373 = vrot.slane %v1371, 4
        %v1374 = vrot.slane %v1307, 5
        %v1375 = vsel %vm792, %v1373, %v1374
        %v1376 = vrot.slane %v1308, 5
        %v1377 = vrot.slane %v1376, 4
        %v1378 = vrot.slane %v1309, 5
        %v1379 = vsel %vm792, %v1377, %v1378
        %v1380 = vrot.slane %v1378, 4
        %v1381 = vrot.slane %v1310, 5
        %v1382 = vsel %vm792, %v1380, %v1381
        %v1383 = vrot.slane %v1311, 5
        %v1384 = vrot.slane %v1383, 4
        %v1385 = vrot.slane %v1312, 5
        %v1386 = vsel %vm792, %v1384, %v1385
        %v1387 = vrot.slane %v1385, 4
        %v1388 = vrot.slane %v1313, 5
        %v1389 = vsel %vm792, %v1387, %v1388
        %v1390 = vrot.slane %v1314, 5
        %v1391 = vrot.slane %v1390, 4
        %v1392 = vrot.slane %v1315, 5
        %v1393 = vsel %vm792, %v1391, %v1392
        %v1394 = vrot.slane %v1392, 4
        %v1395 = vrot.slane %v1316, 5
        %v1396 = vsel %vm792, %v1394, %v1395
        %1397 = vrot.lane.b32.xlu0 %v1344, 80
        %v1398 = vpop.permute.xlu0 %1397
        %1399 = vrot.lane.b32.xlu0 %v1347, 80
        %v1400 = vpop.permute.xlu0 %1399
        %1401 = vrot.lane.b32.xlu0 %v1351, 80
        %v1402 = vpop.permute.xlu0 %1401
        %1403 = vrot.lane.b32.xlu0 %v1354, 80
        %v1404 = vpop.permute.xlu0 %1403
        %1405 = vrot.lane.b32.xlu0 %v1358, 80
        %v1406 = vpop.permute.xlu0 %1405
        %1407 = vrot.lane.b32.xlu0 %v1361, 80
        %v1408 = vpop.permute.xlu0 %1407
        %1409 = vrot.lane.b32.xlu0 %v1365, 80
        %v1410 = vpop.permute.xlu0 %1409
        %1411 = vrot.lane.b32.xlu0 %v1368, 80
        %v1412 = vpop.permute.xlu0 %1411
        %1413 = vrot.lane.b32.xlu0 %v1372, 80
        %v1414 = vpop.permute.xlu0 %1413
        %1415 = vrot.lane.b32.xlu0 %v1375, 80
        %v1416 = vpop.permute.xlu0 %1415
        %1417 = vrot.lane.b32.xlu0 %v1379, 80
        %v1418 = vpop.permute.xlu0 %1417
        %1419 = vrot.lane.b32.xlu0 %v1382, 80
        %v1420 = vpop.permute.xlu0 %1419
        %1421 = vrot.lane.b32.xlu0 %v1386, 80
        %v1422 = vpop.permute.xlu0 %1421
        %1423 = vrot.lane.b32.xlu0 %v1389, 80
        %v1424 = vpop.permute.xlu0 %1423
        %1425 = vrot.lane.b32.xlu0 %v1393, 80
        %v1426 = vpop.permute.xlu0 %1425
        %1427 = vrot.lane.b32.xlu0 %v1396, 80
        %v1428 = vpop.permute.xlu0 %1427
        %vm1445 = vcmask 781952
        %1446 = vst.msk [vmem:[#allocation3] sm:$0xf] %vm1445, %v1398
        %1447 = vst.msk [vmem:[#allocation3 + $0x8] sm:$0xf] %vm1445, %v1400
        %1448 = vst.msk [vmem:[#allocation3 + $0x10] sm:$0xf] %vm1445, %v1402
        %1449 = vst.msk [vmem:[#allocation3 + $0x18] sm:$0xf] %vm1445, %v1404
        %1450 = vst.msk [vmem:[#allocation3 + $0x20] sm:$0xf] %vm1445, %v1406
        %1451 = vst.msk [vmem:[#allocation3 + $0x28] sm:$0xf] %vm1445, %v1408
        %1452 = vst.msk [vmem:[#allocation3 + $0x30] sm:$0xf] %vm1445, %v1410
        %1453 = vst.msk [vmem:[#allocation3 + $0x38] sm:$0xf] %vm1445, %v1412
        %1454 = vst.msk [vmem:[#allocation3 + $0x40] sm:$0xf] %vm1445, %v1414
        %1455 = vst.msk [vmem:[#allocation3 + $0x48] sm:$0xf] %vm1445, %v1416
        %1456 = vst.msk [vmem:[#allocation3 + $0x50] sm:$0xf] %vm1445, %v1418
        %1457 = vst.msk [vmem:[#allocation3 + $0x58] sm:$0xf] %vm1445, %v1420
        %1458 = vst.msk [vmem:[#allocation3 + $0x60] sm:$0xf] %vm1445, %v1422
        %1459 = vst.msk [vmem:[#allocation3 + $0x68] sm:$0xf] %vm1445, %v1424
        %1460 = vst.msk [vmem:[#allocation3 + $0x70] sm:$0xf] %vm1445, %v1426
        %1461 = vst.msk [vmem:[#allocation3 + $0x78] sm:$0xf] %vm1445, %v1428
        %s1462 = scalar_lea.vmem [#allocation2], 24
        %v1463 = vld [vmem:[%s1462] sm:$0xf]
        %v1464 = vld [vmem:[%s1462 + $0x4] sm:$0xf]
        %v1465 = vld [vmem:[%s1462 + $0xc] sm:$0xf]
        %v1466 = vld [vmem:[%s1462 + $0x10] sm:$0xf]
        %v1467 = vld [vmem:[%s1462 + $0x18] sm:$0xf]
        %v1468 = vld [vmem:[%s1462 + $0x1c] sm:$0xf]
        %v1469 = vld [vmem:[%s1462 + $0x24] sm:$0xf]
        %v1470 = vld [vmem:[%s1462 + $0x28] sm:$0xf]
        %v1471 = vld [vmem:[%s1462 + $0x30] sm:$0xf]
        %v1472 = vld [vmem:[%s1462 + $0x34] sm:$0xf]
        %v1473 = vld [vmem:[%s1462 + $0x3c] sm:$0xf]
        %v1474 = vld [vmem:[%s1462 + $0x40] sm:$0xf]
        %v1475 = vld [vmem:[%s1462 + $0x48] sm:$0xf]
        %v1476 = vld [vmem:[%s1462 + $0x4c] sm:$0xf]
        %v1477 = vld [vmem:[%s1462 + $0x54] sm:$0xf]
        %v1478 = vld [vmem:[%s1462 + $0x58] sm:$0xf]
        %1495 = vrot.lane.b32.xlu0 %v1463, 96
        %v1496 = vpop.permute.xlu0 %1495
        %1497 = vrot.lane.b32.xlu0 %v1464, 96
        %v1498 = vpop.permute.xlu0 %1497
        %1499 = vrot.lane.b32.xlu0 %v1465, 96
        %v1500 = vpop.permute.xlu0 %1499
        %1501 = vrot.lane.b32.xlu0 %v1466, 96
        %v1502 = vpop.permute.xlu0 %1501
        %1503 = vrot.lane.b32.xlu0 %v1467, 96
        %v1504 = vpop.permute.xlu0 %1503
        %1505 = vrot.lane.b32.xlu0 %v1468, 96
        %v1506 = vpop.permute.xlu0 %1505
        %1507 = vrot.lane.b32.xlu0 %v1469, 96
        %v1508 = vpop.permute.xlu0 %1507
        %1509 = vrot.lane.b32.xlu0 %v1470, 96
        %v1510 = vpop.permute.xlu0 %1509
        %1511 = vrot.lane.b32.xlu0 %v1471, 96
        %v1512 = vpop.permute.xlu0 %1511
        %1513 = vrot.lane.b32.xlu0 %v1472, 96
        %v1514 = vpop.permute.xlu0 %1513
        %1515 = vrot.lane.b32.xlu0 %v1473, 96
        %v1516 = vpop.permute.xlu0 %1515
        %1517 = vrot.lane.b32.xlu0 %v1474, 96
        %v1518 = vpop.permute.xlu0 %1517
        %1519 = vrot.lane.b32.xlu0 %v1475, 96
        %v1520 = vpop.permute.xlu0 %1519
        %1521 = vrot.lane.b32.xlu0 %v1476, 96
        %v1522 = vpop.permute.xlu0 %1521
        %1523 = vrot.lane.b32.xlu0 %v1477, 96
        %v1524 = vpop.permute.xlu0 %1523
        %1525 = vrot.lane.b32.xlu0 %v1478, 96
        %v1526 = vpop.permute.xlu0 %1525
        %vm1543 = vcmask 913152
        %1544 = vst.msk [vmem:[#allocation3] sm:$0xf] %vm1543, %v1496
        %1545 = vst.msk [vmem:[#allocation3 + $0x8] sm:$0xf] %vm1543, %v1498
        %1546 = vst.msk [vmem:[#allocation3 + $0x10] sm:$0xf] %vm1543, %v1500
        %1547 = vst.msk [vmem:[#allocation3 + $0x18] sm:$0xf] %vm1543, %v1502
        %1548 = vst.msk [vmem:[#allocation3 + $0x20] sm:$0xf] %vm1543, %v1504
        %1549 = vst.msk [vmem:[#allocation3 + $0x28] sm:$0xf] %vm1543, %v1506
        %1550 = vst.msk [vmem:[#allocation3 + $0x30] sm:$0xf] %vm1543, %v1508
        %1551 = vst.msk [vmem:[#allocation3 + $0x38] sm:$0xf] %vm1543, %v1510
        %1552 = vst.msk [vmem:[#allocation3 + $0x40] sm:$0xf] %vm1543, %v1512
        %1553 = vst.msk [vmem:[#allocation3 + $0x48] sm:$0xf] %vm1543, %v1514
        %1554 = vst.msk [vmem:[#allocation3 + $0x50] sm:$0xf] %vm1543, %v1516
        %1555 = vst.msk [vmem:[#allocation3 + $0x58] sm:$0xf] %vm1543, %v1518
        %1556 = vst.msk [vmem:[#allocation3 + $0x60] sm:$0xf] %vm1543, %v1520
        %1557 = vst.msk [vmem:[#allocation3 + $0x68] sm:$0xf] %vm1543, %v1522
        %1558 = vst.msk [vmem:[#allocation3 + $0x70] sm:$0xf] %vm1543, %v1524
        %1559 = vst.msk [vmem:[#allocation3 + $0x78] sm:$0xf] %vm1543, %v1526
        %v1560 = vld [vmem:[%s1462] sm:$0xf]
        %v1561 = vld [vmem:[%s1462 + $0x4] sm:$0xf]
        %v1562 = vld [vmem:[%s1462 + $0x8] sm:$0x1]
        %v1563 = vld [vmem:[%s1462 + $0xc] sm:$0xf]
        %v1564 = vld [vmem:[%s1462 + $0x10] sm:$0xf]
        %v1565 = vld [vmem:[%s1462 + $0x14] sm:$0x1]
        %v1566 = vld [vmem:[%s1462 + $0x18] sm:$0xf]
        %v1567 = vld [vmem:[%s1462 + $0x1c] sm:$0xf]
        %v1568 = vld [vmem:[%s1462 + $0x20] sm:$0x1]
        %v1569 = vld [vmem:[%s1462 + $0x24] sm:$0xf]
        %v1570 = vld [vmem:[%s1462 + $0x28] sm:$0xf]
        %v1571 = vld [vmem:[%s1462 + $0x2c] sm:$0x1]
        %v1572 = vld [vmem:[%s1462 + $0x30] sm:$0xf]
        %v1573 = vld [vmem:[%s1462 + $0x34] sm:$0xf]
        %v1574 = vld [vmem:[%s1462 + $0x38] sm:$0x1]
        %v1575 = vld [vmem:[%s1462 + $0x3c] sm:$0xf]
        %v1576 = vld [vmem:[%s1462 + $0x40] sm:$0xf]
        %v1577 = vld [vmem:[%s1462 + $0x44] sm:$0x1]
        %v1578 = vld [vmem:[%s1462 + $0x48] sm:$0xf]
        %v1579 = vld [vmem:[%s1462 + $0x4c] sm:$0xf]
        %v1580 = vld [vmem:[%s1462 + $0x50] sm:$0x1]
        %v1581 = vld [vmem:[%s1462 + $0x54] sm:$0xf]
        %v1582 = vld [vmem:[%s1462 + $0x58] sm:$0xf]
        %v1583 = vld [vmem:[%s1462 + $0x5c] sm:$0x1]
        %v1585 = vshrl.u32 %v1560, 16
        %v1587 = vrot.slane %v1585, 4
        %v1588 = vshll.u32 %v1560, 16
        %v1590 = vrot.slane %v1588, 5
        %v1591 = vor.u32 %v1587, %v1590
        %v1592 = vrot.slane %v1591, 4
        %v1594 = vshll.u32 %v1561, 16
        %v1596 = vrot.slane %v1594, 5
        %v1597 = vsel %vm484, %v1592, %v1596
        %v1598 = vshrl.u32 %v1561, 16
        %v1600 = vrot.slane %v1598, 4
        %v1601 = vor.u32 %v1600, %v1596
        %v1602 = vrot.slane %v1601, 4
        %v1604 = vshll.u32 %v1562, 16
        %v1606 = vrot.slane %v1604, 5
        %v1607 = vsel %vm484, %v1602, %v1606
        %v1609 = vshrl.u32 %v1563, 16
        %v1611 = vrot.slane %v1609, 4
        %v1612 = vshll.u32 %v1563, 16
        %v1614 = vrot.slane %v1612, 5
        %v1615 = vor.u32 %v1611, %v1614
        %v1616 = vrot.slane %v1615, 4
        %v1618 = vshll.u32 %v1564, 16
        %v1620 = vrot.slane %v1618, 5
        %v1621 = vsel %vm484, %v1616, %v1620
        %v1622 = vshrl.u32 %v1564, 16
        %v1624 = vrot.slane %v1622, 4
        %v1625 = vor.u32 %v1624, %v1620
        %v1626 = vrot.slane %v1625, 4
        %v1628 = vshll.u32 %v1565, 16
        %v1630 = vrot.slane %v1628, 5
        %v1631 = vsel %vm484, %v1626, %v1630
        %v1633 = vshrl.u32 %v1566, 16
        %v1635 = vrot.slane %v1633, 4
        %v1636 = vshll.u32 %v1566, 16
        %v1638 = vrot.slane %v1636, 5
        %v1639 = vor.u32 %v1635, %v1638
        %v1640 = vrot.slane %v1639, 4
        %v1642 = vshll.u32 %v1567, 16
        %v1644 = vrot.slane %v1642, 5
        %v1645 = vsel %vm484, %v1640, %v1644
        %v1646 = vshrl.u32 %v1567, 16
        %v1648 = vrot.slane %v1646, 4
        %v1649 = vor.u32 %v1648, %v1644
        %v1650 = vrot.slane %v1649, 4
        %v1652 = vshll.u32 %v1568, 16
        %v1654 = vrot.slane %v1652, 5
        %v1655 = vsel %vm484, %v1650, %v1654
        %v1657 = vshrl.u32 %v1569, 16
        %v1659 = vrot.slane %v1657, 4
        %v1660 = vshll.u32 %v1569, 16
        %v1662 = vrot.slane %v1660, 5
        %v1663 = vor.u32 %v1659, %v1662
        %v1664 = vrot.slane %v1663, 4
        %v1666 = vshll.u32 %v1570, 16
        %v1668 = vrot.slane %v1666, 5
        %v1669 = vsel %vm484, %v1664, %v1668
        %v1670 = vshrl.u32 %v1570, 16
        %v1672 = vrot.slane %v1670, 4
        %v1673 = vor.u32 %v1672, %v1668
        %v1674 = vrot.slane %v1673, 4
        %v1676 = vshll.u32 %v1571, 16
        %v1678 = vrot.slane %v1676, 5
        %v1679 = vsel %vm484, %v1674, %v1678
        %v1681 = vshrl.u32 %v1572, 16
        %v1683 = vrot.slane %v1681, 4
        %v1684 = vshll.u32 %v1572, 16
        %v1686 = vrot.slane %v1684, 5
        %v1687 = vor.u32 %v1683, %v1686
        %v1688 = vrot.slane %v1687, 4
        %v1690 = vshll.u32 %v1573, 16
        %v1692 = vrot.slane %v1690, 5
        %v1693 = vsel %vm484, %v1688, %v1692
        %v1694 = vshrl.u32 %v1573, 16
        %v1696 = vrot.slane %v1694, 4
        %v1697 = vor.u32 %v1696, %v1692
        %v1698 = vrot.slane %v1697, 4
        %v1700 = vshll.u32 %v1574, 16
        %v1702 = vrot.slane %v1700, 5
        %v1703 = vsel %vm484, %v1698, %v1702
        %v1705 = vshrl.u32 %v1575, 16
        %v1707 = vrot.slane %v1705, 4
        %v1708 = vshll.u32 %v1575, 16
        %v1710 = vrot.slane %v1708, 5
        %v1711 = vor.u32 %v1707, %v1710
        %v1712 = vrot.slane %v1711, 4
        %v1714 = vshll.u32 %v1576, 16
        %v1716 = vrot.slane %v1714, 5
        %v1717 = vsel %vm484, %v1712, %v1716
        %v1718 = vshrl.u32 %v1576, 16
        %v1720 = vrot.slane %v1718, 4
        %v1721 = vor.u32 %v1720, %v1716
        %v1722 = vrot.slane %v1721, 4
        %v1724 = vshll.u32 %v1577, 16
        %v1726 = vrot.slane %v1724, 5
        %v1727 = vsel %vm484, %v1722, %v1726
        %v1729 = vshrl.u32 %v1578, 16
        %v1731 = vrot.slane %v1729, 4
        %v1732 = vshll.u32 %v1578, 16
        %v1734 = vrot.slane %v1732, 5
        %v1735 = vor.u32 %v1731, %v1734
        %v1736 = vrot.slane %v1735, 4
        %v1738 = vshll.u32 %v1579, 16
        %v1740 = vrot.slane %v1738, 5
        %v1741 = vsel %vm484, %v1736, %v1740
        %v1742 = vshrl.u32 %v1579, 16
        %v1744 = vrot.slane %v1742, 4
        %v1745 = vor.u32 %v1744, %v1740
        %v1746 = vrot.slane %v1745, 4
        %v1748 = vshll.u32 %v1580, 16
        %v1750 = vrot.slane %v1748, 5
        %v1751 = vsel %vm484, %v1746, %v1750
        %v1753 = vshrl.u32 %v1581, 16
        %v1755 = vrot.slane %v1753, 4
        %v1756 = vshll.u32 %v1581, 16
        %v1758 = vrot.slane %v1756, 5
        %v1759 = vor.u32 %v1755, %v1758
        %v1760 = vrot.slane %v1759, 4
        %v1762 = vshll.u32 %v1582, 16
        %v1764 = vrot.slane %v1762, 5
        %v1765 = vsel %vm484, %v1760, %v1764
        %v1766 = vshrl.u32 %v1582, 16
        %v1768 = vrot.slane %v1766, 4
        %v1769 = vor.u32 %v1768, %v1764
        %v1770 = vrot.slane %v1769, 4
        %v1772 = vshll.u32 %v1583, 16
        %v1774 = vrot.slane %v1772, 5
        %v1775 = vsel %vm484, %v1770, %v1774
        %1776 = vrot.lane.b32.xlu0 %v1597, 112
        %v1777 = vpop.permute.xlu0 %1776
        %1778 = vrot.lane.b32.xlu0 %v1607, 112
        %v1779 = vpop.permute.xlu0 %1778
        %1780 = vrot.lane.b32.xlu0 %v1621, 112
        %v1781 = vpop.permute.xlu0 %1780
        %1782 = vrot.lane.b32.xlu0 %v1631, 112
        %v1783 = vpop.permute.xlu0 %1782
        %1784 = vrot.lane.b32.xlu0 %v1645, 112
        %v1785 = vpop.permute.xlu0 %1784
        %1786 = vrot.lane.b32.xlu0 %v1655, 112
        %v1787 = vpop.permute.xlu0 %1786
        %1788 = vrot.lane.b32.xlu0 %v1669, 112
        %v1789 = vpop.permute.xlu0 %1788
        %1790 = vrot.lane.b32.xlu0 %v1679, 112
        %v1791 = vpop.permute.xlu0 %1790
        %1792 = vrot.lane.b32.xlu0 %v1693, 112
        %v1793 = vpop.permute.xlu0 %1792
        %1794 = vrot.lane.b32.xlu0 %v1703, 112
        %v1795 = vpop.permute.xlu0 %1794
        %1796 = vrot.lane.b32.xlu0 %v1717, 112
        %v1797 = vpop.permute.xlu0 %1796
        %1798 = vrot.lane.b32.xlu0 %v1727, 112
        %v1799 = vpop.permute.xlu0 %1798
        %1800 = vrot.lane.b32.xlu0 %v1741, 112
        %v1801 = vpop.permute.xlu0 %1800
        %1802 = vrot.lane.b32.xlu0 %v1751, 112
        %v1803 = vpop.permute.xlu0 %1802
        %1804 = vrot.lane.b32.xlu0 %v1765, 112
        %v1805 = vpop.permute.xlu0 %1804
        %1806 = vrot.lane.b32.xlu0 %v1775, 112
        %v1807 = vpop.permute.xlu0 %1806
        %vm1824 = vcmask 1044352
        %1825 = vst.msk [vmem:[#allocation3] sm:$0xf] %vm1824, %v1777
        %1826 = vst.msk [vmem:[#allocation3 + $0x8] sm:$0xf] %vm1824, %v1779
        %1827 = vst.msk [vmem:[#allocation3 + $0x10] sm:$0xf] %vm1824, %v1781
        %1828 = vst.msk [vmem:[#allocation3 + $0x18] sm:$0xf] %vm1824, %v1783
        %1829 = vst.msk [vmem:[#allocation3 + $0x20] sm:$0xf] %vm1824, %v1785
        %1830 = vst.msk [vmem:[#allocation3 + $0x28] sm:$0xf] %vm1824, %v1787
        %1831 = vst.msk [vmem:[#allocation3 + $0x30] sm:$0xf] %vm1824, %v1789
        %1832 = vst.msk [vmem:[#allocation3 + $0x38] sm:$0xf] %vm1824, %v1791
        %1833 = vst.msk [vmem:[#allocation3 + $0x40] sm:$0xf] %vm1824, %v1793
        %1834 = vst.msk [vmem:[#allocation3 + $0x48] sm:$0xf] %vm1824, %v1795
        %1835 = vst.msk [vmem:[#allocation3 + $0x50] sm:$0xf] %vm1824, %v1797
        %1836 = vst.msk [vmem:[#allocation3 + $0x58] sm:$0xf] %vm1824, %v1799
        %1837 = vst.msk [vmem:[#allocation3 + $0x60] sm:$0xf] %vm1824, %v1801
        %1838 = vst.msk [vmem:[#allocation3 + $0x68] sm:$0xf] %vm1824, %v1803
        %1839 = vst.msk [vmem:[#allocation3 + $0x70] sm:$0xf] %vm1824, %v1805
        %1840 = vst.msk [vmem:[#allocation3 + $0x78] sm:$0xf] %vm1824, %v1807
        %v1841 = vld [vmem:[%s1462] sm:$0xe]
        %v1842 = vld [vmem:[%s1462 + $0x4] sm:$0xf]
        %v1843 = vld [vmem:[%s1462 + $0x8] sm:$0x1]
        %v1844 = vld [vmem:[%s1462 + $0xc] sm:$0xe]
        %v1845 = vld [vmem:[%s1462 + $0x10] sm:$0xf]
        %v1846 = vld [vmem:[%s1462 + $0x14] sm:$0x1]
        %v1847 = vld [vmem:[%s1462 + $0x18] sm:$0xe]
        %v1848 = vld [vmem:[%s1462 + $0x1c] sm:$0xf]
        %v1849 = vld [vmem:[%s1462 + $0x20] sm:$0x1]
        %v1850 = vld [vmem:[%s1462 + $0x24] sm:$0xe]
        %v1851 = vld [vmem:[%s1462 + $0x28] sm:$0xf]
        %v1852 = vld [vmem:[%s1462 + $0x2c] sm:$0x1]
        %v1853 = vld [vmem:[%s1462 + $0x30] sm:$0xe]
        %v1854 = vld [vmem:[%s1462 + $0x34] sm:$0xf]
        %v1855 = vld [vmem:[%s1462 + $0x38] sm:$0x1]
        %v1856 = vld [vmem:[%s1462 + $0x3c] sm:$0xe]
        %v1857 = vld [vmem:[%s1462 + $0x40] sm:$0xf]
        %v1858 = vld [vmem:[%s1462 + $0x44] sm:$0x1]
        %v1859 = vld [vmem:[%s1462 + $0x48] sm:$0xe]
        %v1860 = vld [vmem:[%s1462 + $0x4c] sm:$0xf]
        %v1861 = vld [vmem:[%s1462 + $0x50] sm:$0x1]
        %v1862 = vld [vmem:[%s1462 + $0x54] sm:$0xe]
        %v1863 = vld [vmem:[%s1462 + $0x58] sm:$0xf]
        %v1864 = vld [vmem:[%s1462 + $0x5c] sm:$0x1]
        %v1889 = vrot.slane %v1841, 5
        %v1890 = vrot.slane %v1889, 4
        %v1891 = vrot.slane %v1842, 5
        %v1892 = vsel %vm792, %v1890, %v1891
        %v1893 = vrot.slane %v1891, 4
        %v1894 = vrot.slane %v1843, 5
        %v1895 = vsel %vm792, %v1893, %v1894
        %v1896 = vrot.slane %v1844, 5
        %v1897 = vrot.slane %v1896, 4
        %v1898 = vrot.slane %v1845, 5
        %v1899 = vsel %vm792, %v1897, %v1898
        %v1900 = vrot.slane %v1898, 4
        %v1901 = vrot.slane %v1846, 5
        %v1902 = vsel %vm792, %v1900, %v1901
        %v1903 = vrot.slane %v1847, 5
        %v1904 = vrot.slane %v1903, 4
        %v1905 = vrot.slane %v1848, 5
        %v1906 = vsel %vm792, %v1904, %v1905
        %v1907 = vrot.slane %v1905, 4
        %v1908 = vrot.slane %v1849, 5
        %v1909 = vsel %vm792, %v1907, %v1908
        %v1910 = vrot.slane %v1850, 5
        %v1911 = vrot.slane %v1910, 4
        %v1912 = vrot.slane %v1851, 5
        %v1913 = vsel %vm792, %v1911, %v1912
        %v1914 = vrot.slane %v1912, 4
        %v1915 = vrot.slane %v1852, 5
        %v1916 = vsel %vm792, %v1914, %v1915
        %v1917 = vrot.slane %v1853, 5
        %v1918 = vrot.slane %v1917, 4
        %v1919 = vrot.slane %v1854, 5
        %v1920 = vsel %vm792, %v1918, %v1919
        %v1921 = vrot.slane %v1919, 4
        %v1922 = vrot.slane %v1855, 5
        %v1923 = vsel %vm792, %v1921, %v1922
        %v1924 = vrot.slane %v1856, 5
        %v1925 = vrot.slane %v1924, 4
        %v1926 = vrot.slane %v1857, 5
        %v1927 = vsel %vm792, %v1925, %v1926
        %v1928 = vrot.slane %v1926, 4
        %v1929 = vrot.slane %v1858, 5
        %v1930 = vsel %vm792, %v1928, %v1929
        %v1931 = vrot.slane %v1859, 5
        %v1932 = vrot.slane %v1931, 4
        %v1933 = vrot.slane %v1860, 5
        %v1934 = vsel %vm792, %v1932, %v1933
        %v1935 = vrot.slane %v1933, 4
        %v1936 = vrot.slane %v1861, 5
        %v1937 = vsel %vm792, %v1935, %v1936
        %v1938 = vrot.slane %v1862, 5
        %v1939 = vrot.slane %v1938, 4
        %v1940 = vrot.slane %v1863, 5
        %v1941 = vsel %vm792, %v1939, %v1940
        %v1942 = vrot.slane %v1940, 4
        %v1943 = vrot.slane %v1864, 5
        %v1944 = vsel %vm792, %v1942, %v1943
        %1961 = vst.msk [vmem:[#allocation3 + $0x4] sm:$0xf] %vm387, %v1892
        %1962 = vst.msk [vmem:[#allocation3 + $0xc] sm:$0xf] %vm387, %v1895
        %1963 = vst.msk [vmem:[#allocation3 + $0x14] sm:$0xf] %vm387, %v1899
        %1964 = vst.msk [vmem:[#allocation3 + $0x1c] sm:$0xf] %vm387, %v1902
        %1965 = vst.msk [vmem:[#allocation3 + $0x24] sm:$0xf] %vm387, %v1906
        %1966 = vst.msk [vmem:[#allocation3 + $0x2c] sm:$0xf] %vm387, %v1909
        %1967 = vst.msk [vmem:[#allocation3 + $0x34] sm:$0xf] %vm387, %v1913
        %1968 = vst.msk [vmem:[#allocation3 + $0x3c] sm:$0xf] %vm387, %v1916
        %1969 = vst.msk [vmem:[#allocation3 + $0x44] sm:$0xf] %vm387, %v1920
        %1970 = vst.msk [vmem:[#allocation3 + $0x4c] sm:$0xf] %vm387, %v1923
        %1971 = vst.msk [vmem:[#allocation3 + $0x54] sm:$0xf] %vm387, %v1927
        %1972 = vst.msk [vmem:[#allocation3 + $0x5c] sm:$0xf] %vm387, %v1930
        %1973 = vst.msk [vmem:[#allocation3 + $0x64] sm:$0xf] %vm387, %v1934
        %1974 = vst.msk [vmem:[#allocation3 + $0x6c] sm:$0xf] %vm387, %v1937
        %1975 = vst.msk [vmem:[#allocation3 + $0x74] sm:$0xf] %vm387, %v1941
        %1976 = vst.msk [vmem:[#allocation3 + $0x7c] sm:$0xf] %vm387, %v1944
        %v1977 = vld [vmem:[#allocation3] sm:$0xff]
        %v1978 = vld [vmem:[#allocation3 + $0x8] sm:$0xff]
        %v1979 = vld [vmem:[#allocation3 + $0x10] sm:$0xff]
        %v1980 = vld [vmem:[#allocation3 + $0x18] sm:$0xff]
        %v1981 = vld [vmem:[#allocation3 + $0x20] sm:$0xff]
        %v1982 = vld [vmem:[#allocation3 + $0x28] sm:$0xff]
        %v1983 = vld [vmem:[#allocation3 + $0x30] sm:$0xff]
        %v1984 = vld [vmem:[#allocation3 + $0x38] sm:$0xff]
        %v1985 = vld [vmem:[#allocation3 + $0x40] sm:$0xff]
        %v1986 = vld [vmem:[#allocation3 + $0x48] sm:$0xff]
        %v1987 = vld [vmem:[#allocation3 + $0x50] sm:$0xff]
        %v1988 = vld [vmem:[#allocation3 + $0x58] sm:$0xff]
        %v1989 = vld [vmem:[#allocation3 + $0x60] sm:$0xff]
        %v1990 = vld [vmem:[#allocation3 + $0x68] sm:$0xff]
        %v1991 = vld [vmem:[#allocation3 + $0x70] sm:$0xff]
        %v1992 = vld [vmem:[#allocation3 + $0x78] sm:$0xff]
        %v1993 = vld [vmem:[%s2] sm:$0xf]
        %v1994 = vld [vmem:[%s2 + $0x4] sm:$0xf]
        %v1995 = vld [vmem:[%s2 + $0x8] sm:$0xf]
        %v1996 = vld [vmem:[%s2 + $0xc] sm:$0xf]
        %v1997 = vld [vmem:[%s2 + $0x10] sm:$0xf]
        %v1998 = vld [vmem:[%s2 + $0x14] sm:$0xf]
        %v1999 = vld [vmem:[%s2 + $0x18] sm:$0xf]
        %v2000 = vld [vmem:[%s2 + $0x1c] sm:$0xf]
        %v2001 = vld [vmem:[%s2 + $0x20] sm:$0xf]
        %v2002 = vld [vmem:[%s2 + $0x24] sm:$0xf]
        %v2003 = vld [vmem:[%s2 + $0x28] sm:$0xf]
        %v2004 = vld [vmem:[%s2 + $0x2c] sm:$0xf]
        %v2005 = vld [vmem:[%s2 + $0x30] sm:$0xf]
        %v2006 = vld [vmem:[%s2 + $0x34] sm:$0xf]
        %v2007 = vld [vmem:[%s2 + $0x38] sm:$0xf]
        %v2008 = vld [vmem:[%s2 + $0x3c] sm:$0xf]
        %v2009 = vld [vmem:[%s2 + $0x40] sm:$0xf]
        %v2010 = vld [vmem:[%s2 + $0x44] sm:$0xf]
        %v2011 = vld [vmem:[%s3] sm:$0x1]
        %v2013 = vlaneseq
        %v2014 = vshrl.u32 %v2013, 7
        %v2015 = vsub.s32 0, %v2014
        %v2016 = vrot.slane %v2011, %v2015
        %v2034 = vunpack.c.l.b16 %v1977
        %v2035 = vunpack.c.h.b16 %v1977
        %v2036 = vunpack.c.l.b16 %v1978
        %v2037 = vunpack.c.h.b16 %v1978
        %v2038 = vunpack.c.l.b16 %v1979
        %v2039 = vunpack.c.h.b16 %v1979
        %v2040 = vunpack.c.l.b16 %v1980
        %v2041 = vunpack.c.h.b16 %v1980
        %v2042 = vunpack.c.l.b16 %v1981
        %v2043 = vunpack.c.h.b16 %v1981
        %v2044 = vunpack.c.l.b16 %v1982
        %v2045 = vunpack.c.h.b16 %v1982
        %v2046 = vunpack.c.l.b16 %v1983
        %v2047 = vunpack.c.h.b16 %v1983
        %v2048 = vunpack.c.l.b16 %v1984
        %v2049 = vunpack.c.h.b16 %v1984
        %v2050 = vunpack.c.l.b16 %v1985
        %v2051 = vunpack.c.h.b16 %v1985
        %v2052 = vunpack.c.l.b16 %v1986
        %v2053 = vunpack.c.h.b16 %v1986
        %v2054 = vunpack.c.l.b16 %v1987
        %v2055 = vunpack.c.h.b16 %v1987
        %v2056 = vunpack.c.l.b16 %v1988
        %v2057 = vunpack.c.h.b16 %v1988
        %v2058 = vunpack.c.l.b16 %v1989
        %v2059 = vunpack.c.h.b16 %v1989
        %v2060 = vunpack.c.l.b16 %v1990
        %v2061 = vunpack.c.h.b16 %v1990
        %v2062 = vunpack.c.l.b16 %v1991
        %v2063 = vunpack.c.h.b16 %v1991
        %v2064 = vunpack.c.l.b16 %v1992
        %v2065 = vunpack.c.h.b16 %v1992
        %v2066 = vpack.c.b16 %v2036, %v2034
        %v2067 = vpack.c.b16 %v2037, %v2035
        %v2068 = vpack.c.b16 %v2040, %v2038
        %v2069 = vpack.c.b16 %v2041, %v2039
        %v2070 = vpack.c.b16 %v2044, %v2042
        %v2071 = vpack.c.b16 %v2045, %v2043
        %v2072 = vpack.c.b16 %v2048, %v2046
        %v2073 = vpack.c.b16 %v2049, %v2047
        %v2074 = vpack.c.b16 %v2052, %v2050
        %v2075 = vpack.c.b16 %v2053, %v2051
        %v2076 = vpack.c.b16 %v2056, %v2054
        %v2077 = vpack.c.b16 %v2057, %v2055
        %v2078 = vpack.c.b16 %v2060, %v2058
        %v2079 = vpack.c.b16 %v2061, %v2059
        %v2080 = vpack.c.b16 %v2064, %v2062
        %v2081 = vpack.c.b16 %v2065, %v2063
        %v2108 = vunpack.c.l.b16 %v1993
        %v2109 = vunpack.c.l.b16 %v1994
        %v2110 = vunpack.c.l.b16 %v1995
        %v2111 = vunpack.c.l.b16 %v1996
        %v2112 = vunpack.c.l.b16 %v1997
        %v2113 = vunpack.c.l.b16 %v1998
        %v2114 = vunpack.c.l.b16 %v1999
        %v2115 = vunpack.c.l.b16 %v2000
        %v2116 = vunpack.c.l.b16 %v2001
        %v2117 = vunpack.c.l.b16 %v2002
        %v2118 = vunpack.c.l.b16 %v2003
        %v2119 = vunpack.c.l.b16 %v2004
        %v2120 = vunpack.c.l.b16 %v2005
        %v2121 = vunpack.c.l.b16 %v2006
        %v2122 = vunpack.c.l.b16 %v2007
        %v2123 = vunpack.c.l.b16 %v2008
        %v2124 = vunpack.c.l.b16 %v2009
        %v2125 = vunpack.c.l.b16 %v2010
        %v2126 = vpack.c.b16 %v2109, %v2108
        %v2127 = vpack.c.b16 %v2111, %v2110
        %v2128 = vpack.c.b16 %v2113, %v2112
        %v2129 = vpack.c.b16 %v2115, %v2114
        %v2130 = vpack.c.b16 %v2117, %v2116
        %v2131 = vpack.c.b16 %v2119, %v2118
        %v2132 = vpack.c.b16 %v2121, %v2120
        %v2133 = vpack.c.b16 %v2123, %v2122
        %v2134 = vpack.c.b16 %v2125, %v2124
        %vm2144 = vcmask 130048
        %v2146 = vsel %vm2144, %v2067, 0
        %v2149 = vsel %vm2144, %v2069, 0
        %v2152 = vsel %vm2144, %v2071, 0
        %v2155 = vsel %vm2144, %v2073, 0
        %v2158 = vsel %vm2144, %v2075, 0
        %v2161 = vsel %vm2144, %v2077, 0
        %v2164 = vsel %vm2144, %v2079, 0
        %v2167 = vsel %vm2144, %v2081, 0
        %2169 = vmatprep.subr.bf16.mxu0 0
        %2170 = vmatpush1.bf16.msra.mxu0 %v2133
        %2171 = vmatprep.subr.bf16.mxu0 0
        %2172 = vmatpush1.bf16.msra.mxu0 %v2132
        %2173 = vmatprep.subr.bf16.mxu0 0
        %2174 = vmatpush1.bf16.msra.mxu0 %v2131
        %2175 = vmatprep.subr.bf16.mxu0 0
        %2176 = vmatpush1.bf16.msra.mxu0 %v2130
        %2177 = vmatprep.subr.bf16.mxu0 0
        %2178 = vmatpush1.bf16.msra.mxu0 %v2129
        %2179 = vmatprep.subr.bf16.mxu0 0
        %2180 = vmatpush1.bf16.msra.mxu0 %v2128
        %2181 = vmatprep.subr.bf16.mxu0 0
        %2182 = vmatpush1.bf16.msra.mxu0 %v2127
        %2183 = vmatprep.subr.bf16.mxu0 0
        %2184 = vmatpush1.bf16.msra.mxu0 %v2126
        %2185 = vmatprep.subr.bf16.mxu0 0
        %2186 = vmatpush2.bf16.msra.mxu0 0
        %2187 = vmatprep.subr.bf16.mxu0 0
        %2188 = vmatpush2.bf16.msra.mxu0 0
        %2189 = vmatprep.subr.bf16.mxu0 0
        %2190 = vmatpush2.bf16.msra.mxu0 0
        %2191 = vmatprep.subr.bf16.mxu0 0
        %2192 = vmatpush2.bf16.msra.mxu0 0
        %2193 = vmatprep.subr.bf16.mxu0 0
        %2194 = vmatpush2.bf16.msra.mxu0 0
        %2195 = vmatprep.subr.bf16.mxu0 0
        %2196 = vmatpush2.bf16.msra.mxu0 0
        %2197 = vmatprep.subr.bf16.mxu0 0
        %2198 = vmatpush2.bf16.msra.mxu0 0
        %2199 = vmatprep.subr.bf16.mxu0 0
        %2200 = vmatpush2.bf16.msra.mxu0 %v2134
        %2201 = vmatprep.mubr.bf16.mxu0 %v2146
        %2202 = vmatmul.mubr.bf16.gmra.mxu0 %v2066
        %v2203 = vpop.f32.mrf.mxu0
        %v2204 = vadd.f32 %v2016, %v2203
        %v2205 = vpop.f32.mrf.mxu0
        %v2206 = vpop.f32.mrf.mxu0
        %v2207 = vadd.f32 %v2016, %v2206
        %v2208 = vpop.f32.mrf.mxu0
        %2209 = vmatprep.mubr.bf16.mxu0 %v2149
        %2210 = vmatmul.mubr.bf16.gmra.mxu0 %v2068
        %v2211 = vpop.f32.mrf.mxu0
        %v2212 = vadd.f32 %v2016, %v2211
        %v2213 = vpop.f32.mrf.mxu0
        %v2214 = vpop.f32.mrf.mxu0
        %v2215 = vadd.f32 %v2016, %v2214
        %v2216 = vpop.f32.mrf.mxu0
        %2217 = vmatprep.mubr.bf16.mxu0 %v2152
        %2218 = vmatmul.mubr.bf16.gmra.mxu0 %v2070
        %v2219 = vpop.f32.mrf.mxu0
        %v2220 = vadd.f32 %v2016, %v2219
        %v2221 = vpop.f32.mrf.mxu0
        %v2222 = vpop.f32.mrf.mxu0
        %v2223 = vadd.f32 %v2016, %v2222
        %v2224 = vpop.f32.mrf.mxu0
        %2225 = vmatprep.mubr.bf16.mxu0 %v2155
        %2226 = vmatmul.mubr.bf16.gmra.mxu0 %v2072
        %v2227 = vpop.f32.mrf.mxu0
        %v2228 = vadd.f32 %v2016, %v2227
        %v2229 = vpop.f32.mrf.mxu0
        %v2230 = vpop.f32.mrf.mxu0
        %v2231 = vadd.f32 %v2016, %v2230
        %v2232 = vpop.f32.mrf.mxu0
        %2233 = vmatprep.mubr.bf16.mxu0 %v2158
        %2234 = vmatmul.mubr.bf16.gmra.mxu0 %v2074
        %v2235 = vpop.f32.mrf.mxu0
        %v2236 = vadd.f32 %v2016, %v2235
        %v2237 = vpop.f32.mrf.mxu0
        %v2238 = vpop.f32.mrf.mxu0
        %v2239 = vadd.f32 %v2016, %v2238
        %v2240 = vpop.f32.mrf.mxu0
        %2241 = vmatprep.mubr.bf16.mxu0 %v2161
        %2242 = vmatmul.mubr.bf16.gmra.mxu0 %v2076
        %v2243 = vpop.f32.mrf.mxu0
        %v2244 = vadd.f32 %v2016, %v2243
        %v2245 = vpop.f32.mrf.mxu0
        %v2246 = vpop.f32.mrf.mxu0
        %v2247 = vadd.f32 %v2016, %v2246
        %v2248 = vpop.f32.mrf.mxu0
        %2249 = vmatprep.mubr.bf16.mxu0 %v2164
        %2250 = vmatmul.mubr.bf16.gmra.mxu0 %v2078
        %v2251 = vpop.f32.mrf.mxu0
        %v2252 = vadd.f32 %v2016, %v2251
        %v2253 = vpop.f32.mrf.mxu0
        %v2254 = vpop.f32.mrf.mxu0
        %v2255 = vadd.f32 %v2016, %v2254
        %v2256 = vpop.f32.mrf.mxu0
        %2257 = vmatprep.mubr.bf16.mxu0 %v2167
        %2258 = vmatmul.mubr.bf16.gmra.mxu0 %v2080
        %v2259 = vpop.f32.mrf.mxu0
        %v2260 = vadd.f32 %v2016, %v2259
        %v2261 = vpop.f32.mrf.mxu0
        %v2262 = vpop.f32.mrf.mxu0
        %v2263 = vadd.f32 %v2016, %v2262
        %v2264 = vpop.f32.mrf.mxu0
        %2265 = vdwg.mxu0
        %v2266 = vmax.f32 %v2204, 0.0
        %v2267 = vmax.f32 %v2207, 0.0
        %v2268 = vmax.f32 %v2212, 0.0
        %v2269 = vmax.f32 %v2215, 0.0
        %v2270 = vmax.f32 %v2220, 0.0
        %v2271 = vmax.f32 %v2223, 0.0
        %v2272 = vmax.f32 %v2228, 0.0
        %v2273 = vmax.f32 %v2231, 0.0
        %v2274 = vmax.f32 %v2236, 0.0
        %v2275 = vmax.f32 %v2239, 0.0
        %v2276 = vmax.f32 %v2244, 0.0
        %v2277 = vmax.f32 %v2247, 0.0
        %v2278 = vmax.f32 %v2252, 0.0
        %v2279 = vmax.f32 %v2255, 0.0
        %v2280 = vmax.f32 %v2260, 0.0
        %v2281 = vmax.f32 %v2263, 0.0
        %v2282 = vpack.c.bf16 %v2267, %v2266
        %v2283 = vpack.c.bf16 %v2269, %v2268
        %v2284 = vpack.c.bf16 %v2271, %v2270
        %v2285 = vpack.c.bf16 %v2273, %v2272
        %v2286 = vpack.c.bf16 %v2275, %v2274
        %v2287 = vpack.c.bf16 %v2277, %v2276
        %v2288 = vpack.c.bf16 %v2279, %v2278
        %v2289 = vpack.c.bf16 %v2281, %v2280
        %v2290 = vld [vmem:[%s4] sm:$0xf]
        %v2291 = vld [vmem:[%s4 + $0x4] sm:$0xf]
        %v2292 = vld [vmem:[%s4 + $0x8] sm:$0xf]
        %v2293 = vld [vmem:[%s4 + $0xc] sm:$0xf]
        %v2294 = vld [vmem:[%s5] sm:$0x1]
        %v2296 = vlaneseq
        %v2297 = vshrl.u32 %v2296, 7
        %v2298 = vsub.s32 0, %v2297
        %v2299 = vrot.slane %v2294, %v2298
        %v2305 = vunpack.c.l.b16 %v2290
        %v2306 = vunpack.c.l.b16 %v2291
        %v2307 = vunpack.c.l.b16 %v2292
        %v2308 = vunpack.c.l.b16 %v2293
        %v2309 = vpack.c.b16 %v2306, %v2305
        %v2310 = vpack.c.b16 %v2308, %v2307
        %vm2313 = vcmask 261120
        %v2315 = vsel %vm2313, %v2282, 0
        %v2318 = vsel %vm2313, %v2283, 0
        %v2321 = vsel %vm2313, %v2284, 0
        %v2324 = vsel %vm2313, %v2285, 0
        %v2327 = vsel %vm2313, %v2286, 0
        %v2330 = vsel %vm2313, %v2287, 0
        %v2333 = vsel %vm2313, %v2288, 0
        %v2336 = vsel %vm2313, %v2289, 0
        %2338 = vmatprep.subr.bf16.mxu0 0
        %2339 = vmatpush1.bf16.msra.mxu0 0
        %2340 = vmatprep.subr.bf16.mxu0 0
        %2341 = vmatpush1.bf16.msra.mxu0 0
        %2342 = vmatprep.subr.bf16.mxu0 0
        %2343 = vmatpush1.bf16.msra.mxu0 0
        %2344 = vmatprep.subr.bf16.mxu0 0
        %2345 = vmatpush1.bf16.msra.mxu0 0
        %2346 = vmatprep.subr.bf16.mxu0 0
        %2347 = vmatpush1.bf16.msra.mxu0 0
        %2348 = vmatprep.subr.bf16.mxu0 0
        %2349 = vmatpush1.bf16.msra.mxu0 0
        %2350 = vmatprep.subr.bf16.mxu0 0
        %2351 = vmatpush1.bf16.msra.mxu0 %v2310
        %2352 = vmatprep.subr.bf16.mxu0 0
        %2353 = vmatpush1.bf16.msra.mxu0 %v2309
        %2354 = vmatprep.subr.bf16.mxu0 0
        %2355 = vmatpush2.bf16.msra.mxu0 0
        %2356 = vmatprep.subr.bf16.mxu0 0
        %2357 = vmatpush2.bf16.msra.mxu0 0
        %2358 = vmatprep.subr.bf16.mxu0 0
        %2359 = vmatpush2.bf16.msra.mxu0 0
        %2360 = vmatprep.subr.bf16.mxu0 0
        %2361 = vmatpush2.bf16.msra.mxu0 0
        %2362 = vmatprep.subr.bf16.mxu0 0
        %2363 = vmatpush2.bf16.msra.mxu0 0
        %2364 = vmatprep.subr.bf16.mxu0 0
        %2365 = vmatpush2.bf16.msra.mxu0 0
        %2366 = vmatprep.subr.bf16.mxu0 0
        %2367 = vmatpush2.bf16.msra.mxu0 0
        %2368 = vmatprep.subr.bf16.mxu0 0
        %2369 = vmatpush2.bf16.msra.mxu0 0
        %2370 = vmatprep.mubr.bf16.mxu0 0
        %2371 = vmatmul.mubr.bf16.gmra.mxu0 %v2315
        %v2372 = vpop.f32.mrf.mxu0
        %v2373 = vadd.f32 %v2299, %v2372
        %v2374 = vpop.f32.mrf.mxu0
        %v2375 = vpop.f32.mrf.mxu0
        %v2376 = vadd.f32 %v2299, %v2375
        %v2377 = vpop.f32.mrf.mxu0
        %2378 = vmatprep.mubr.bf16.mxu0 0
        %2379 = vmatmul.mubr.bf16.gmra.mxu0 %v2318
        %v2380 = vpop.f32.mrf.mxu0
        %v2381 = vadd.f32 %v2299, %v2380
        %v2382 = vpop.f32.mrf.mxu0
        %v2383 = vpop.f32.mrf.mxu0
        %v2384 = vadd.f32 %v2299, %v2383
        %v2385 = vpop.f32.mrf.mxu0
        %2386 = vmatprep.mubr.bf16.mxu0 0
        %2387 = vmatmul.mubr.bf16.gmra.mxu0 %v2321
        %v2388 = vpop.f32.mrf.mxu0
        %v2389 = vadd.f32 %v2299, %v2388
        %v2390 = vpop.f32.mrf.mxu0
        %v2391 = vpop.f32.mrf.mxu0
        %v2392 = vadd.f32 %v2299, %v2391
        %v2393 = vpop.f32.mrf.mxu0
        %2394 = vmatprep.mubr.bf16.mxu0 0
        %2395 = vmatmul.mubr.bf16.gmra.mxu0 %v2324
        %v2396 = vpop.f32.mrf.mxu0
        %v2397 = vadd.f32 %v2299, %v2396
        %v2398 = vpop.f32.mrf.mxu0
        %v2399 = vpop.f32.mrf.mxu0
        %v2400 = vadd.f32 %v2299, %v2399
        %v2401 = vpop.f32.mrf.mxu0
        %2402 = vmatprep.mubr.bf16.mxu0 0
        %2403 = vmatmul.mubr.bf16.gmra.mxu0 %v2327
        %v2404 = vpop.f32.mrf.mxu0
        %v2405 = vadd.f32 %v2299, %v2404
        %v2406 = vpop.f32.mrf.mxu0
        %v2407 = vpop.f32.mrf.mxu0
        %v2408 = vadd.f32 %v2299, %v2407
        %v2409 = vpop.f32.mrf.mxu0
        %2410 = vmatprep.mubr.bf16.mxu0 0
        %2411 = vmatmul.mubr.bf16.gmra.mxu0 %v2330
        %v2412 = vpop.f32.mrf.mxu0
        %v2413 = vadd.f32 %v2299, %v2412
        %v2414 = vpop.f32.mrf.mxu0
        %v2415 = vpop.f32.mrf.mxu0
        %v2416 = vadd.f32 %v2299, %v2415
        %v2417 = vpop.f32.mrf.mxu0
        %2418 = vmatprep.mubr.bf16.mxu0 0
        %2419 = vmatmul.mubr.bf16.gmra.mxu0 %v2333
        %v2420 = vpop.f32.mrf.mxu0
        %v2421 = vadd.f32 %v2299, %v2420
        %v2422 = vpop.f32.mrf.mxu0
        %v2423 = vpop.f32.mrf.mxu0
        %v2424 = vadd.f32 %v2299, %v2423
        %v2425 = vpop.f32.mrf.mxu0
        %2426 = vmatprep.mubr.bf16.mxu0 0
        %2427 = vmatmul.mubr.bf16.gmra.mxu0 %v2336
        %v2428 = vpop.f32.mrf.mxu0
        %v2429 = vadd.f32 %v2299, %v2428
        %v2430 = vpop.f32.mrf.mxu0
        %v2431 = vpop.f32.mrf.mxu0
        %v2432 = vadd.f32 %v2299, %v2431
        %v2433 = vpop.f32.mrf.mxu0
        %2434 = vdwg.mxu0
        %2435 = vst [vmem:[%s324] sm:$0xff] %v2373
        %2436 = vst [vmem:[%s324 + $0x8] sm:$0xff] %v2376
        %2437 = vst [vmem:[%s324 + $0x10] sm:$0xff] %v2381
        %2438 = vst [vmem:[%s324 + $0x18] sm:$0xff] %v2384
        %2439 = vst [vmem:[%s324 + $0x20] sm:$0xff] %v2389
        %2440 = vst [vmem:[%s324 + $0x28] sm:$0xff] %v2392
        %2441 = vst [vmem:[%s324 + $0x30] sm:$0xff] %v2397
        %2442 = vst [vmem:[%s324 + $0x38] sm:$0xff] %v2400
        %2443 = vst [vmem:[%s324 + $0x40] sm:$0xff] %v2405
        %2444 = vst [vmem:[%s324 + $0x48] sm:$0xff] %v2408
        %2445 = vst [vmem:[%s324 + $0x50] sm:$0xff] %v2413
        %2446 = vst [vmem:[%s324 + $0x58] sm:$0xff] %v2416
        %2447 = vst [vmem:[%s324 + $0x60] sm:$0xff] %v2421
        %2448 = vst [vmem:[%s324 + $0x68] sm:$0xff] %v2424
        %2449 = vst [vmem:[%s324 + $0x70] sm:$0xff] %v2429
        %2450 = vst [vmem:[%s324 + $0x78] sm:$0xff] %v2432
        %s2451 = sand.u32 %s186, 1
        %s2452 = scalar_lea.sflag [#allocation5], %s2451
        %s2453 = sand.u32 %s186, 1
        %s2454 = smul.addr %s2453, 128
        %s2455 = scalar_lea.vmem [#allocation4], %s2454
        // Predicated region
        $region45: #{tpu_custom_call.1} parent=43 // pred_check
          %p2456 = pneg %p196
        $region46: #{tpu_custom_call.1} parent=43 // pred_check_branch
          %2458 = sbr.rel (%p2456) target = $region48
        $region47: #{tpu_custom_call.1} parent=43 // pred_region
          %s2459 = smul.u32 16, %s25
          %s2461 = ssub.s32 2048, 2048
          %2462 = vsyncadd %s2452, %s2461
          %s2463 = smul.addr %s24, 32
          %s2464 = sadd.s32 %s2459, %s2463
          %s2465 = smul.addr %s2464, 128
          %s2466 = scalar_lea.hbm %s6, %s2465
          %s2467 = sshll.u32 %s2455, 4
          %s2468 = int_to_ptr.vmem [resolvable:$true] %s2467
          %2473 = dma.vmem_to_hbm [thread:$0]  %s2468, 2048, %s2466, %s2452, 128, 128, 8
        $region48: #{tpu_custom_call.1} parent=43 // pred_fallthru
          _
      $region44: #{tpu_custom_call.1} parent=5 // pred_fallthru
        _
      %p2474 = scmp.le.s32.totalorder 2, %s15
      // Predicated region
      $region49: #{tpu_custom_call.1} parent=5 // pred_check
        %p2475 = pneg %p2474
      $region50: #{tpu_custom_call.1} parent=5 // pred_check_branch
        %2477 = sbr.rel (%p2475) target = $region52
      $region51: #{tpu_custom_call.1} parent=5 // pred_region
        %s2478 = ssub.s32 %s15, 2
        // Predicated region
        $region53: #{tpu_custom_call.1} parent=51 // pred_check
          %p2479 = pneg %p202
        $region54: #{tpu_custom_call.1} parent=51 // pred_check_branch
          %2481 = sbr.rel (%p2479) target = $region56
        $region55: #{tpu_custom_call.1} parent=51 // pred_region
          %s2482 = sand.u32 %s187, 1
          %s2483 = scalar_lea.sflag [#allocation5], %s2482
          %s2484 = sand.u32 %s187, 1
          %s2485 = smul.addr %s2484, 128
          %s2486 = scalar_lea.vmem [#allocation4], %s2485
          %2487 = dma.done %s2483, 2048
        $region56: #{tpu_custom_call.1} parent=51 // pred_fallthru
          _
      $region52: #{tpu_custom_call.1} parent=5 // pred_fallthru
        _
    $region6: #{tpu_custom_call.1} parent=1 // loop_footer
      %s19 = sadd.s32 1, %s15
    $region7: #{tpu_custom_call.1} parent=1 // loop_footer_branch
      %14 = sbr.rel target = $region3
    $region8: #{tpu_custom_call.1} parent=1 // loop_exit
      _
    %2488 = vsyncpa [#allocation5], 1
    %s2489 = scalar_lea.sflag [#allocation5], 1
    %2490 = vsyncpa %s2489, 1

// kernel: tpu_custom_call.1
$region0: #{tpu_custom_call.1}
  #allocation0 [shape = 'u32[]', space=smem, size = 0x4, offset = 0x4, fixed_abs, tag = 'smem constant byte address 0x4 - core index']
  #allocation1 [shape = 'u32[144,128]{1,0:T(1,128)}', space=vmem, size = 0x12000, scoped, tag = 'internal scratch']
  #allocation2 [shape = 'bf16[10,18,16]{2,1,0:T(8,128)(2,1)}', space=vmem, size = 0xf000, scoped, tag = 'scratch operand']
  #allocation3 [shape = 'bf16[128,144]{1,0:T(8,128)(2,1)}', space=vmem, size = 0x10000, scoped, tag = 'scratch operand']
  %s0 = inlined_call_operand.vmem [shape: bf16[2,18,18,16], index: 0, kind: input, shape index: {}]
  %s1 = inlined_call_operand.vmem [shape: bf16[2,18,18,16], index: 1, kind: input, shape index: {}]
  %s2 = inlined_call_operand.vmem [shape: bf16[144,32], index: 2, kind: input, shape index: {}]
  %s3 = inlined_call_operand.vmem [shape: f32[1,32], index: 3, kind: input, shape index: {}]
  %s4 = inlined_call_operand.vmem [shape: bf16[32,128], index: 4, kind: input, shape index: {}]
  %s5 = inlined_call_operand.vmem [shape: f32[1,128], index: 5, kind: input, shape index: {}]
  %s6 = inlined_call_operand.hbm [shape: f32[2,256,128], index: 6, kind: output, shape index: {}]
  %s7 = sld [smem:[#allocation0]]
  $region57: #{tpu_custom_call.1} parent=0
    _
  %s9 = ssub.s32 1, %s7
  %s10 = scalar_select 0, %s9, %s7
  $region1: #{tpu_custom_call.1} parent=0
    #allocation4 [shape = 'u8[131072]{0}', space=vmem, size = 0x20000, scoped, tag = 'output window, operand 0']
    #allocation5 [shape = 's32[2]{0}', space=sflag, size = 0x8, scoped, tag = 'scoped memory for tpu_custom_call.1']
    %11 = vsyncpa [#allocation5], 0
    %s12 = scalar_lea.sflag [#allocation5], 1
    %13 = vsyncpa %s12, 0
    loop: start=0, step=1, limit=6
    $region2: #{tpu_custom_call.1} parent=1 // loop_pre_header
      _
    $region3: #{tpu_custom_call.1} parent=1 // loop_header
      %s15 = sphi 0, %s19
      %p16 = scmp.ge.s32.totalorder %s15, 6
      %s22 = sphi 0, %s34
      %s23 = sphi 0, %s30
      %s24 = sphi 0, %s22
      %s25 = sphi 0, %s23
      %s26 = sphi 0, %s24
      %s27 = sphi 0, %s25
      %s39 = sphi 0, %s41
      %s42 = sphi 0, %s39
      %s43 = sphi 0, %s42
      %s59 = sphi 0, %s43
      %s71 = sphi 0, %s73
      %s74 = sphi 0, %s71
      %s75 = sphi 0, %s74
      %s91 = sphi 0, %s75
      %s95 = sphi 0, %s95
      %s97 = sphi 0, %s95
      %s98 = sphi 0, %s97
      %s112 = sphi 0, %s98
      %s116 = sphi 0, %s116
      %s118 = sphi 0, %s116
      %s119 = sphi 0, %s118
      %s133 = sphi 0, %s119
      %s137 = sphi 0, %s137
      %s139 = sphi 0, %s137
      %s140 = sphi 0, %s139
      %s154 = sphi 0, %s140
      %s158 = sphi 0, %s158
      %s160 = sphi 0, %s158
      %s161 = sphi 0, %s160
      %s175 = sphi 0, %s161
      %s183 = sphi 0, %s185
      %s186 = sphi 0, %s183
      %s187 = sphi 0, %s186
      %s203 = sphi 0, %s187
    $region4: #{tpu_custom_call.1} parent=1 // loop_header_branch
      %18 = sbr.rel (%p16) target = $region8
    $region5: #{tpu_custom_call.1} parent=1 // loop_body
      %s20 = ssub.s32 %s15, 1
      %s21 = ssub.s32 %s15, 2
      %s28 = sadd.s32 1, %s23
      %p29 = scmp.ge.s32.totalorder %s28, 2
      %s30 = scalar_select %p29, 0, %s28
      %s31 = sadd.s32 1, %s22
      %s32 = scalar_select %p29, %s31, %s22
      %p33 = scmp.ge.s32.totalorder %s32, 2
      %s34 = scalar_select %p33, 0, %s32
      %s35 = ssub.s32 %s22, %s34
      %s36 = ssub.s32 %s23, %s30
      %s37 = sor.u32 %s35, %s36
      %p38 = scmp.eq.s32.totalorder %s37, 0
      %s40 = sadd.s32 %s39, 1
      %s41 = scalar_select %p38, %s39, %s40
      %p44 = pneg %p38
      %p45 = scmp.eq.s32.totalorder %s15, 3
      %p46 = por %p44, %p45
      %p47 = scmp.ne.s32.totalorder %s39, %s42
      %p48 = scmp.eq.s32.totalorder %s15, 0
      %p49 = por %p47, %p48
      %p50 = scmp.ne.s32.totalorder %s39, %s42
      %p51 = scmp.eq.s32.totalorder %s20, 3
      %p52 = por %p50, %p51
      %p53 = scmp.ne.s32.totalorder %s42, %s43
      %p54 = scmp.eq.s32.totalorder %s20, 0
      %p55 = por %p53, %p54
      %p56 = scmp.ne.s32.totalorder %s42, %s43
      %p57 = scmp.eq.s32.totalorder %s21, 3
      %p58 = por %p56, %p57
      %p60 = scmp.ne.s32.totalorder %s43, %s59
      %p61 = scmp.eq.s32.totalorder %s21, 0
      %p62 = por %p60, %p61
      %s63 = smul.u32 %s23, 4
      %s64 = sadd.s32 %s63, 4
      %s65 = smul.u32 %s30, 4
      %s66 = sadd.s32 %s65, 4
      %s67 = ssub.s32 %s22, %s34
      %s68 = ssub.s32 %s64, %s66
      %s69 = sor.u32 %s67, %s68
      %p70 = scmp.eq.s32.totalorder %s69, 0
      %s72 = sadd.s32 %s71, 1
      %s73 = scalar_select %p70, %s71, %s72
      %p76 = pneg %p70
      %p77 = scmp.eq.s32.totalorder %s15, 3
      %p78 = por %p76, %p77
      %p79 = scmp.ne.s32.totalorder %s71, %s74
      %p80 = scmp.eq.s32.totalorder %s15, 0
      %p81 = por %p79, %p80
      %p82 = scmp.ne.s32.totalorder %s71, %s74
      %p83 = scmp.eq.s32.totalorder %s20, 3
      %p84 = por %p82, %p83
      %p85 = scmp.ne.s32.totalorder %s74, %s75
      %p86 = scmp.eq.s32.totalorder %s20, 0
      %p87 = por %p85, %p86
      %p88 = scmp.ne.s32.totalorder %s74, %s75
      %p89 = scmp.eq.s32.totalorder %s21, 3
      %p90 = por %p88, %p89
      %p92 = scmp.ne.s32.totalorder %s75, %s91
      %p93 = scmp.eq.s32.totalorder %s21, 0
      %p94 = por %p92, %p93
      %s96 = sadd.s32 %s95, 1
      %p99 = scmp.eq.s32.totalorder %s15, 3
      %p100 = scmp.ne.s32.totalorder %s95, %s97
      %p101 = scmp.eq.s32.totalorder %s15, 0
      %p102 = por %p100, %p101
      %p103 = scmp.ne.s32.totalorder %s95, %s97
      %p104 = scmp.eq.s32.totalorder %s20, 3
      %p105 = por %p103, %p104
      %p106 = scmp.ne.s32.totalorder %s97, %s98
      %p107 = scmp.eq.s32.totalorder %s20, 0
      %p108 = por %p106, %p107
      %p109 = scmp.ne.s32.totalorder %s97, %s98
      %p110 = scmp.eq.s32.totalorder %s21, 3
      %p111 = por %p109, %p110
      %p113 = scmp.ne.s32.totalorder %s98, %s112
      %p114 = scmp.eq.s32.totalorder %s21, 0
      %p115 = por %p113, %p114
      %s117 = sadd.s32 %s116, 1
      %p120 = scmp.eq.s32.totalorder %s15, 3
      %p121 = scmp.ne.s32.totalorder %s116, %s118
      %p122 = scmp.eq.s32.totalorder %s15, 0
      %p123 = por %p121, %p122
      %p124 = scmp.ne.s32.totalorder %s116, %s118
      %p125 = scmp.eq.s32.totalorder %s20, 3
      %p126 = por %p124, %p125
      %p127 = scmp.ne.s32.totalorder %s118, %s119
      %p128 = scmp.eq.s32.totalorder %s20, 0
      %p129 = por %p127, %p128
      %p130 = scmp.ne.s32.totalorder %s118, %s119
      %p131 = scmp.eq.s32.totalorder %s21, 3
      %p132 = por %p130, %p131
      %p134 = scmp.ne.s32.totalorder %s119, %s133
      %p135 = scmp.eq.s32.totalorder %s21, 0
      %p136 = por %p134, %p135
      %s138 = sadd.s32 %s137, 1
      %p141 = scmp.eq.s32.totalorder %s15, 3
      %p142 = scmp.ne.s32.totalorder %s137, %s139
      %p143 = scmp.eq.s32.totalorder %s15, 0
      %p144 = por %p142, %p143
      %p145 = scmp.ne.s32.totalorder %s137, %s139
      %p146 = scmp.eq.s32.totalorder %s20, 3
      %p147 = por %p145, %p146
      %p148 = scmp.ne.s32.totalorder %s139, %s140
      %p149 = scmp.eq.s32.totalorder %s20, 0
      %p150 = por %p148, %p149
      %p151 = scmp.ne.s32.totalorder %s139, %s140
      %p152 = scmp.eq.s32.totalorder %s21, 3
      %p153 = por %p151, %p152
      %p155 = scmp.ne.s32.totalorder %s140, %s154
      %p156 = scmp.eq.s32.totalorder %s21, 0
      %p157 = por %p155, %p156
      %s159 = sadd.s32 %s158, 1
      %p162 = scmp.eq.s32.totalorder %s15, 3
      %p163 = scmp.ne.s32.totalorder %s158, %s160
      %p164 = scmp.eq.s32.totalorder %s15, 0
      %p165 = por %p163, %p164
      %p166 = scmp.ne.s32.totalorder %s158, %s160
      %p167 = scmp.eq.s32.totalorder %s20, 3
      %p168 = por %p166, %p167
      %p169 = scmp.ne.s32.totalorder %s160, %s161
      %p170 = scmp.eq.s32.totalorder %s20, 0
      %p171 = por %p169, %p170
      %p172 = scmp.ne.s32.totalorder %s160, %s161
      %p173 = scmp.eq.s32.totalorder %s21, 3
      %p174 = por %p172, %p173
      %p176 = scmp.ne.s32.totalorder %s161, %s175
      %p177 = scmp.eq.s32.totalorder %s21, 0
      %p178 = por %p176, %p177
      %s179 = ssub.s32 %s22, %s34
      %s180 = ssub.s32 %s23, %s30
      %s181 = sor.u32 %s179, %s180
      %p182 = scmp.eq.s32.totalorder %s181, 0
      %s184 = sadd.s32 %s183, 1
      %s185 = scalar_select %p182, %s183, %s184
      %p188 = pneg %p182
      %p189 = scmp.eq.s32.totalorder %s15, 3
      %p190 = por %p188, %p189
      %p191 = scmp.ne.s32.totalorder %s183, %s186
      %p192 = scmp.eq.s32.totalorder %s15, 0
      %p193 = por %p191, %p192
      %p194 = scmp.ne.s32.totalorder %s183, %s186
      %p195 = scmp.eq.s32.totalorder %s20, 3
      %p196 = por %p194, %p195
      %p197 = scmp.ne.s32.totalorder %s186, %s187
      %p198 = scmp.eq.s32.totalorder %s20, 0
      %p199 = por %p197, %p198
      %p200 = scmp.ne.s32.totalorder %s186, %s187
      %p201 = scmp.eq.s32.totalorder %s21, 3
      %p202 = por %p200, %p201
      %p204 = scmp.ne.s32.totalorder %s187, %s203
      %p205 = scmp.eq.s32.totalorder %s21, 0
      %p206 = por %p204, %p205
      %p207 = scmp.le.s32.totalorder 1, %s15
      %p208 = scmp.lt.s32.totalorder %s15, 5
      %p209 = pnand %p207, %p208
      %p210 = pneg %p209
      // Predicated region
      $region9: #{tpu_custom_call.1} parent=5 // pred_check
        _
      $region10: #{tpu_custom_call.1} parent=5 // pred_check_branch
        %212 = sbr.rel (%p209) target = $region12
      $region11: #{tpu_custom_call.1} parent=5 // pred_region
        %s213 = ssub.s32 %s15, 1
        // Predicated region
        $region13: #{tpu_custom_call.1} parent=11 // pred_check
          %p214 = pneg %p108
        $region14: #{tpu_custom_call.1} parent=11 // pred_check_branch
          %216 = sbr.rel (%p214) target = $region16
        $region15: #{tpu_custom_call.1} parent=11 // pred_region
          _
        $region16: #{tpu_custom_call.1} parent=11 // pred_fallthru
          _
        // Predicated region
        $region17: #{tpu_custom_call.1} parent=11 // pred_check
          %p217 = pneg %p129
        $region18: #{tpu_custom_call.1} parent=11 // pred_check_branch
          %219 = sbr.rel (%p217) target = $region20
        $region19: #{tpu_custom_call.1} parent=11 // pred_region
          _
        $region20: #{tpu_custom_call.1} parent=11 // pred_fallthru
          _
        // Predicated region
        $region21: #{tpu_custom_call.1} parent=11 // pred_check
          %p220 = pneg %p150
        $region22: #{tpu_custom_call.1} parent=11 // pred_check_branch
          %222 = sbr.rel (%p220) target = $region24
        $region23: #{tpu_custom_call.1} parent=11 // pred_region
          _
        $region24: #{tpu_custom_call.1} parent=11 // pred_fallthru
          _
        // Predicated region
        $region25: #{tpu_custom_call.1} parent=11 // pred_check
          %p223 = pneg %p171
        $region26: #{tpu_custom_call.1} parent=11 // pred_check_branch
          %225 = sbr.rel (%p223) target = $region28
        $region27: #{tpu_custom_call.1} parent=11 // pred_region
          _
        $region28: #{tpu_custom_call.1} parent=11 // pred_fallthru
          _
      $region12: #{tpu_custom_call.1} parent=5 // pred_fallthru
        _
      %p226 = scmp.lt.s32.totalorder %s15, 4
      // Predicated region
      $region29: #{tpu_custom_call.1} parent=5 // pred_check
        %p227 = pneg %p226
      $region30: #{tpu_custom_call.1} parent=5 // pred_check_branch
        %229 = sbr.rel (%p227) target = $region32
      $region31: #{tpu_custom_call.1} parent=5 // pred_region
        // Predicated region
        $region33: #{tpu_custom_call.1} parent=31 // pred_check
          %p230 = pneg %p49
        $region34: #{tpu_custom_call.1} parent=31 // pred_check_branch
          %232 = sbr.rel (%p230) target = $region36
        $region35: #{tpu_custom_call.1} parent=31 // pred_region
          %s233 = smul.u32 8, %s23
          %s234 = ssub.s32 18, %s233
          %p235 = scmp.lt.s32.totalorder %s234, 8
          %s236 = scalar_select %p235, %s234, 8
          %s237 = smul.u32 64, %s236
          %s238 = smul.u32 %s237, 3
          %p239 = scmp.lt.s32.totalorder %s22, 1
          %s240 = scalar_select %p239, %s22, 1
          %p241 = scmp.lt.s32.totalorder %s233, 17
          %s242 = scalar_select %p241, %s233, 17
          %s243 = smul.addr %s242, 3
          %s244 = smul.addr %s240, 54
          %s245 = sadd.s32 %s243, %s244
          %s246 = smul.addr %s245, 4
          %s247 = scalar_lea.vmem %s0, %s246
          %s248 = smul.u32 8, %s23
          %s249 = ssub.s32 18, %s248
          %p250 = scmp.lt.s32.totalorder %s249, 8
          %s251 = scalar_select %p250, %s249, 8
          %s252 = smul.u32 64, %s251
          %s253 = smul.u32 %s252, 3
        $region36: #{tpu_custom_call.1} parent=31 // pred_fallthru
          _
        // Predicated region
        $region37: #{tpu_custom_call.1} parent=31 // pred_check
          %p254 = pneg %p81
        $region38: #{tpu_custom_call.1} parent=31 // pred_check_branch
          %256 = sbr.rel (%p254) target = $region40
        $region39: #{tpu_custom_call.1} parent=31 // pred_region
          %s257 = smul.u32 %s23, 4
          %s258 = sadd.s32 %s257, 4
          %s259 = smul.u32 2, %s258
          %p260 = scmp.lt.s32.totalorder %s22, 1
          %s261 = scalar_select %p260, %s22, 1
          %p262 = scmp.lt.s32.totalorder %s259, 17
          %s263 = scalar_select %p262, %s259, 17
          %s264 = smul.addr %s263, 3
          %s265 = smul.addr %s261, 54
          %s266 = sadd.s32 %s264, %s265
          %s267 = smul.addr %s266, 4
          %s268 = scalar_lea.vmem %s1, %s267
          %s269 = smul.u32 %s23, 4
          %s270 = sadd.s32 %s269, 4
          %s271 = smul.u32 2, %s270
        $region40: #{tpu_custom_call.1} parent=31 // pred_fallthru
          _
      $region32: #{tpu_custom_call.1} parent=5 // pred_fallthru
        _
      %p272 = scmp.le.s32.totalorder 1, %s15
      %p273 = scmp.lt.s32.totalorder %s15, 5
      %p274 = pnand %p272, %p273
      %p275 = pneg %p274
      // Predicated region
      $region41: #{tpu_custom_call.1} parent=5 // pred_check
        _
      $region42: #{tpu_custom_call.1} parent=5 // pred_check_branch
        %277 = sbr.rel (%p274) target = $region44
      $region43: #{tpu_custom_call.1} parent=5 // pred_region
        %s278 = ssub.s32 %s15, 1
        %s279 = smul.u32 8, %s25
        %s280 = ssub.s32 18, %s279
        %p281 = scmp.lt.s32.totalorder %s280, 8
        %s282 = scalar_select %p281, %s280, 8
        %s283 = smul.u32 64, %s282
        %s284 = smul.u32 %s283, 3
        %p285 = scmp.lt.s32.totalorder %s24, 1
        %s286 = scalar_select %p285, %s24, 1
        %p287 = scmp.lt.s32.totalorder %s279, 17
        %s288 = scalar_select %p287, %s279, 17
        %s289 = smul.addr %s288, 3
        %s290 = smul.addr %s286, 54
        %s291 = sadd.s32 %s289, %s290
        %s292 = smul.addr %s291, 4
        %s293 = scalar_lea.vmem %s0, %s292
        %p294 = pneg %p55
        %p295 = pneg %p52
        %s296 = smul.u32 %s25, 4
        %s297 = sadd.s32 %s296, 4
        %s298 = smul.u32 2, %s297
        %p299 = scmp.lt.s32.totalorder %s24, 1
        %s300 = scalar_select %p299, %s24, 1
        %p301 = scmp.lt.s32.totalorder %s298, 17
        %s302 = scalar_select %p301, %s298, 17
        %s303 = smul.addr %s302, 3
        %s304 = smul.addr %s300, 54
        %s305 = sadd.s32 %s303, %s304
        %s306 = smul.addr %s305, 4
        %s307 = scalar_lea.vmem %s1, %s306
        %p308 = pneg %p87
        %p309 = pneg %p84
        %p310 = pneg %p108
        %p311 = pneg %p105
        %p312 = pneg %p129
        %p313 = pneg %p126
        %p314 = pneg %p150
        %p315 = pneg %p147
        %p316 = pneg %p171
        %p317 = pneg %p168
        %p318 = pneg %p199
        %p319 = pneg %p196
        %s320 = sand.u32 %s186, 1
        %s321 = scalar_lea.sflag [#allocation5], %s320
        %s322 = sand.u32 %s186, 1
        %s323 = smul.addr %s322, 128
        %s324 = scalar_lea.vmem [#allocation4], %s323
        %s325 = smul.u32 8, %s25
        %s326 = ssub.s32 18, %s325
        %p327 = scmp.lt.s32.totalorder %s326, 8
        %s328 = scalar_select %p327, %s326, 8
        %s329 = smul.u32 64, %s328
        %s330 = smul.u32 %s329, 3
        %p331 = scmp.lt.s32.totalorder %s24, 1
        %s332 = scalar_select %p331, %s24, 1
        %p333 = scmp.lt.s32.totalorder %s325, 17
        %s334 = scalar_select %p333, %s325, 17
        %s335 = smul.addr %s334, 3
        %s336 = smul.addr %s332, 54
        %s337 = sadd.s32 %s335, %s336
        %s338 = smul.addr %s337, 4
        %s339 = scalar_lea.vmem %s0, %s338
        %s340 = smul.u32 8, %s25
        %s341 = ssub.s32 18, %s340
        %p342 = scmp.lt.s32.totalorder %s341, 8
        %s343 = scalar_select %p342, %s341, 8
        %s344 = smul.u32 64, %s343
        %s345 = smul.u32 %s344, 3
        %s346 = smul.u32 %s25, 4
        %s347 = sadd.s32 %s346, 4
        %s348 = smul.u32 2, %s347
        %p349 = scmp.lt.s32.totalorder %s24, 1
        %s350 = scalar_select %p349, %s24, 1
        %p351 = scmp.lt.s32.totalorder %s348, 17
        %s352 = scalar_select %p351, %s348, 17
        %s353 = smul.addr %s352, 3
        %s354 = smul.addr %s350, 54
        %s355 = sadd.s32 %s353, %s354
        %s356 = smul.addr %s355, 4
        %s357 = scalar_lea.vmem %s1, %s356
        %s358 = smul.u32 %s25, 4
        %s359 = sadd.s32 %s358, 4
        %s360 = smul.u32 2, %s359
        %s361 = smul.u32 16, %s25
        %v363 = vld [vmem:[%s339] sm:$0xf]
        %v364 = vld [vmem:[%s339 + $0x4] sm:$0xf]
        %v365 = vld [vmem:[%s339 + $0x8] sm:$0x1]
        %v366 = vld [vmem:[%s339 + $0xc] sm:$0xf]
        %v367 = vld [vmem:[%s339 + $0x10] sm:$0xf]
        %v368 = vld [vmem:[%s339 + $0x14] sm:$0x1]
        %v369 = vld [vmem:[%s339 + $0x18] sm:$0xf]
        %v370 = vld [vmem:[%s339 + $0x1c] sm:$0xf]
        %v371 = vld [vmem:[%s339 + $0x20] sm:$0x1]
        %v372 = vld [vmem:[%s339 + $0x24] sm:$0xf]
        %v373 = vld [vmem:[%s339 + $0x28] sm:$0xf]
        %v374 = vld [vmem:[%s339 + $0x2c] sm:$0x1]
        %v375 = vld [vmem:[%s339 + $0x30] sm:$0xf]
        %v376 = vld [vmem:[%s339 + $0x34] sm:$0xf]
        %v377 = vld [vmem:[%s339 + $0x38] sm:$0x1]
        %v378 = vld [vmem:[%s339 + $0x3c] sm:$0xf]
        %v379 = vld [vmem:[%s339 + $0x40] sm:$0xf]
        %v380 = vld [vmem:[%s339 + $0x44] sm:$0x1]
        %v381 = vld [vmem:[%s339 + $0x48] sm:$0xf]
        %v382 = vld [vmem:[%s339 + $0x4c] sm:$0xf]
        %v383 = vld [vmem:[%s339 + $0x50] sm:$0x1]
        %v384 = vld [vmem:[%s339 + $0x54] sm:$0xf]
        %v385 = vld [vmem:[%s339 + $0x58] sm:$0xf]
        %v386 = vld [vmem:[%s339 + $0x5c] sm:$0x1]
        %vm387 = vcmask 125952
        %388 = vst.msk [vmem:[#allocation2] sm:$0xf] %vm387, %v363
        %389 = vst.msk [vmem:[#allocation2 + $0x4] sm:$0xf] %vm387, %v364
        %vm390 = vcmask 122880
        %391 = vst.msk [vmem:[#allocation2 + $0x8] sm:$0x1] %vm390, %v365
        %392 = vst.msk [vmem:[#allocation2 + $0xc] sm:$0xf] %vm387, %v366
        %393 = vst.msk [vmem:[#allocation2 + $0x10] sm:$0xf] %vm387, %v367
        %394 = vst.msk [vmem:[#allocation2 + $0x14] sm:$0x1] %vm390, %v368
        %395 = vst.msk [vmem:[#allocation2 + $0x18] sm:$0xf] %vm387, %v369
        %396 = vst.msk [vmem:[#allocation2 + $0x1c] sm:$0xf] %vm387, %v370
        %397 = vst.msk [vmem:[#allocation2 + $0x20] sm:$0x1] %vm390, %v371
        %398 = vst.msk [vmem:[#allocation2 + $0x24] sm:$0xf] %vm387, %v372
        %399 = vst.msk [vmem:[#allocation2 + $0x28] sm:$0xf] %vm387, %v373
        %400 = vst.msk [vmem:[#allocation2 + $0x2c] sm:$0x1] %vm390, %v374
        %401 = vst.msk [vmem:[#allocation2 + $0x30] sm:$0xf] %vm387, %v375
        %402 = vst.msk [vmem:[#allocation2 + $0x34] sm:$0xf] %vm387, %v376
        %403 = vst.msk [vmem:[#allocation2 + $0x38] sm:$0x1] %vm390, %v377
        %404 = vst.msk [vmem:[#allocation2 + $0x3c] sm:$0xf] %vm387, %v378
        %405 = vst.msk [vmem:[#allocation2 + $0x40] sm:$0xf] %vm387, %v379
        %406 = vst.msk [vmem:[#allocation2 + $0x44] sm:$0x1] %vm390, %v380
        %407 = vst.msk [vmem:[#allocation2 + $0x48] sm:$0xf] %vm387, %v381
        %408 = vst.msk [vmem:[#allocation2 + $0x4c] sm:$0xf] %vm387, %v382
        %409 = vst.msk [vmem:[#allocation2 + $0x50] sm:$0x1] %vm390, %v383
        %410 = vst.msk [vmem:[#allocation2 + $0x54] sm:$0xf] %vm387, %v384
        %411 = vst.msk [vmem:[#allocation2 + $0x58] sm:$0xf] %vm387, %v385
        %412 = vst.msk [vmem:[#allocation2 + $0x5c] sm:$0x1] %vm390, %v386
        %v413 = vld [vmem:[%s357] sm:$0xf]
        %v414 = vld [vmem:[%s357 + $0x4] sm:$0xf]
        %v415 = vld [vmem:[%s357 + $0x8] sm:$0x1]
        %v416 = vld [vmem:[%s357 + $0xc] sm:$0xf]
        %v417 = vld [vmem:[%s357 + $0x10] sm:$0xf]
        %v418 = vld [vmem:[%s357 + $0x14] sm:$0x1]
        %s419 = scalar_lea.vmem [#allocation2], 96
        %420 = vst.msk [vmem:[%s419] sm:$0xf] %vm387, %v413
        %421 = vst.msk [vmem:[%s419 + $0x4] sm:$0xf] %vm387, %v414
        %422 = vst.msk [vmem:[%s419 + $0x8] sm:$0x1] %vm390, %v415
        %423 = vst.msk [vmem:[%s419 + $0xc] sm:$0xf] %vm387, %v416
        %424 = vst.msk [vmem:[%s419 + $0x10] sm:$0xf] %vm387, %v417
        %425 = vst.msk [vmem:[%s419 + $0x14] sm:$0x1] %vm390, %v418
        %v426 = vld [vmem:[#allocation2] sm:$0xf]
        %v427 = vld [vmem:[#allocation2 + $0x4] sm:$0xf]
        %v428 = vld [vmem:[#allocation2 + $0xc] sm:$0xf]
        %v429 = vld [vmem:[#allocation2 + $0x10] sm:$0xf]
        %v430 = vld [vmem:[#allocation2 + $0x18] sm:$0xf]
        %v431 = vld [vmem:[#allocation2 + $0x1c] sm:$0xf]
        %v432 = vld [vmem:[#allocation2 + $0x24] sm:$0xf]
        %v433 = vld [vmem:[#allocation2 + $0x28] sm:$0xf]
        %v434 = vld [vmem:[#allocation2 + $0x30] sm:$0xf]
        %v435 = vld [vmem:[#allocation2 + $0x34] sm:$0xf]
        %v436 = vld [vmem:[#allocation2 + $0x3c] sm:$0xf]
        %v437 = vld [vmem:[#allocation2 + $0x40] sm:$0xf]
        %v438 = vld [vmem:[#allocation2 + $0x48] sm:$0xf]
        %v439 = vld [vmem:[#allocation2 + $0x4c] sm:$0xf]
        %v440 = vld [vmem:[#allocation2 + $0x54] sm:$0xf]
        %v441 = vld [vmem:[#allocation2 + $0x58] sm:$0xf]
        %442 = vst.msk [vmem:[#allocation3] sm:$0xf] %vm387, %v426
        %443 = vst.msk [vmem:[#allocation3 + $0x8] sm:$0xf] %vm387, %v427
        %444 = vst.msk [vmem:[#allocation3 + $0x10] sm:$0xf] %vm387, %v428
        %445 = vst.msk [vmem:[#allocation3 + $0x18] sm:$0xf] %vm387, %v429
        %446 = vst.msk [vmem:[#allocation3 + $0x20] sm:$0xf] %vm387, %v430
        %447 = vst.msk [vmem:[#allocation3 + $0x28] sm:$0xf] %vm387, %v431
        %448 = vst.msk [vmem:[#allocation3 + $0x30] sm:$0xf] %vm387, %v432
        %449 = vst.msk [vmem:[#allocation3 + $0x38] sm:$0xf] %vm387, %v433
        %450 = vst.msk [vmem:[#allocation3 + $0x40] sm:$0xf] %vm387, %v434
        %451 = vst.msk [vmem:[#allocation3 + $0x48] sm:$0xf] %vm387, %v435
        %452 = vst.msk [vmem:[#allocation3 + $0x50] sm:$0xf] %vm387, %v436
        %453 = vst.msk [vmem:[#allocation3 + $0x58] sm:$0xf] %vm387, %v437
        %454 = vst.msk [vmem:[#allocation3 + $0x60] sm:$0xf] %vm387, %v438
        %455 = vst.msk [vmem:[#allocation3 + $0x68] sm:$0xf] %vm387, %v439
        %456 = vst.msk [vmem:[#allocation3 + $0x70] sm:$0xf] %vm387, %v440
        %457 = vst.msk [vmem:[#allocation3 + $0x78] sm:$0xf] %vm387, %v441
        %v458 = vld [vmem:[#allocation2] sm:$0xf]
        %v459 = vld [vmem:[#allocation2 + $0x4] sm:$0xf]
        %v460 = vld [vmem:[#allocation2 + $0x8] sm:$0x1]
        %v461 = vld [vmem:[#allocation2 + $0xc] sm:$0xf]
        %v462 = vld [vmem:[#allocation2 + $0x10] sm:$0xf]
        %v463 = vld [vmem:[#allocation2 + $0x14] sm:$0x1]
        %v464 = vld [vmem:[#allocation2 + $0x18] sm:$0xf]
        %v465 = vld [vmem:[#allocation2 + $0x1c] sm:$0xf]
        %v466 = vld [vmem:[#allocation2 + $0x20] sm:$0x1]
        %v467 = vld [vmem:[#allocation2 + $0x24] sm:$0xf]
        %v468 = vld [vmem:[#allocation2 + $0x28] sm:$0xf]
        %v469 = vld [vmem:[#allocation2 + $0x2c] sm:$0x1]
        %v470 = vld [vmem:[#allocation2 + $0x30] sm:$0xf]
        %v471 = vld [vmem:[#allocation2 + $0x34] sm:$0xf]
        %v472 = vld [vmem:[#allocation2 + $0x38] sm:$0x1]
        %v473 = vld [vmem:[#allocation2 + $0x3c] sm:$0xf]
        %v474 = vld [vmem:[#allocation2 + $0x40] sm:$0xf]
        %v475 = vld [vmem:[#allocation2 + $0x44] sm:$0x1]
        %v476 = vld [vmem:[#allocation2 + $0x48] sm:$0xf]
        %v477 = vld [vmem:[#allocation2 + $0x4c] sm:$0xf]
        %v478 = vld [vmem:[#allocation2 + $0x50] sm:$0x1]
        %v479 = vld [vmem:[#allocation2 + $0x54] sm:$0xf]
        %v480 = vld [vmem:[#allocation2 + $0x58] sm:$0xf]
        %v481 = vld [vmem:[#allocation2 + $0x5c] sm:$0x1]
        %vm482 = vsmask.f32 3328
        %vm483 = vsmask.f32 7440
        %vm484 = vmor %vm482, %vm483
        %v486 = vshrl.u32 %v458, 16
        %v488 = vrot.slane %v486, 4
        %v489 = vshll.u32 %v458, 16
        %v491 = vrot.slane %v489, 5
        %v492 = vor.u32 %v488, %v491
        %v493 = vrot.slane %v492, 4
        %v495 = vshll.u32 %v459, 16
        %v497 = vrot.slane %v495, 5
        %v498 = vsel %vm484, %v493, %v497
        %v499 = vshrl.u32 %v459, 16
        %v501 = vrot.slane %v499, 4
        %v502 = vor.u32 %v501, %v497
        %v503 = vrot.slane %v502, 4
        %v505 = vshll.u32 %v460, 16
        %v507 = vrot.slane %v505, 5
        %v508 = vsel %vm484, %v503, %v507
        %v510 = vshrl.u32 %v461, 16
        %v512 = vrot.slane %v510, 4
        %v513 = vshll.u32 %v461, 16
        %v515 = vrot.slane %v513, 5
        %v516 = vor.u32 %v512, %v515
        %v517 = vrot.slane %v516, 4
        %v519 = vshll.u32 %v462, 16
        %v521 = vrot.slane %v519, 5
        %v522 = vsel %vm484, %v517, %v521
        %v523 = vshrl.u32 %v462, 16
        %v525 = vrot.slane %v523, 4
        %v526 = vor.u32 %v525, %v521
        %v527 = vrot.slane %v526, 4
        %v529 = vshll.u32 %v463, 16
        %v531 = vrot.slane %v529, 5
        %v532 = vsel %vm484, %v527, %v531
        %v534 = vshrl.u32 %v464, 16
        %v536 = vrot.slane %v534, 4
        %v537 = vshll.u32 %v464, 16
        %v539 = vrot.slane %v537, 5
        %v540 = vor.u32 %v536, %v539
        %v541 = vrot.slane %v540, 4
        %v543 = vshll.u32 %v465, 16
        %v545 = vrot.slane %v543, 5
        %v546 = vsel %vm484, %v541, %v545
        %v547 = vshrl.u32 %v465, 16
        %v549 = vrot.slane %v547, 4
        %v550 = vor.u32 %v549, %v545
        %v551 = vrot.slane %v550, 4
        %v553 = vshll.u32 %v466, 16
        %v555 = vrot.slane %v553, 5
        %v556 = vsel %vm484, %v551, %v555
        %v558 = vshrl.u32 %v467, 16
        %v560 = vrot.slane %v558, 4
        %v561 = vshll.u32 %v467, 16
        %v563 = vrot.slane %v561, 5
        %v564 = vor.u32 %v560, %v563
        %v565 = vrot.slane %v564, 4
        %v567 = vshll.u32 %v468, 16
        %v569 = vrot.slane %v567, 5
        %v570 = vsel %vm484, %v565, %v569
        %v571 = vshrl.u32 %v468, 16
        %v573 = vrot.slane %v571, 4
        %v574 = vor.u32 %v573, %v569
        %v575 = vrot.slane %v574, 4
        %v577 = vshll.u32 %v469, 16
        %v579 = vrot.slane %v577, 5
        %v580 = vsel %vm484, %v575, %v579
        %v582 = vshrl.u32 %v470, 16
        %v584 = vrot.slane %v582, 4
        %v585 = vshll.u32 %v470, 16
        %v587 = vrot.slane %v585, 5
        %v588 = vor.u32 %v584, %v587
        %v589 = vrot.slane %v588, 4
        %v591 = vshll.u32 %v471, 16
        %v593 = vrot.slane %v591, 5
        %v594 = vsel %vm484, %v589, %v593
        %v595 = vshrl.u32 %v471, 16
        %v597 = vrot.slane %v595, 4
        %v598 = vor.u32 %v597, %v593
        %v599 = vrot.slane %v598, 4
        %v601 = vshll.u32 %v472, 16
        %v603 = vrot.slane %v601, 5
        %v604 = vsel %vm484, %v599, %v603
        %v606 = vshrl.u32 %v473, 16
        %v608 = vrot.slane %v606, 4
        %v609 = vshll.u32 %v473, 16
        %v611 = vrot.slane %v609, 5
        %v612 = vor.u32 %v608, %v611
        %v613 = vrot.slane %v612, 4
        %v615 = vshll.u32 %v474, 16
        %v617 = vrot.slane %v615, 5
        %v618 = vsel %vm484, %v613, %v617
        %v619 = vshrl.u32 %v474, 16
        %v621 = vrot.slane %v619, 4
        %v622 = vor.u32 %v621, %v617
        %v623 = vrot.slane %v622, 4
        %v625 = vshll.u32 %v475, 16
        %v627 = vrot.slane %v625, 5
        %v628 = vsel %vm484, %v623, %v627
        %v630 = vshrl.u32 %v476, 16
        %v632 = vrot.slane %v630, 4
        %v633 = vshll.u32 %v476, 16
        %v635 = vrot.slane %v633, 5
        %v636 = vor.u32 %v632, %v635
        %v637 = vrot.slane %v636, 4
        %v639 = vshll.u32 %v477, 16
        %v641 = vrot.slane %v639, 5
        %v642 = vsel %vm484, %v637, %v641
        %v643 = vshrl.u32 %v477, 16
        %v645 = vrot.slane %v643, 4
        %v646 = vor.u32 %v645, %v641
        %v647 = vrot.slane %v646, 4
        %v649 = vshll.u32 %v478, 16
        %v651 = vrot.slane %v649, 5
        %v652 = vsel %vm484, %v647, %v651
        %v654 = vshrl.u32 %v479, 16
        %v656 = vrot.slane %v654, 4
        %v657 = vshll.u32 %v479, 16
        %v659 = vrot.slane %v657, 5
        %v660 = vor.u32 %v656, %v659
        %v661 = vrot.slane %v660, 4
        %v663 = vshll.u32 %v480, 16
        %v665 = vrot.slane %v663, 5
        %v666 = vsel %vm484, %v661, %v665
        %v667 = vshrl.u32 %v480, 16
        %v669 = vrot.slane %v667, 4
        %v670 = vor.u32 %v669, %v665
        %v671 = vrot.slane %v670, 4
        %v673 = vshll.u32 %v481, 16
        %v675 = vrot.slane %v673, 5
        %v676 = vsel %vm484, %v671, %v675
        %677 = vrot.lane.b32.xlu0 %v498, 16
        %v678 = vpop.permute.xlu0 %677
        %679 = vrot.lane.b32.xlu0 %v508, 16
        %v680 = vpop.permute.xlu0 %679
        %681 = vrot.lane.b32.xlu0 %v522, 16
        %v682 = vpop.permute.xlu0 %681
        %683 = vrot.lane.b32.xlu0 %v532, 16
        %v684 = vpop.permute.xlu0 %683
        %685 = vrot.lane.b32.xlu0 %v546, 16
        %v686 = vpop.permute.xlu0 %685
        %687 = vrot.lane.b32.xlu0 %v556, 16
        %v688 = vpop.permute.xlu0 %687
        %689 = vrot.lane.b32.xlu0 %v570, 16
        %v690 = vpop.permute.xlu0 %689
        %691 = vrot.lane.b32.xlu0 %v580, 16
        %v692 = vpop.permute.xlu0 %691
        %693 = vrot.lane.b32.xlu0 %v594, 16
        %v694 = vpop.permute.xlu0 %693
        %695 = vrot.lane.b32.xlu0 %v604, 16
        %v696 = vpop.permute.xlu0 %695
        %697 = vrot.lane.b32.xlu0 %v618, 16
        %v698 = vpop.permute.xlu0 %697
        %699 = vrot.lane.b32.xlu0 %v628, 16
        %v700 = vpop.permute.xlu0 %699
        %701 = vrot.lane.b32.xlu0 %v642, 16
        %v702 = vpop.permute.xlu0 %701
        %703 = vrot.lane.b32.xlu0 %v652, 16
        %v704 = vpop.permute.xlu0 %703
        %705 = vrot.lane.b32.xlu0 %v666, 16
        %v706 = vpop.permute.xlu0 %705
        %707 = vrot.lane.b32.xlu0 %v676, 16
        %v708 = vpop.permute.xlu0 %707
        %vm725 = vcmask 257152
        %726 = vst.msk [vmem:[#allocation3] sm:$0xf] %vm725, %v678
        %727 = vst.msk [vmem:[#allocation3 + $0x8] sm:$0xf] %vm725, %v680
        %728 = vst.msk [vmem:[#allocation3 + $0x10] sm:$0xf] %vm725, %v682
        %729 = vst.msk [vmem:[#allocation3 + $0x18] sm:$0xf] %vm725, %v684
        %730 = vst.msk [vmem:[#allocation3 + $0x20] sm:$0xf] %vm725, %v686
        %731 = vst.msk [vmem:[#allocation3 + $0x28] sm:$0xf] %vm725, %v688
        %732 = vst.msk [vmem:[#allocation3 + $0x30] sm:$0xf] %vm725, %v690
        %733 = vst.msk [vmem:[#allocation3 + $0x38] sm:$0xf] %vm725, %v692
        %734 = vst.msk [vmem:[#allocation3 + $0x40] sm:$0xf] %vm725, %v694
        %735 = vst.msk [vmem:[#allocation3 + $0x48] sm:$0xf] %vm725, %v696
        %736 = vst.msk [vmem:[#allocation3 + $0x50] sm:$0xf] %vm725, %v698
        %737 = vst.msk [vmem:[#allocation3 + $0x58] sm:$0xf] %vm725, %v700
        %738 = vst.msk [vmem:[#allocation3 + $0x60] sm:$0xf] %vm725, %v702
        %739 = vst.msk [vmem:[#allocation3 + $0x68] sm:$0xf] %vm725, %v704
        %740 = vst.msk [vmem:[#allocation3 + $0x70] sm:$0xf] %vm725, %v706
        %741 = vst.msk [vmem:[#allocation3 + $0x78] sm:$0xf] %vm725, %v708
        %v742 = vld [vmem:[#allocation2] sm:$0xe]
        %v743 = vld [vmem:[#allocation2 + $0x4] sm:$0xf]
        %v744 = vld [vmem:[#allocation2 + $0x8] sm:$0x1]
        %v745 = vld [vmem:[#allocation2 + $0xc] sm:$0xe]
        %v746 = vld [vmem:[#allocation2 + $0x10] sm:$0xf]
        %v747 = vld [vmem:[#allocation2 + $0x14] sm:$0x1]
        %v748 = vld [vmem:[#allocation2 + $0x18] sm:$0xe]
        %v749 = vld [vmem:[#allocation2 + $0x1c] sm:$0xf]
        %v750 = vld [vmem:[#allocation2 + $0x20] sm:$0x1]
        %v751 = vld [vmem:[#allocation2 + $0x24] sm:$0xe]
        %v752 = vld [vmem:[#allocation2 + $0x28] sm:$0xf]
        %v753 = vld [vmem:[#allocation2 + $0x2c] sm:$0x1]
        %v754 = vld [vmem:[#allocation2 + $0x30] sm:$0xe]
        %v755 = vld [vmem:[#allocation2 + $0x34] sm:$0xf]
        %v756 = vld [vmem:[#allocation2 + $0x38] sm:$0x1]
        %v757 = vld [vmem:[#allocation2 + $0x3c] sm:$0xe]
        %v758 = vld [vmem:[#allocation2 + $0x40] sm:$0xf]
        %v759 = vld [vmem:[#allocation2 + $0x44] sm:$0x1]
        %v760 = vld [vmem:[#allocation2 + $0x48] sm:$0xe]
        %v761 = vld [vmem:[#allocation2 + $0x4c] sm:$0xf]
        %v762 = vld [vmem:[#allocation2 + $0x50] sm:$0x1]
        %v763 = vld [vmem:[#allocation2 + $0x54] sm:$0xe]
        %v764 = vld [vmem:[#allocation2 + $0x58] sm:$0xf]
        %v765 = vld [vmem:[#allocation2 + $0x5c] sm:$0x1]
        %vm790 = vcmask 1042432
        %vm791 = vcmask 1046532
        %vm792 = vmor %vm790, %vm791
        %v793 = vrot.slane %v742, 5
        %v794 = vrot.slane %v793, 4
        %v795 = vrot.slane %v743, 5
        %v796 = vsel %vm792, %v794, %v795
        %v797 = vrot.slane %v795, 4
        %v798 = vrot.slane %v744, 5
        %v799 = vsel %vm792, %v797, %v798
        %v800 = vrot.slane %v745, 5
        %v801 = vrot.slane %v800, 4
        %v802 = vrot.slane %v746, 5
        %v803 = vsel %vm792, %v801, %v802
        %v804 = vrot.slane %v802, 4
        %v805 = vrot.slane %v747, 5
        %v806 = vsel %vm792, %v804, %v805
        %v807 = vrot.slane %v748, 5
        %v808 = vrot.slane %v807, 4
        %v809 = vrot.slane %v749, 5
        %v810 = vsel %vm792, %v808, %v809
        %v811 = vrot.slane %v809, 4
        %v812 = vrot.slane %v750, 5
        %v813 = vsel %vm792, %v811, %v812
        %v814 = vrot.slane %v751, 5
        %v815 = vrot.slane %v814, 4
        %v816 = vrot.slane %v752, 5
        %v817 = vsel %vm792, %v815, %v816
        %v818 = vrot.slane %v816, 4
        %v819 = vrot.slane %v753, 5
        %v820 = vsel %vm792, %v818, %v819
        %v821 = vrot.slane %v754, 5
        %v822 = vrot.slane %v821, 4
        %v823 = vrot.slane %v755, 5
        %v824 = vsel %vm792, %v822, %v823
        %v825 = vrot.slane %v823, 4
        %v826 = vrot.slane %v756, 5
        %v827 = vsel %vm792, %v825, %v826
        %v828 = vrot.slane %v757, 5
        %v829 = vrot.slane %v828, 4
        %v830 = vrot.slane %v758, 5
        %v831 = vsel %vm792, %v829, %v830
        %v832 = vrot.slane %v830, 4
        %v833 = vrot.slane %v759, 5
        %v834 = vsel %vm792, %v832, %v833
        %v835 = vrot.slane %v760, 5
        %v836 = vrot.slane %v835, 4
        %v837 = vrot.slane %v761, 5
        %v838 = vsel %vm792, %v836, %v837
        %v839 = vrot.slane %v837, 4
        %v840 = vrot.slane %v762, 5
        %v841 = vsel %vm792, %v839, %v840
        %v842 = vrot.slane %v763, 5
        %v843 = vrot.slane %v842, 4
        %v844 = vrot.slane %v764, 5
        %v845 = vsel %vm792, %v843, %v844
        %v846 = vrot.slane %v844, 4
        %v847 = vrot.slane %v765, 5
        %v848 = vsel %vm792, %v846, %v847
        %849 = vrot.lane.b32.xlu0 %v796, 32
        %v850 = vpop.permute.xlu0 %849
        %851 = vrot.lane.b32.xlu0 %v799, 32
        %v852 = vpop.permute.xlu0 %851
        %853 = vrot.lane.b32.xlu0 %v803, 32
        %v854 = vpop.permute.xlu0 %853
        %855 = vrot.lane.b32.xlu0 %v806, 32
        %v856 = vpop.permute.xlu0 %855
        %857 = vrot.lane.b32.xlu0 %v810, 32
        %v858 = vpop.permute.xlu0 %857
        %859 = vrot.lane.b32.xlu0 %v813, 32
        %v860 = vpop.permute.xlu0 %859
        %861 = vrot.lane.b32.xlu0 %v817, 32
        %v862 = vpop.permute.xlu0 %861
        %863 = vrot.lane.b32.xlu0 %v820, 32
        %v864 = vpop.permute.xlu0 %863
        %865 = vrot.lane.b32.xlu0 %v824, 32
        %v866 = vpop.permute.xlu0 %865
        %867 = vrot.lane.b32.xlu0 %v827, 32
        %v868 = vpop.permute.xlu0 %867
        %869 = vrot.lane.b32.xlu0 %v831, 32
        %v870 = vpop.permute.xlu0 %869
        %871 = vrot.lane.b32.xlu0 %v834, 32
        %v872 = vpop.permute.xlu0 %871
        %873 = vrot.lane.b32.xlu0 %v838, 32
        %v874 = vpop.permute.xlu0 %873
        %875 = vrot.lane.b32.xlu0 %v841, 32
        %v876 = vpop.permute.xlu0 %875
        %877 = vrot.lane.b32.xlu0 %v845, 32
        %v878 = vpop.permute.xlu0 %877
        %879 = vrot.lane.b32.xlu0 %v848, 32
        %v880 = vpop.permute.xlu0 %879
        %vm897 = vcmask 388352
        %898 = vst.msk [vmem:[#allocation3] sm:$0xf] %vm897, %v850
        %899 = vst.msk [vmem:[#allocation3 + $0x8] sm:$0xf] %vm897, %v852
        %900 = vst.msk [vmem:[#allocation3 + $0x10] sm:$0xf] %vm897, %v854
        %901 = vst.msk [vmem:[#allocation3 + $0x18] sm:$0xf] %vm897, %v856
        %902 = vst.msk [vmem:[#allocation3 + $0x20] sm:$0xf] %vm897, %v858
        %903 = vst.msk [vmem:[#allocation3 + $0x28] sm:$0xf] %vm897, %v860
        %904 = vst.msk [vmem:[#allocation3 + $0x30] sm:$0xf] %vm897, %v862
        %905 = vst.msk [vmem:[#allocation3 + $0x38] sm:$0xf] %vm897, %v864
        %906 = vst.msk [vmem:[#allocation3 + $0x40] sm:$0xf] %vm897, %v866
        %907 = vst.msk [vmem:[#allocation3 + $0x48] sm:$0xf] %vm897, %v868
        %908 = vst.msk [vmem:[#allocation3 + $0x50] sm:$0xf] %vm897, %v870
        %909 = vst.msk [vmem:[#allocation3 + $0x58] sm:$0xf] %vm897, %v872
        %910 = vst.msk [vmem:[#allocation3 + $0x60] sm:$0xf] %vm897, %v874
        %911 = vst.msk [vmem:[#allocation3 + $0x68] sm:$0xf] %vm897, %v876
        %912 = vst.msk [vmem:[#allocation3 + $0x70] sm:$0xf] %vm897, %v878
        %913 = vst.msk [vmem:[#allocation3 + $0x78] sm:$0xf] %vm897, %v880
        %s914 = scalar_lea.vmem [#allocation2], 12
        %v915 = vld [vmem:[%s914] sm:$0xf]
        %v916 = vld [vmem:[%s914 + $0x4] sm:$0xf]
        %v917 = vld [vmem:[%s914 + $0xc] sm:$0xf]
        %v918 = vld [vmem:[%s914 + $0x10] sm:$0xf]
        %v919 = vld [vmem:[%s914 + $0x18] sm:$0xf]
        %v920 = vld [vmem:[%s914 + $0x1c] sm:$0xf]
        %v921 = vld [vmem:[%s914 + $0x24] sm:$0xf]
        %v922 = vld [vmem:[%s914 + $0x28] sm:$0xf]
        %v923 = vld [vmem:[%s914 + $0x30] sm:$0xf]
        %v924 = vld [vmem:[%s914 + $0x34] sm:$0xf]
        %v925 = vld [vmem:[%s914 + $0x3c] sm:$0xf]
        %v926 = vld [vmem:[%s914 + $0x40] sm:$0xf]
        %v927 = vld [vmem:[%s914 + $0x48] sm:$0xf]
        %v928 = vld [vmem:[%s914 + $0x4c] sm:$0xf]
        %v929 = vld [vmem:[%s914 + $0x54] sm:$0xf]
        %v930 = vld [vmem:[%s914 + $0x58] sm:$0xf]
        %947 = vrot.lane.b32.xlu0 %v915, 48
        %v948 = vpop.permute.xlu0 %947
        %949 = vrot.lane.b32.xlu0 %v916, 48
        %v950 = vpop.permute.xlu0 %949
        %951 = vrot.lane.b32.xlu0 %v917, 48
        %v952 = vpop.permute.xlu0 %951
        %953 = vrot.lane.b32.xlu0 %v918, 48
        %v954 = vpop.permute.xlu0 %953
        %955 = vrot.lane.b32.xlu0 %v919, 48
        %v956 = vpop.permute.xlu0 %955
        %957 = vrot.lane.b32.xlu0 %v920, 48
        %v958 = vpop.permute.xlu0 %957
        %959 = vrot.lane.b32.xlu0 %v921, 48
        %v960 = vpop.permute.xlu0 %959
        %961 = vrot.lane.b32.xlu0 %v922, 48
        %v962 = vpop.permute.xlu0 %961
        %963 = vrot.lane.b32.xlu0 %v923, 48
        %v964 = vpop.permute.xlu0 %963
        %965 = vrot.lane.b32.xlu0 %v924, 48
        %v966 = vpop.permute.xlu0 %965
        %967 = vrot.lane.b32.xlu0 %v925, 48
        %v968 = vpop.permute.xlu0 %967
        %969 = vrot.lane.b32.xlu0 %v926, 48
        %v970 = vpop.permute.xlu0 %969
        %971 = vrot.lane.b32.xlu0 %v927, 48
        %v972 = vpop.permute.xlu0 %971
        %973 = vrot.lane.b32.xlu0 %v928, 48
        %v974 = vpop.permute.xlu0 %973
        %975 = vrot.lane.b32.xlu0 %v929, 48
        %v976 = vpop.permute.xlu0 %975
        %977 = vrot.lane.b32.xlu0 %v930, 48
        %v978 = vpop.permute.xlu0 %977
        %vm995 = vcmask 519552
        %996 = vst.msk [vmem:[#allocation3] sm:$0xf] %vm995, %v948
        %997 = vst.msk [vmem:[#allocation3 + $0x8] sm:$0xf] %vm995, %v950
        %998 = vst.msk [vmem:[#allocation3 + $0x10] sm:$0xf] %vm995, %v952
        %999 = vst.msk [vmem:[#allocation3 + $0x18] sm:$0xf] %vm995, %v954
        %1000 = vst.msk [vmem:[#allocation3 + $0x20] sm:$0xf] %vm995, %v956
        %1001 = vst.msk [vmem:[#allocation3 + $0x28] sm:$0xf] %vm995, %v958
        %1002 = vst.msk [vmem:[#allocation3 + $0x30] sm:$0xf] %vm995, %v960
        %1003 = vst.msk [vmem:[#allocation3 + $0x38] sm:$0xf] %vm995, %v962
        %1004 = vst.msk [vmem:[#allocation3 + $0x40] sm:$0xf] %vm995, %v964
        %1005 = vst.msk [vmem:[#allocation3 + $0x48] sm:$0xf] %vm995, %v966
        %1006 = vst.msk [vmem:[#allocation3 + $0x50] sm:$0xf] %vm995, %v968
        %1007 = vst.msk [vmem:[#allocation3 + $0x58] sm:$0xf] %vm995, %v970
        %1008 = vst.msk [vmem:[#allocation3 + $0x60] sm:$0xf] %vm995, %v972
        %1009 = vst.msk [vmem:[#allocation3 + $0x68] sm:$0xf] %vm995, %v974
        %1010 = vst.msk [vmem:[#allocation3 + $0x70] sm:$0xf] %vm995, %v976
        %1011 = vst.msk [vmem:[#allocation3 + $0x78] sm:$0xf] %vm995, %v978
        %v1012 = vld [vmem:[%s914] sm:$0xf]
        %v1013 = vld [vmem:[%s914 + $0x4] sm:$0xf]
        %v1014 = vld [vmem:[%s914 + $0x8] sm:$0x1]
        %v1015 = vld [vmem:[%s914 + $0xc] sm:$0xf]
        %v1016 = vld [vmem:[%s914 + $0x10] sm:$0xf]
        %v1017 = vld [vmem:[%s914 + $0x14] sm:$0x1]
        %v1018 = vld [vmem:[%s914 + $0x18] sm:$0xf]
        %v1019 = vld [vmem:[%s914 + $0x1c] sm:$0xf]
        %v1020 = vld [vmem:[%s914 + $0x20] sm:$0x1]
        %v1021 = vld [vmem:[%s914 + $0x24] sm:$0xf]
        %v1022 = vld [vmem:[%s914 + $0x28] sm:$0xf]
        %v1023 = vld [vmem:[%s914 + $0x2c] sm:$0x1]
        %v1024 = vld [vmem:[%s914 + $0x30] sm:$0xf]
        %v1025 = vld [vmem:[%s914 + $0x34] sm:$0xf]
        %v1026 = vld [vmem:[%s914 + $0x38] sm:$0x1]
        %v1027 = vld [vmem:[%s914 + $0x3c] sm:$0xf]
        %v1028 = vld [vmem:[%s914 + $0x40] sm:$0xf]
        %v1029 = vld [vmem:[%s914 + $0x44] sm:$0x1]
        %v1030 = vld [vmem:[%s914 + $0x48] sm:$0xf]
        %v1031 = vld [vmem:[%s914 + $0x4c] sm:$0xf]
        %v1032 = vld [vmem:[%s914 + $0x50] sm:$0x1]
        %v1033 = vld [vmem:[%s914 + $0x54] sm:$0xf]
        %v1034 = vld [vmem:[%s914 + $0x58] sm:$0xf]
        %v1035 = vld [vmem:[%s914 + $0x5c] sm:$0x1]
        %v1037 = vshrl.u32 %v1012, 16
        %v1039 = vrot.slane %v1037, 4
        %v1040 = vshll.u32 %v1012, 16
        %v1042 = vrot.slane %v1040, 5
        %v1043 = vor.u32 %v1039, %v1042
        %v1044 = vrot.slane %v1043, 4
        %v1046 = vshll.u32 %v1013, 16
        %v1048 = vrot.slane %v1046, 5
        %v1049 = vsel %vm484, %v1044, %v1048
        %v1050 = vshrl.u32 %v1013, 16
        %v1052 = vrot.slane %v1050, 4
        %v1053 = vor.u32 %v1052, %v1048
        %v1054 = vrot.slane %v1053, 4
        %v1056 = vshll.u32 %v1014, 16
        %v1058 = vrot.slane %v1056, 5
        %v1059 = vsel %vm484, %v1054, %v1058
        %v1061 = vshrl.u32 %v1015, 16
        %v1063 = vrot.slane %v1061, 4
        %v1064 = vshll.u32 %v1015, 16
        %v1066 = vrot.slane %v1064, 5
        %v1067 = vor.u32 %v1063, %v1066
        %v1068 = vrot.slane %v1067, 4
        %v1070 = vshll.u32 %v1016, 16
        %v1072 = vrot.slane %v1070, 5
        %v1073 = vsel %vm484, %v1068, %v1072
        %v1074 = vshrl.u32 %v1016, 16
        %v1076 = vrot.slane %v1074, 4
        %v1077 = vor.u32 %v1076, %v1072
        %v1078 = vrot.slane %v1077, 4
        %v1080 = vshll.u32 %v1017, 16
        %v1082 = vrot.slane %v1080, 5
        %v1083 = vsel %vm484, %v1078, %v1082
        %v1085 = vshrl.u32 %v1018, 16
        %v1087 = vrot.slane %v1085, 4
        %v1088 = vshll.u32 %v1018, 16
        %v1090 = vrot.slane %v1088, 5
        %v1091 = vor.u32 %v1087, %v1090
        %v1092 = vrot.slane %v1091, 4
        %v1094 = vshll.u32 %v1019, 16
        %v1096 = vrot.slane %v1094, 5
        %v1097 = vsel %vm484, %v1092, %v1096
        %v1098 = vshrl.u32 %v1019, 16
        %v1100 = vrot.slane %v1098, 4
        %v1101 = vor.u32 %v1100, %v1096
        %v1102 = vrot.slane %v1101, 4
        %v1104 = vshll.u32 %v1020, 16
        %v1106 = vrot.slane %v1104, 5
        %v1107 = vsel %vm484, %v1102, %v1106
        %v1109 = vshrl.u32 %v1021, 16
        %v1111 = vrot.slane %v1109, 4
        %v1112 = vshll.u32 %v1021, 16
        %v1114 = vrot.slane %v1112, 5
        %v1115 = vor.u32 %v1111, %v1114
        %v1116 = vrot.slane %v1115, 4
        %v1118 = vshll.u32 %v1022, 16
        %v1120 = vrot.slane %v1118, 5
        %v1121 = vsel %vm484, %v1116, %v1120
        %v1122 = vshrl.u32 %v1022, 16
        %v1124 = vrot.slane %v1122, 4
        %v1125 = vor.u32 %v1124, %v1120
        %v1126 = vrot.slane %v1125, 4
        %v1128 = vshll.u32 %v1023, 16
        %v1130 = vrot.slane %v1128, 5
        %v1131 = vsel %vm484, %v1126, %v1130
        %v1133 = vshrl.u32 %v1024, 16
        %v1135 = vrot.slane %v1133, 4
        %v1136 = vshll.u32 %v1024, 16
        %v1138 = vrot.slane %v1136, 5
        %v1139 = vor.u32 %v1135, %v1138
        %v1140 = vrot.slane %v1139, 4
        %v1142 = vshll.u32 %v1025, 16
        %v1144 = vrot.slane %v1142, 5
        %v1145 = vsel %vm484, %v1140, %v1144
        %v1146 = vshrl.u32 %v1025, 16
        %v1148 = vrot.slane %v1146, 4
        %v1149 = vor.u32 %v1148, %v1144
        %v1150 = vrot.slane %v1149, 4
        %v1152 = vshll.u32 %v1026, 16
        %v1154 = vrot.slane %v1152, 5
        %v1155 = vsel %vm484, %v1150, %v1154
        %v1157 = vshrl.u32 %v1027, 16
        %v1159 = vrot.slane %v1157, 4
        %v1160 = vshll.u32 %v1027, 16
        %v1162 = vrot.slane %v1160, 5
        %v1163 = vor.u32 %v1159, %v1162
        %v1164 = vrot.slane %v1163, 4
        %v1166 = vshll.u32 %v1028, 16
        %v1168 = vrot.slane %v1166, 5
        %v1169 = vsel %vm484, %v1164, %v1168
        %v1170 = vshrl.u32 %v1028, 16
        %v1172 = vrot.slane %v1170, 4
        %v1173 = vor.u32 %v1172, %v1168
        %v1174 = vrot.slane %v1173, 4
        %v1176 = vshll.u32 %v1029, 16
        %v1178 = vrot.slane %v1176, 5
        %v1179 = vsel %vm484, %v1174, %v1178
        %v1181 = vshrl.u32 %v1030, 16
        %v1183 = vrot.slane %v1181, 4
        %v1184 = vshll.u32 %v1030, 16
        %v1186 = vrot.slane %v1184, 5
        %v1187 = vor.u32 %v1183, %v1186
        %v1188 = vrot.slane %v1187, 4
        %v1190 = vshll.u32 %v1031, 16
        %v1192 = vrot.slane %v1190, 5
        %v1193 = vsel %vm484, %v1188, %v1192
        %v1194 = vshrl.u32 %v1031, 16
        %v1196 = vrot.slane %v1194, 4
        %v1197 = vor.u32 %v1196, %v1192
        %v1198 = vrot.slane %v1197, 4
        %v1200 = vshll.u32 %v1032, 16
        %v1202 = vrot.slane %v1200, 5
        %v1203 = vsel %vm484, %v1198, %v1202
        %v1205 = vshrl.u32 %v1033, 16
        %v1207 = vrot.slane %v1205, 4
        %v1208 = vshll.u32 %v1033, 16
        %v1210 = vrot.slane %v1208, 5
        %v1211 = vor.u32 %v1207, %v1210
        %v1212 = vrot.slane %v1211, 4
        %v1214 = vshll.u32 %v1034, 16
        %v1216 = vrot.slane %v1214, 5
        %v1217 = vsel %vm484, %v1212, %v1216
        %v1218 = vshrl.u32 %v1034, 16
        %v1220 = vrot.slane %v1218, 4
        %v1221 = vor.u32 %v1220, %v1216
        %v1222 = vrot.slane %v1221, 4
        %v1224 = vshll.u32 %v1035, 16
        %v1226 = vrot.slane %v1224, 5
        %v1227 = vsel %vm484, %v1222, %v1226
        %1228 = vrot.lane.b32.xlu0 %v1049, 64
        %v1229 = vpop.permute.xlu0 %1228
        %1230 = vrot.lane.b32.xlu0 %v1059, 64
        %v1231 = vpop.permute.xlu0 %1230
        %1232 = vrot.lane.b32.xlu0 %v1073, 64
        %v1233 = vpop.permute.xlu0 %1232
        %1234 = vrot.lane.b32.xlu0 %v1083, 64
        %v1235 = vpop.permute.xlu0 %1234
        %1236 = vrot.lane.b32.xlu0 %v1097, 64
        %v1237 = vpop.permute.xlu0 %1236
        %1238 = vrot.lane.b32.xlu0 %v1107, 64
        %v1239 = vpop.permute.xlu0 %1238
        %1240 = vrot.lane.b32.xlu0 %v1121, 64
        %v1241 = vpop.permute.xlu0 %1240
        %1242 = vrot.lane.b32.xlu0 %v1131, 64
        %v1243 = vpop.permute.xlu0 %1242
        %1244 = vrot.lane.b32.xlu0 %v1145, 64
        %v1245 = vpop.permute.xlu0 %1244
        %1246 = vrot.lane.b32.xlu0 %v1155, 64
        %v1247 = vpop.permute.xlu0 %1246
        %1248 = vrot.lane.b32.xlu0 %v1169, 64
        %v1249 = vpop.permute.xlu0 %1248
        %1250 = vrot.lane.b32.xlu0 %v1179, 64
        %v1251 = vpop.permute.xlu0 %1250
        %1252 = vrot.lane.b32.xlu0 %v1193, 64
        %v1253 = vpop.permute.xlu0 %1252
        %1254 = vrot.lane.b32.xlu0 %v1203, 64
        %v1255 = vpop.permute.xlu0 %1254
        %1256 = vrot.lane.b32.xlu0 %v1217, 64
        %v1257 = vpop.permute.xlu0 %1256
        %1258 = vrot.lane.b32.xlu0 %v1227, 64
        %v1259 = vpop.permute.xlu0 %1258
        %vm1276 = vcmask 650752
        %1277 = vst.msk [vmem:[#allocation3] sm:$0xf] %vm1276, %v1229
        %1278 = vst.msk [vmem:[#allocation3 + $0x8] sm:$0xf] %vm1276, %v1231
        %1279 = vst.msk [vmem:[#allocation3 + $0x10] sm:$0xf] %vm1276, %v1233
        %1280 = vst.msk [vmem:[#allocation3 + $0x18] sm:$0xf] %vm1276, %v1235
        %1281 = vst.msk [vmem:[#allocation3 + $0x20] sm:$0xf] %vm1276, %v1237
        %1282 = vst.msk [vmem:[#allocation3 + $0x28] sm:$0xf] %vm1276, %v1239
        %1283 = vst.msk [vmem:[#allocation3 + $0x30] sm:$0xf] %vm1276, %v1241
        %1284 = vst.msk [vmem:[#allocation3 + $0x38] sm:$0xf] %vm1276, %v1243
        %1285 = vst.msk [vmem:[#allocation3 + $0x40] sm:$0xf] %vm1276, %v1245
        %1286 = vst.msk [vmem:[#allocation3 + $0x48] sm:$0xf] %vm1276, %v1247
        %1287 = vst.msk [vmem:[#allocation3 + $0x50] sm:$0xf] %vm1276, %v1249
        %1288 = vst.msk [vmem:[#allocation3 + $0x58] sm:$0xf] %vm1276, %v1251
        %1289 = vst.msk [vmem:[#allocation3 + $0x60] sm:$0xf] %vm1276, %v1253
        %1290 = vst.msk [vmem:[#allocation3 + $0x68] sm:$0xf] %vm1276, %v1255
        %1291 = vst.msk [vmem:[#allocation3 + $0x70] sm:$0xf] %vm1276, %v1257
        %1292 = vst.msk [vmem:[#allocation3 + $0x78] sm:$0xf] %vm1276, %v1259
        %v1293 = vld [vmem:[%s914] sm:$0xe]
        %v1294 = vld [vmem:[%s914 + $0x4] sm:$0xf]
        %v1295 = vld [vmem:[%s914 + $0x8] sm:$0x1]
        %v1296 = vld [vmem:[%s914 + $0xc] sm:$0xe]
        %v1297 = vld [vmem:[%s914 + $0x10] sm:$0xf]
        %v1298 = vld [vmem:[%s914 + $0x14] sm:$0x1]
        %v1299 = vld [vmem:[%s914 + $0x18] sm:$0xe]
        %v1300 = vld [vmem:[%s914 + $0x1c] sm:$0xf]
        %v1301 = vld [vmem:[%s914 + $0x20] sm:$0x1]
        %v1302 = vld [vmem:[%s914 + $0x24] sm:$0xe]
        %v1303 = vld [vmem:[%s914 + $0x28] sm:$0xf]
        %v1304 = vld [vmem:[%s914 + $0x2c] sm:$0x1]
        %v1305 = vld [vmem:[%s914 + $0x30] sm:$0xe]
        %v1306 = vld [vmem:[%s914 + $0x34] sm:$0xf]
        %v1307 = vld [vmem:[%s914 + $0x38] sm:$0x1]
        %v1308 = vld [vmem:[%s914 + $0x3c] sm:$0xe]
        %v1309 = vld [vmem:[%s914 + $0x40] sm:$0xf]
        %v1310 = vld [vmem:[%s914 + $0x44] sm:$0x1]
        %v1311 = vld [vmem:[%s914 + $0x48] sm:$0xe]
        %v1312 = vld [vmem:[%s914 + $0x4c] sm:$0xf]
        %v1313 = vld [vmem:[%s914 + $0x50] sm:$0x1]
        %v1314 = vld [vmem:[%s914 + $0x54] sm:$0xe]
        %v1315 = vld [vmem:[%s914 + $0x58] sm:$0xf]
        %v1316 = vld [vmem:[%s914 + $0x5c] sm:$0x1]
        %v1341 = vrot.slane %v1293, 5
        %v1342 = vrot.slane %v1341, 4
        %v1343 = vrot.slane %v1294, 5
        %v1344 = vsel %vm792, %v1342, %v1343
        %v1345 = vrot.slane %v1343, 4
        %v1346 = vrot.slane %v1295, 5
        %v1347 = vsel %vm792, %v1345, %v1346
        %v1348 = vrot.slane %v1296, 5
        %v1349 = vrot.slane %v1348, 4
        %v1350 = vrot.slane %v1297, 5
        %v1351 = vsel %vm792, %v1349, %v1350
        %v1352 = vrot.slane %v1350, 4
        %v1353 = vrot.slane %v1298, 5
        %v1354 = vsel %vm792, %v1352, %v1353
        %v1355 = vrot.slane %v1299, 5
        %v1356 = vrot.slane %v1355, 4
        %v1357 = vrot.slane %v1300, 5
        %v1358 = vsel %vm792, %v1356, %v1357
        %v1359 = vrot.slane %v1357, 4
        %v1360 = vrot.slane %v1301, 5
        %v1361 = vsel %vm792, %v1359, %v1360
        %v1362 = vrot.slane %v1302, 5
        %v1363 = vrot.slane %v1362, 4
        %v1364 = vrot.slane %v1303, 5
        %v1365 = vsel %vm792, %v1363, %v1364
        %v1366 = vrot.slane %v1364, 4
        %v1367 = vrot.slane %v1304, 5
        %v1368 = vsel %vm792, %v1366, %v1367
        %v1369 = vrot.slane %v1305, 5
        %v1370 = vrot.slane %v1369, 4
        %v1371 = vrot.slane %v1306, 5
        %v1372 = vsel %vm792, %v1370, %v1371
        %v1373 = vrot.slane %v1371, 4
        %v1374 = vrot.slane %v1307, 5
        %v1375 = vsel %vm792, %v1373, %v1374
        %v1376 = vrot.slane %v1308, 5
        %v1377 = vrot.slane %v1376, 4
        %v1378 = vrot.slane %v1309, 5
        %v1379 = vsel %vm792, %v1377, %v1378
        %v1380 = vrot.slane %v1378, 4
        %v1381 = vrot.slane %v1310, 5
        %v1382 = vsel %vm792, %v1380, %v1381
        %v1383 = vrot.slane %v1311, 5
        %v1384 = vrot.slane %v1383, 4
        %v1385 = vrot.slane %v1312, 5
        %v1386 = vsel %vm792, %v1384, %v1385
        %v1387 = vrot.slane %v1385, 4
        %v1388 = vrot.slane %v1313, 5
        %v1389 = vsel %vm792, %v1387, %v1388
        %v1390 = vrot.slane %v1314, 5
        %v1391 = vrot.slane %v1390, 4
        %v1392 = vrot.slane %v1315, 5
        %v1393 = vsel %vm792, %v1391, %v1392
        %v1394 = vrot.slane %v1392, 4
        %v1395 = vrot.slane %v1316, 5
        %v1396 = vsel %vm792, %v1394, %v1395
        %1397 = vrot.lane.b32.xlu0 %v1344, 80
        %v1398 = vpop.permute.xlu0 %1397
        %1399 = vrot.lane.b32.xlu0 %v1347, 80
        %v1400 = vpop.permute.xlu0 %1399
        %1401 = vrot.lane.b32.xlu0 %v1351, 80
        %v1402 = vpop.permute.xlu0 %1401
        %1403 = vrot.lane.b32.xlu0 %v1354, 80
        %v1404 = vpop.permute.xlu0 %1403
        %1405 = vrot.lane.b32.xlu0 %v1358, 80
        %v1406 = vpop.permute.xlu0 %1405
        %1407 = vrot.lane.b32.xlu0 %v1361, 80
        %v1408 = vpop.permute.xlu0 %1407
        %1409 = vrot.lane.b32.xlu0 %v1365, 80
        %v1410 = vpop.permute.xlu0 %1409
        %1411 = vrot.lane.b32.xlu0 %v1368, 80
        %v1412 = vpop.permute.xlu0 %1411
        %1413 = vrot.lane.b32.xlu0 %v1372, 80
        %v1414 = vpop.permute.xlu0 %1413
        %1415 = vrot.lane.b32.xlu0 %v1375, 80
        %v1416 = vpop.permute.xlu0 %1415
        %1417 = vrot.lane.b32.xlu0 %v1379, 80
        %v1418 = vpop.permute.xlu0 %1417
        %1419 = vrot.lane.b32.xlu0 %v1382, 80
        %v1420 = vpop.permute.xlu0 %1419
        %1421 = vrot.lane.b32.xlu0 %v1386, 80
        %v1422 = vpop.permute.xlu0 %1421
        %1423 = vrot.lane.b32.xlu0 %v1389, 80
        %v1424 = vpop.permute.xlu0 %1423
        %1425 = vrot.lane.b32.xlu0 %v1393, 80
        %v1426 = vpop.permute.xlu0 %1425
        %1427 = vrot.lane.b32.xlu0 %v1396, 80
        %v1428 = vpop.permute.xlu0 %1427
        %vm1445 = vcmask 781952
        %1446 = vst.msk [vmem:[#allocation3] sm:$0xf] %vm1445, %v1398
        %1447 = vst.msk [vmem:[#allocation3 + $0x8] sm:$0xf] %vm1445, %v1400
        %1448 = vst.msk [vmem:[#allocation3 + $0x10] sm:$0xf] %vm1445, %v1402
        %1449 = vst.msk [vmem:[#allocation3 + $0x18] sm:$0xf] %vm1445, %v1404
        %1450 = vst.msk [vmem:[#allocation3 + $0x20] sm:$0xf] %vm1445, %v1406
        %1451 = vst.msk [vmem:[#allocation3 + $0x28] sm:$0xf] %vm1445, %v1408
        %1452 = vst.msk [vmem:[#allocation3 + $0x30] sm:$0xf] %vm1445, %v1410
        %1453 = vst.msk [vmem:[#allocation3 + $0x38] sm:$0xf] %vm1445, %v1412
        %1454 = vst.msk [vmem:[#allocation3 + $0x40] sm:$0xf] %vm1445, %v1414
        %1455 = vst.msk [vmem:[#allocation3 + $0x48] sm:$0xf] %vm1445, %v1416
        %1456 = vst.msk [vmem:[#allocation3 + $0x50] sm:$0xf] %vm1445, %v1418
        %1457 = vst.msk [vmem:[#allocation3 + $0x58] sm:$0xf] %vm1445, %v1420
        %1458 = vst.msk [vmem:[#allocation3 + $0x60] sm:$0xf] %vm1445, %v1422
        %1459 = vst.msk [vmem:[#allocation3 + $0x68] sm:$0xf] %vm1445, %v1424
        %1460 = vst.msk [vmem:[#allocation3 + $0x70] sm:$0xf] %vm1445, %v1426
        %1461 = vst.msk [vmem:[#allocation3 + $0x78] sm:$0xf] %vm1445, %v1428
        %s1462 = scalar_lea.vmem [#allocation2], 24
        %v1463 = vld [vmem:[%s1462] sm:$0xf]
        %v1464 = vld [vmem:[%s1462 + $0x4] sm:$0xf]
        %v1465 = vld [vmem:[%s1462 + $0xc] sm:$0xf]
        %v1466 = vld [vmem:[%s1462 + $0x10] sm:$0xf]
        %v1467 = vld [vmem:[%s1462 + $0x18] sm:$0xf]
        %v1468 = vld [vmem:[%s1462 + $0x1c] sm:$0xf]
        %v1469 = vld [vmem:[%s1462 + $0x24] sm:$0xf]
        %v1470 = vld [vmem:[%s1462 + $0x28] sm:$0xf]
        %v1471 = vld [vmem:[%s1462 + $0x30] sm:$0xf]
        %v1472 = vld [vmem:[%s1462 + $0x34] sm:$0xf]
        %v1473 = vld [vmem:[%s1462 + $0x3c] sm:$0xf]
        %v1474 = vld [vmem:[%s1462 + $0x40] sm:$0xf]
        %v1475 = vld [vmem:[%s1462 + $0x48] sm:$0xf]
        %v1476 = vld [vmem:[%s1462 + $0x4c] sm:$0xf]
        %v1477 = vld [vmem:[%s1462 + $0x54] sm:$0xf]
        %v1478 = vld [vmem:[%s1462 + $0x58] sm:$0xf]
        %1495 = vrot.lane.b32.xlu0 %v1463, 96
        %v1496 = vpop.permute.xlu0 %1495
        %1497 = vrot.lane.b32.xlu0 %v1464, 96
        %v1498 = vpop.permute.xlu0 %1497
        %1499 = vrot.lane.b32.xlu0 %v1465, 96
        %v1500 = vpop.permute.xlu0 %1499
        %1501 = vrot.lane.b32.xlu0 %v1466, 96
        %v1502 = vpop.permute.xlu0 %1501
        %1503 = vrot.lane.b32.xlu0 %v1467, 96
        %v1504 = vpop.permute.xlu0 %1503
        %1505 = vrot.lane.b32.xlu0 %v1468, 96
        %v1506 = vpop.permute.xlu0 %1505
        %1507 = vrot.lane.b32.xlu0 %v1469, 96
        %v1508 = vpop.permute.xlu0 %1507
        %1509 = vrot.lane.b32.xlu0 %v1470, 96
        %v1510 = vpop.permute.xlu0 %1509
        %1511 = vrot.lane.b32.xlu0 %v1471, 96
        %v1512 = vpop.permute.xlu0 %1511
        %1513 = vrot.lane.b32.xlu0 %v1472, 96
        %v1514 = vpop.permute.xlu0 %1513
        %1515 = vrot.lane.b32.xlu0 %v1473, 96
        %v1516 = vpop.permute.xlu0 %1515
        %1517 = vrot.lane.b32.xlu0 %v1474, 96
        %v1518 = vpop.permute.xlu0 %1517
        %1519 = vrot.lane.b32.xlu0 %v1475, 96
        %v1520 = vpop.permute.xlu0 %1519
        %1521 = vrot.lane.b32.xlu0 %v1476, 96
        %v1522 = vpop.permute.xlu0 %1521
        %1523 = vrot.lane.b32.xlu0 %v1477, 96
        %v1524 = vpop.permute.xlu0 %1523
        %1525 = vrot.lane.b32.xlu0 %v1478, 96
        %v1526 = vpop.permute.xlu0 %1525
        %vm1543 = vcmask 913152
        %1544 = vst.msk [vmem:[#allocation3] sm:$0xf] %vm1543, %v1496
        %1545 = vst.msk [vmem:[#allocation3 + $0x8] sm:$0xf] %vm1543, %v1498
        %1546 = vst.msk [vmem:[#allocation3 + $0x10] sm:$0xf] %vm1543, %v1500
        %1547 = vst.msk [vmem:[#allocation3 + $0x18] sm:$0xf] %vm1543, %v1502
        %1548 = vst.msk [vmem:[#allocation3 + $0x20] sm:$0xf] %vm1543, %v1504
        %1549 = vst.msk [vmem:[#allocation3 + $0x28] sm:$0xf] %vm1543, %v1506
        %1550 = vst.msk [vmem:[#allocation3 + $0x30] sm:$0xf] %vm1543, %v1508
        %1551 = vst.msk [vmem:[#allocation3 + $0x38] sm:$0xf] %vm1543, %v1510
        %1552 = vst.msk [vmem:[#allocation3 + $0x40] sm:$0xf] %vm1543, %v1512
        %1553 = vst.msk [vmem:[#allocation3 + $0x48] sm:$0xf] %vm1543, %v1514
        %1554 = vst.msk [vmem:[#allocation3 + $0x50] sm:$0xf] %vm1543, %v1516
        %1555 = vst.msk [vmem:[#allocation3 + $0x58] sm:$0xf] %vm1543, %v1518
        %1556 = vst.msk [vmem:[#allocation3 + $0x60] sm:$0xf] %vm1543, %v1520
        %1557 = vst.msk [vmem:[#allocation3 + $0x68] sm:$0xf] %vm1543, %v1522
        %1558 = vst.msk [vmem:[#allocation3 + $0x70] sm:$0xf] %vm1543, %v1524
        %1559 = vst.msk [vmem:[#allocation3 + $0x78] sm:$0xf] %vm1543, %v1526
        %v1560 = vld [vmem:[%s1462] sm:$0xf]
        %v1561 = vld [vmem:[%s1462 + $0x4] sm:$0xf]
        %v1562 = vld [vmem:[%s1462 + $0x8] sm:$0x1]
        %v1563 = vld [vmem:[%s1462 + $0xc] sm:$0xf]
        %v1564 = vld [vmem:[%s1462 + $0x10] sm:$0xf]
        %v1565 = vld [vmem:[%s1462 + $0x14] sm:$0x1]
        %v1566 = vld [vmem:[%s1462 + $0x18] sm:$0xf]
        %v1567 = vld [vmem:[%s1462 + $0x1c] sm:$0xf]
        %v1568 = vld [vmem:[%s1462 + $0x20] sm:$0x1]
        %v1569 = vld [vmem:[%s1462 + $0x24] sm:$0xf]
        %v1570 = vld [vmem:[%s1462 + $0x28] sm:$0xf]
        %v1571 = vld [vmem:[%s1462 + $0x2c] sm:$0x1]
        %v1572 = vld [vmem:[%s1462 + $0x30] sm:$0xf]
        %v1573 = vld [vmem:[%s1462 + $0x34] sm:$0xf]
        %v1574 = vld [vmem:[%s1462 + $0x38] sm:$0x1]
        %v1575 = vld [vmem:[%s1462 + $0x3c] sm:$0xf]
        %v1576 = vld [vmem:[%s1462 + $0x40] sm:$0xf]
        %v1577 = vld [vmem:[%s1462 + $0x44] sm:$0x1]
        %v1578 = vld [vmem:[%s1462 + $0x48] sm:$0xf]
        %v1579 = vld [vmem:[%s1462 + $0x4c] sm:$0xf]
        %v1580 = vld [vmem:[%s1462 + $0x50] sm:$0x1]
        %v1581 = vld [vmem:[%s1462 + $0x54] sm:$0xf]
        %v1582 = vld [vmem:[%s1462 + $0x58] sm:$0xf]
        %v1583 = vld [vmem:[%s1462 + $0x5c] sm:$0x1]
        %v1585 = vshrl.u32 %v1560, 16
        %v1587 = vrot.slane %v1585, 4
        %v1588 = vshll.u32 %v1560, 16
        %v1590 = vrot.slane %v1588, 5
        %v1591 = vor.u32 %v1587, %v1590
        %v1592 = vrot.slane %v1591, 4
        %v1594 = vshll.u32 %v1561, 16
        %v1596 = vrot.slane %v1594, 5
        %v1597 = vsel %vm484, %v1592, %v1596
        %v1598 = vshrl.u32 %v1561, 16
        %v1600 = vrot.slane %v1598, 4
        %v1601 = vor.u32 %v1600, %v1596
        %v1602 = vrot.slane %v1601, 4
        %v1604 = vshll.u32 %v1562, 16
        %v1606 = vrot.slane %v1604, 5
        %v1607 = vsel %vm484, %v1602, %v1606
        %v1609 = vshrl.u32 %v1563, 16
        %v1611 = vrot.slane %v1609, 4
        %v1612 = vshll.u32 %v1563, 16
        %v1614 = vrot.slane %v1612, 5
        %v1615 = vor.u32 %v1611, %v1614
        %v1616 = vrot.slane %v1615, 4
        %v1618 = vshll.u32 %v1564, 16
        %v1620 = vrot.slane %v1618, 5
        %v1621 = vsel %vm484, %v1616, %v1620
        %v1622 = vshrl.u32 %v1564, 16
        %v1624 = vrot.slane %v1622, 4
        %v1625 = vor.u32 %v1624, %v1620
        %v1626 = vrot.slane %v1625, 4
        %v1628 = vshll.u32 %v1565, 16
        %v1630 = vrot.slane %v1628, 5
        %v1631 = vsel %vm484, %v1626, %v1630
        %v1633 = vshrl.u32 %v1566, 16
        %v1635 = vrot.slane %v1633, 4
        %v1636 = vshll.u32 %v1566, 16
        %v1638 = vrot.slane %v1636, 5
        %v1639 = vor.u32 %v1635, %v1638
        %v1640 = vrot.slane %v1639, 4
        %v1642 = vshll.u32 %v1567, 16
        %v1644 = vrot.slane %v1642, 5
        %v1645 = vsel %vm484, %v1640, %v1644
        %v1646 = vshrl.u32 %v1567, 16
        %v1648 = vrot.slane %v1646, 4
        %v1649 = vor.u32 %v1648, %v1644
        %v1650 = vrot.slane %v1649, 4
        %v1652 = vshll.u32 %v1568, 16
        %v1654 = vrot.slane %v1652, 5
        %v1655 = vsel %vm484, %v1650, %v1654
        %v1657 = vshrl.u32 %v1569, 16
        %v1659 = vrot.slane %v1657, 4
        %v1660 = vshll.u32 %v1569, 16
        %v1662 = vrot.slane %v1660, 5
        %v1663 = vor.u32 %v1659, %v1662
        %v1664 = vrot.slane %v1663, 4
        %v1666 = vshll.u32 %v1570, 16
        %v1668 = vrot.slane %v1666, 5
        %v1669 = vsel %vm484, %v1664, %v1668
        %v1670 = vshrl.u32 %v1570, 16
        %v1672 = vrot.slane %v1670, 4
        %v1673 = vor.u32 %v1672, %v1668
        %v1674 = vrot.slane %v1673, 4
        %v1676 = vshll.u32 %v1571, 16
        %v1678 = vrot.slane %v1676, 5
        %v1679 = vsel %vm484, %v1674, %v1678
        %v1681 = vshrl.u32 %v1572, 16
        %v1683 = vrot.slane %v1681, 4
        %v1684 = vshll.u32 %v1572, 16
        %v1686 = vrot.slane %v1684, 5
        %v1687 = vor.u32 %v1683, %v1686
        %v1688 = vrot.slane %v1687, 4
        %v1690 = vshll.u32 %v1573, 16
        %v1692 = vrot.slane %v1690, 5
        %v1693 = vsel %vm484, %v1688, %v1692
        %v1694 = vshrl.u32 %v1573, 16
        %v1696 = vrot.slane %v1694, 4
        %v1697 = vor.u32 %v1696, %v1692
        %v1698 = vrot.slane %v1697, 4
        %v1700 = vshll.u32 %v1574, 16
        %v1702 = vrot.slane %v1700, 5
        %v1703 = vsel %vm484, %v1698, %v1702
        %v1705 = vshrl.u32 %v1575, 16
        %v1707 = vrot.slane %v1705, 4
        %v1708 = vshll.u32 %v1575, 16
        %v1710 = vrot.slane %v1708, 5
        %v1711 = vor.u32 %v1707, %v1710
        %v1712 = vrot.slane %v1711, 4
        %v1714 = vshll.u32 %v1576, 16
        %v1716 = vrot.slane %v1714, 5
        %v1717 = vsel %vm484, %v1712, %v1716
        %v1718 = vshrl.u32 %v1576, 16
        %v1720 = vrot.slane %v1718, 4
        %v1721 = vor.u32 %v1720, %v1716
        %v1722 = vrot.slane %v1721, 4
        %v1724 = vshll.u32 %v1577, 16
        %v1726 = vrot.slane %v1724, 5
        %v1727 = vsel %vm484, %v1722, %v1726
        %v1729 = vshrl.u32 %v1578, 16
        %v1731 = vrot.slane %v1729, 4
        %v1732 = vshll.u32 %v1578, 16
        %v1734 = vrot.slane %v1732, 5
        %v1735 = vor.u32 %v1731, %v1734
        %v1736 = vrot.slane %v1735, 4
        %v1738 = vshll.u32 %v1579, 16
        %v1740 = vrot.slane %v1738, 5
        %v1741 = vsel %vm484, %v1736, %v1740
        %v1742 = vshrl.u32 %v1579, 16
        %v1744 = vrot.slane %v1742, 4
        %v1745 = vor.u32 %v1744, %v1740
        %v1746 = vrot.slane %v1745, 4
        %v1748 = vshll.u32 %v1580, 16
        %v1750 = vrot.slane %v1748, 5
        %v1751 = vsel %vm484, %v1746, %v1750
        %v1753 = vshrl.u32 %v1581, 16
        %v1755 = vrot.slane %v1753, 4
        %v1756 = vshll.u32 %v1581, 16
        %v1758 = vrot.slane %v1756, 5
        %v1759 = vor.u32 %v1755, %v1758
        %v1760 = vrot.slane %v1759, 4
        %v1762 = vshll.u32 %v1582, 16
        %v1764 = vrot.slane %v1762, 5
        %v1765 = vsel %vm484, %v1760, %v1764
        %v1766 = vshrl.u32 %v1582, 16
        %v1768 = vrot.slane %v1766, 4
        %v1769 = vor.u32 %v1768, %v1764
        %v1770 = vrot.slane %v1769, 4
        %v1772 = vshll.u32 %v1583, 16
        %v1774 = vrot.slane %v1772, 5
        %v1775 = vsel %vm484, %v1770, %v1774
        %1776 = vrot.lane.b32.xlu0 %v1597, 112
        %v1777 = vpop.permute.xlu0 %1776
        %1778 = vrot.lane.b32.xlu0 %v1607, 112
        %v1779 = vpop.permute.xlu0 %1778
        %1780 = vrot.lane.b32.xlu0 %v1621, 112
        %v1781 = vpop.permute.xlu0 %1780
        %1782 = vrot.lane.b32.xlu0 %v1631, 112
        %v1783 = vpop.permute.xlu0 %1782
        %1784 = vrot.lane.b32.xlu0 %v1645, 112
        %v1785 = vpop.permute.xlu0 %1784
        %1786 = vrot.lane.b32.xlu0 %v1655, 112
        %v1787 = vpop.permute.xlu0 %1786
        %1788 = vrot.lane.b32.xlu0 %v1669, 112
        %v1789 = vpop.permute.xlu0 %1788
        %1790 = vrot.lane.b32.xlu0 %v1679, 112
        %v1791 = vpop.permute.xlu0 %1790
        %1792 = vrot.lane.b32.xlu0 %v1693, 112
        %v1793 = vpop.permute.xlu0 %1792
        %1794 = vrot.lane.b32.xlu0 %v1703, 112
        %v1795 = vpop.permute.xlu0 %1794
        %1796 = vrot.lane.b32.xlu0 %v1717, 112
        %v1797 = vpop.permute.xlu0 %1796
        %1798 = vrot.lane.b32.xlu0 %v1727, 112
        %v1799 = vpop.permute.xlu0 %1798
        %1800 = vrot.lane.b32.xlu0 %v1741, 112
        %v1801 = vpop.permute.xlu0 %1800
        %1802 = vrot.lane.b32.xlu0 %v1751, 112
        %v1803 = vpop.permute.xlu0 %1802
        %1804 = vrot.lane.b32.xlu0 %v1765, 112
        %v1805 = vpop.permute.xlu0 %1804
        %1806 = vrot.lane.b32.xlu0 %v1775, 112
        %v1807 = vpop.permute.xlu0 %1806
        %vm1824 = vcmask 1044352
        %1825 = vst.msk [vmem:[#allocation3] sm:$0xf] %vm1824, %v1777
        %1826 = vst.msk [vmem:[#allocation3 + $0x8] sm:$0xf] %vm1824, %v1779
        %1827 = vst.msk [vmem:[#allocation3 + $0x10] sm:$0xf] %vm1824, %v1781
        %1828 = vst.msk [vmem:[#allocation3 + $0x18] sm:$0xf] %vm1824, %v1783
        %1829 = vst.msk [vmem:[#allocation3 + $0x20] sm:$0xf] %vm1824, %v1785
        %1830 = vst.msk [vmem:[#allocation3 + $0x28] sm:$0xf] %vm1824, %v1787
        %1831 = vst.msk [vmem:[#allocation3 + $0x30] sm:$0xf] %vm1824, %v1789
        %1832 = vst.msk [vmem:[#allocation3 + $0x38] sm:$0xf] %vm1824, %v1791
        %1833 = vst.msk [vmem:[#allocation3 + $0x40] sm:$0xf] %vm1824, %v1793
        %1834 = vst.msk [vmem:[#allocation3 + $0x48] sm:$0xf] %vm1824, %v1795
        %1835 = vst.msk [vmem:[#allocation3 + $0x50] sm:$0xf] %vm1824, %v1797
        %1836 = vst.msk [vmem:[#allocation3 + $0x58] sm:$0xf] %vm1824, %v1799
        %1837 = vst.msk [vmem:[#allocation3 + $0x60] sm:$0xf] %vm1824, %v1801
        %1838 = vst.msk [vmem:[#allocation3 + $0x68] sm:$0xf] %vm1824, %v1803
        %1839 = vst.msk [vmem:[#allocation3 + $0x70] sm:$0xf] %vm1824, %v1805
        %1840 = vst.msk [vmem:[#allocation3 + $0x78] sm:$0xf] %vm1824, %v1807
        %v1841 = vld [vmem:[%s1462] sm:$0xe]
        %v1842 = vld [vmem:[%s1462 + $0x4] sm:$0xf]
        %v1843 = vld [vmem:[%s1462 + $0x8] sm:$0x1]
        %v1844 = vld [vmem:[%s1462 + $0xc] sm:$0xe]
        %v1845 = vld [vmem:[%s1462 + $0x10] sm:$0xf]
        %v1846 = vld [vmem:[%s1462 + $0x14] sm:$0x1]
        %v1847 = vld [vmem:[%s1462 + $0x18] sm:$0xe]
        %v1848 = vld [vmem:[%s1462 + $0x1c] sm:$0xf]
        %v1849 = vld [vmem:[%s1462 + $0x20] sm:$0x1]
        %v1850 = vld [vmem:[%s1462 + $0x24] sm:$0xe]
        %v1851 = vld [vmem:[%s1462 + $0x28] sm:$0xf]
        %v1852 = vld [vmem:[%s1462 + $0x2c] sm:$0x1]
        %v1853 = vld [vmem:[%s1462 + $0x30] sm:$0xe]
        %v1854 = vld [vmem:[%s1462 + $0x34] sm:$0xf]
        %v1855 = vld [vmem:[%s1462 + $0x38] sm:$0x1]
        %v1856 = vld [vmem:[%s1462 + $0x3c] sm:$0xe]
        %v1857 = vld [vmem:[%s1462 + $0x40] sm:$0xf]
        %v1858 = vld [vmem:[%s1462 + $0x44] sm:$0x1]
        %v1859 = vld [vmem:[%s1462 + $0x48] sm:$0xe]
        %v1860 = vld [vmem:[%s1462 + $0x4c] sm:$0xf]
        %v1861 = vld [vmem:[%s1462 + $0x50] sm:$0x1]
        %v1862 = vld [vmem:[%s1462 + $0x54] sm:$0xe]
        %v1863 = vld [vmem:[%s1462 + $0x58] sm:$0xf]
        %v1864 = vld [vmem:[%s1462 + $0x5c] sm:$0x1]
        %v1889 = vrot.slane %v1841, 5
        %v1890 = vrot.slane %v1889, 4
        %v1891 = vrot.slane %v1842, 5
        %v1892 = vsel %vm792, %v1890, %v1891
        %v1893 = vrot.slane %v1891, 4
        %v1894 = vrot.slane %v1843, 5
        %v1895 = vsel %vm792, %v1893, %v1894
        %v1896 = vrot.slane %v1844, 5
        %v1897 = vrot.slane %v1896, 4
        %v1898 = vrot.slane %v1845, 5
        %v1899 = vsel %vm792, %v1897, %v1898
        %v1900 = vrot.slane %v1898, 4
        %v1901 = vrot.slane %v1846, 5
        %v1902 = vsel %vm792, %v1900, %v1901
        %v1903 = vrot.slane %v1847, 5
        %v1904 = vrot.slane %v1903, 4
        %v1905 = vrot.slane %v1848, 5
        %v1906 = vsel %vm792, %v1904, %v1905
        %v1907 = vrot.slane %v1905, 4
        %v1908 = vrot.slane %v1849, 5
        %v1909 = vsel %vm792, %v1907, %v1908
        %v1910 = vrot.slane %v1850, 5
        %v1911 = vrot.slane %v1910, 4
        %v1912 = vrot.slane %v1851, 5
        %v1913 = vsel %vm792, %v1911, %v1912
        %v1914 = vrot.slane %v1912, 4
        %v1915 = vrot.slane %v1852, 5
        %v1916 = vsel %vm792, %v1914, %v1915
        %v1917 = vrot.slane %v1853, 5
        %v1918 = vrot.slane %v1917, 4
        %v1919 = vrot.slane %v1854, 5
        %v1920 = vsel %vm792, %v1918, %v1919
        %v1921 = vrot.slane %v1919, 4
        %v1922 = vrot.slane %v1855, 5
        %v1923 = vsel %vm792, %v1921, %v1922
        %v1924 = vrot.slane %v1856, 5
        %v1925 = vrot.slane %v1924, 4
        %v1926 = vrot.slane %v1857, 5
        %v1927 = vsel %vm792, %v1925, %v1926
        %v1928 = vrot.slane %v1926, 4
        %v1929 = vrot.slane %v1858, 5
        %v1930 = vsel %vm792, %v1928, %v1929
        %v1931 = vrot.slane %v1859, 5
        %v1932 = vrot.slane %v1931, 4
        %v1933 = vrot.slane %v1860, 5
        %v1934 = vsel %vm792, %v1932, %v1933
        %v1935 = vrot.slane %v1933, 4
        %v1936 = vrot.slane %v1861, 5
        %v1937 = vsel %vm792, %v1935, %v1936
        %v1938 = vrot.slane %v1862, 5
        %v1939 = vrot.slane %v1938, 4
        %v1940 = vrot.slane %v1863, 5
        %v1941 = vsel %vm792, %v1939, %v1940
        %v1942 = vrot.slane %v1940, 4
        %v1943 = vrot.slane %v1864, 5
        %v1944 = vsel %vm792, %v1942, %v1943
        %1961 = vst.msk [vmem:[#allocation3 + $0x4] sm:$0xf] %vm387, %v1892
        %1962 = vst.msk [vmem:[#allocation3 + $0xc] sm:$0xf] %vm387, %v1895
        %1963 = vst.msk [vmem:[#allocation3 + $0x14] sm:$0xf] %vm387, %v1899
        %1964 = vst.msk [vmem:[#allocation3 + $0x1c] sm:$0xf] %vm387, %v1902
        %1965 = vst.msk [vmem:[#allocation3 + $0x24] sm:$0xf] %vm387, %v1906
        %1966 = vst.msk [vmem:[#allocation3 + $0x2c] sm:$0xf] %vm387, %v1909
        %1967 = vst.msk [vmem:[#allocation3 + $0x34] sm:$0xf] %vm387, %v1913
        %1968 = vst.msk [vmem:[#allocation3 + $0x3c] sm:$0xf] %vm387, %v1916
        %1969 = vst.msk [vmem:[#allocation3 + $0x44] sm:$0xf] %vm387, %v1920
        %1970 = vst.msk [vmem:[#allocation3 + $0x4c] sm:$0xf] %vm387, %v1923
        %1971 = vst.msk [vmem:[#allocation3 + $0x54] sm:$0xf] %vm387, %v1927
        %1972 = vst.msk [vmem:[#allocation3 + $0x5c] sm:$0xf] %vm387, %v1930
        %1973 = vst.msk [vmem:[#allocation3 + $0x64] sm:$0xf] %vm387, %v1934
        %1974 = vst.msk [vmem:[#allocation3 + $0x6c] sm:$0xf] %vm387, %v1937
        %1975 = vst.msk [vmem:[#allocation3 + $0x74] sm:$0xf] %vm387, %v1941
        %1976 = vst.msk [vmem:[#allocation3 + $0x7c] sm:$0xf] %vm387, %v1944
        %v1977 = vld [vmem:[#allocation3] sm:$0xff]
        %v1978 = vld [vmem:[#allocation3 + $0x8] sm:$0xff]
        %v1979 = vld [vmem:[#allocation3 + $0x10] sm:$0xff]
        %v1980 = vld [vmem:[#allocation3 + $0x18] sm:$0xff]
        %v1981 = vld [vmem:[#allocation3 + $0x20] sm:$0xff]
        %v1982 = vld [vmem:[#allocation3 + $0x28] sm:$0xff]
        %v1983 = vld [vmem:[#allocation3 + $0x30] sm:$0xff]
        %v1984 = vld [vmem:[#allocation3 + $0x38] sm:$0xff]
        %v1985 = vld [vmem:[#allocation3 + $0x40] sm:$0xff]
        %v1986 = vld [vmem:[#allocation3 + $0x48] sm:$0xff]
        %v1987 = vld [vmem:[#allocation3 + $0x50] sm:$0xff]
        %v1988 = vld [vmem:[#allocation3 + $0x58] sm:$0xff]
        %v1989 = vld [vmem:[#allocation3 + $0x60] sm:$0xff]
        %v1990 = vld [vmem:[#allocation3 + $0x68] sm:$0xff]
        %v1991 = vld [vmem:[#allocation3 + $0x70] sm:$0xff]
        %v1992 = vld [vmem:[#allocation3 + $0x78] sm:$0xff]
        %v1993 = vld [vmem:[%s2] sm:$0xf]
        %v1994 = vld [vmem:[%s2 + $0x4] sm:$0xf]
        %v1995 = vld [vmem:[%s2 + $0x8] sm:$0xf]
        %v1996 = vld [vmem:[%s2 + $0xc] sm:$0xf]
        %v1997 = vld [vmem:[%s2 + $0x10] sm:$0xf]
        %v1998 = vld [vmem:[%s2 + $0x14] sm:$0xf]
        %v1999 = vld [vmem:[%s2 + $0x18] sm:$0xf]
        %v2000 = vld [vmem:[%s2 + $0x1c] sm:$0xf]
        %v2001 = vld [vmem:[%s2 + $0x20] sm:$0xf]
        %v2002 = vld [vmem:[%s2 + $0x24] sm:$0xf]
        %v2003 = vld [vmem:[%s2 + $0x28] sm:$0xf]
        %v2004 = vld [vmem:[%s2 + $0x2c] sm:$0xf]
        %v2005 = vld [vmem:[%s2 + $0x30] sm:$0xf]
        %v2006 = vld [vmem:[%s2 + $0x34] sm:$0xf]
        %v2007 = vld [vmem:[%s2 + $0x38] sm:$0xf]
        %v2008 = vld [vmem:[%s2 + $0x3c] sm:$0xf]
        %v2009 = vld [vmem:[%s2 + $0x40] sm:$0xf]
        %v2010 = vld [vmem:[%s2 + $0x44] sm:$0xf]
        %v2011 = vld [vmem:[%s3] sm:$0x1]
        %v2013 = vlaneseq
        %v2014 = vshrl.u32 %v2013, 7
        %v2015 = vsub.s32 0, %v2014
        %v2016 = vrot.slane %v2011, %v2015
        %v2034 = vunpack.c.l.b16 %v1977
        %v2035 = vunpack.c.h.b16 %v1977
        %v2036 = vunpack.c.l.b16 %v1978
        %v2037 = vunpack.c.h.b16 %v1978
        %v2038 = vunpack.c.l.b16 %v1979
        %v2039 = vunpack.c.h.b16 %v1979
        %v2040 = vunpack.c.l.b16 %v1980
        %v2041 = vunpack.c.h.b16 %v1980
        %v2042 = vunpack.c.l.b16 %v1981
        %v2043 = vunpack.c.h.b16 %v1981
        %v2044 = vunpack.c.l.b16 %v1982
        %v2045 = vunpack.c.h.b16 %v1982
        %v2046 = vunpack.c.l.b16 %v1983
        %v2047 = vunpack.c.h.b16 %v1983
        %v2048 = vunpack.c.l.b16 %v1984
        %v2049 = vunpack.c.h.b16 %v1984
        %v2050 = vunpack.c.l.b16 %v1985
        %v2051 = vunpack.c.h.b16 %v1985
        %v2052 = vunpack.c.l.b16 %v1986
        %v2053 = vunpack.c.h.b16 %v1986
        %v2054 = vunpack.c.l.b16 %v1987
        %v2055 = vunpack.c.h.b16 %v1987
        %v2056 = vunpack.c.l.b16 %v1988
        %v2057 = vunpack.c.h.b16 %v1988
        %v2058 = vunpack.c.l.b16 %v1989
        %v2059 = vunpack.c.h.b16 %v1989
        %v2060 = vunpack.c.l.b16 %v1990
        %v2061 = vunpack.c.h.b16 %v1990
        %v2062 = vunpack.c.l.b16 %v1991
        %v2063 = vunpack.c.h.b16 %v1991
        %v2064 = vunpack.c.l.b16 %v1992
        %v2065 = vunpack.c.h.b16 %v1992
        %v2066 = vpack.c.b16 %v2036, %v2034
        %v2067 = vpack.c.b16 %v2037, %v2035
        %v2068 = vpack.c.b16 %v2040, %v2038
        %v2069 = vpack.c.b16 %v2041, %v2039
        %v2070 = vpack.c.b16 %v2044, %v2042
        %v2071 = vpack.c.b16 %v2045, %v2043
        %v2072 = vpack.c.b16 %v2048, %v2046
        %v2073 = vpack.c.b16 %v2049, %v2047
        %v2074 = vpack.c.b16 %v2052, %v2050
        %v2075 = vpack.c.b16 %v2053, %v2051
        %v2076 = vpack.c.b16 %v2056, %v2054
        %v2077 = vpack.c.b16 %v2057, %v2055
        %v2078 = vpack.c.b16 %v2060, %v2058
        %v2079 = vpack.c.b16 %v2061, %v2059
        %v2080 = vpack.c.b16 %v2064, %v2062
        %v2081 = vpack.c.b16 %v2065, %v2063
        %v2108 = vunpack.c.l.b16 %v1993
        %v2109 = vunpack.c.l.b16 %v1994
        %v2110 = vunpack.c.l.b16 %v1995
        %v2111 = vunpack.c.l.b16 %v1996
        %v2112 = vunpack.c.l.b16 %v1997
        %v2113 = vunpack.c.l.b16 %v1998
        %v2114 = vunpack.c.l.b16 %v1999
        %v2115 = vunpack.c.l.b16 %v2000
        %v2116 = vunpack.c.l.b16 %v2001
        %v2117 = vunpack.c.l.b16 %v2002
        %v2118 = vunpack.c.l.b16 %v2003
        %v2119 = vunpack.c.l.b16 %v2004
        %v2120 = vunpack.c.l.b16 %v2005
        %v2121 = vunpack.c.l.b16 %v2006
        %v2122 = vunpack.c.l.b16 %v2007
        %v2123 = vunpack.c.l.b16 %v2008
        %v2124 = vunpack.c.l.b16 %v2009
        %v2125 = vunpack.c.l.b16 %v2010
        %v2126 = vpack.c.b16 %v2109, %v2108
        %v2127 = vpack.c.b16 %v2111, %v2110
        %v2128 = vpack.c.b16 %v2113, %v2112
        %v2129 = vpack.c.b16 %v2115, %v2114
        %v2130 = vpack.c.b16 %v2117, %v2116
        %v2131 = vpack.c.b16 %v2119, %v2118
        %v2132 = vpack.c.b16 %v2121, %v2120
        %v2133 = vpack.c.b16 %v2123, %v2122
        %v2134 = vpack.c.b16 %v2125, %v2124
        %vm2144 = vcmask 130048
        %v2146 = vsel %vm2144, %v2067, 0
        %v2149 = vsel %vm2144, %v2069, 0
        %v2152 = vsel %vm2144, %v2071, 0
        %v2155 = vsel %vm2144, %v2073, 0
        %v2158 = vsel %vm2144, %v2075, 0
        %v2161 = vsel %vm2144, %v2077, 0
        %v2164 = vsel %vm2144, %v2079, 0
        %v2167 = vsel %vm2144, %v2081, 0
        %2169 = vmatprep.subr.bf16.mxu0 0
        %2170 = vmatpush1.bf16.msra.mxu0 %v2133
        %2171 = vmatprep.subr.bf16.mxu0 0
        %2172 = vmatpush1.bf16.msra.mxu0 %v2132
        %2173 = vmatprep.subr.bf16.mxu0 0
        %2174 = vmatpush1.bf16.msra.mxu0 %v2131
        %2175 = vmatprep.subr.bf16.mxu0 0
        %2176 = vmatpush1.bf16.msra.mxu0 %v2130
        %2177 = vmatprep.subr.bf16.mxu0 0
        %2178 = vmatpush1.bf16.msra.mxu0 %v2129
        %2179 = vmatprep.subr.bf16.mxu0 0
        %2180 = vmatpush1.bf16.msra.mxu0 %v2128
        %2181 = vmatprep.subr.bf16.mxu0 0
        %2182 = vmatpush1.bf16.msra.mxu0 %v2127
        %2183 = vmatprep.subr.bf16.mxu0 0
        %2184 = vmatpush1.bf16.msra.mxu0 %v2126
        %2185 = vmatprep.subr.bf16.mxu0 0
        %2186 = vmatpush2.bf16.msra.mxu0 0
        %2187 = vmatprep.subr.bf16.mxu0 0
        %2188 = vmatpush2.bf16.msra.mxu0 0
        %2189 = vmatprep.subr.bf16.mxu0 0
        %2190 = vmatpush2.bf16.msra.mxu0 0
        %2191 = vmatprep.subr.bf16.mxu0 0
        %2192 = vmatpush2.bf16.msra.mxu0 0
        %2193 = vmatprep.subr.bf16.mxu0 0
        %2194 = vmatpush2.bf16.msra.mxu0 0
        %2195 = vmatprep.subr.bf16.mxu0 0
        %2196 = vmatpush2.bf16.msra.mxu0 0
        %2197 = vmatprep.subr.bf16.mxu0 0
        %2198 = vmatpush2.bf16.msra.mxu0 0
        %2199 = vmatprep.subr.bf16.mxu0 0
        %2200 = vmatpush2.bf16.msra.mxu0 %v2134
        %2201 = vmatprep.mubr.bf16.mxu0 %v2146
        %2202 = vmatmul.mubr.bf16.gmra.mxu0 %v2066
        %v2203 = vpop.f32.mrf.mxu0
        %v2204 = vadd.f32 %v2016, %v2203
        %v2205 = vpop.f32.mrf.mxu0
        %v2206 = vpop.f32.mrf.mxu0
        %v2207 = vadd.f32 %v2016, %v2206
        %v2208 = vpop.f32.mrf.mxu0
        %2209 = vmatprep.mubr.bf16.mxu0 %v2149
        %2210 = vmatmul.mubr.bf16.gmra.mxu0 %v2068
        %v2211 = vpop.f32.mrf.mxu0
        %v2212 = vadd.f32 %v2016, %v2211
        %v2213 = vpop.f32.mrf.mxu0
        %v2214 = vpop.f32.mrf.mxu0
        %v2215 = vadd.f32 %v2016, %v2214
        %v2216 = vpop.f32.mrf.mxu0
        %2217 = vmatprep.mubr.bf16.mxu0 %v2152
        %2218 = vmatmul.mubr.bf16.gmra.mxu0 %v2070
        %v2219 = vpop.f32.mrf.mxu0
        %v2220 = vadd.f32 %v2016, %v2219
        %v2221 = vpop.f32.mrf.mxu0
        %v2222 = vpop.f32.mrf.mxu0
        %v2223 = vadd.f32 %v2016, %v2222
        %v2224 = vpop.f32.mrf.mxu0
        %2225 = vmatprep.mubr.bf16.mxu0 %v2155
        %2226 = vmatmul.mubr.bf16.gmra.mxu0 %v2072
        %v2227 = vpop.f32.mrf.mxu0
        %v2228 = vadd.f32 %v2016, %v2227
        %v2229 = vpop.f32.mrf.mxu0
        %v2230 = vpop.f32.mrf.mxu0
        %v2231 = vadd.f32 %v2016, %v2230
        %v2232 = vpop.f32.mrf.mxu0
        %2233 = vmatprep.mubr.bf16.mxu0 %v2158
        %2234 = vmatmul.mubr.bf16.gmra.mxu0 %v2074
        %v2235 = vpop.f32.mrf.mxu0
        %v2236 = vadd.f32 %v2016, %v2235
        %v2237 = vpop.f32.mrf.mxu0
        %v2238 = vpop.f32.mrf.mxu0
        %v2239 = vadd.f32 %v2016, %v2238
        %v2240 = vpop.f32.mrf.mxu0
        %2241 = vmatprep.mubr.bf16.mxu0 %v2161
        %2242 = vmatmul.mubr.bf16.gmra.mxu0 %v2076
        %v2243 = vpop.f32.mrf.mxu0
        %v2244 = vadd.f32 %v2016, %v2243
        %v2245 = vpop.f32.mrf.mxu0
        %v2246 = vpop.f32.mrf.mxu0
        %v2247 = vadd.f32 %v2016, %v2246
        %v2248 = vpop.f32.mrf.mxu0
        %2249 = vmatprep.mubr.bf16.mxu0 %v2164
        %2250 = vmatmul.mubr.bf16.gmra.mxu0 %v2078
        %v2251 = vpop.f32.mrf.mxu0
        %v2252 = vadd.f32 %v2016, %v2251
        %v2253 = vpop.f32.mrf.mxu0
        %v2254 = vpop.f32.mrf.mxu0
        %v2255 = vadd.f32 %v2016, %v2254
        %v2256 = vpop.f32.mrf.mxu0
        %2257 = vmatprep.mubr.bf16.mxu0 %v2167
        %2258 = vmatmul.mubr.bf16.gmra.mxu0 %v2080
        %v2259 = vpop.f32.mrf.mxu0
        %v2260 = vadd.f32 %v2016, %v2259
        %v2261 = vpop.f32.mrf.mxu0
        %v2262 = vpop.f32.mrf.mxu0
        %v2263 = vadd.f32 %v2016, %v2262
        %v2264 = vpop.f32.mrf.mxu0
        %2265 = vdwg.mxu0
        %v2266 = vmax.f32 %v2204, 0.0
        %v2267 = vmax.f32 %v2207, 0.0
        %v2268 = vmax.f32 %v2212, 0.0
        %v2269 = vmax.f32 %v2215, 0.0
        %v2270 = vmax.f32 %v2220, 0.0
        %v2271 = vmax.f32 %v2223, 0.0
        %v2272 = vmax.f32 %v2228, 0.0
        %v2273 = vmax.f32 %v2231, 0.0
        %v2274 = vmax.f32 %v2236, 0.0
        %v2275 = vmax.f32 %v2239, 0.0
        %v2276 = vmax.f32 %v2244, 0.0
        %v2277 = vmax.f32 %v2247, 0.0
        %v2278 = vmax.f32 %v2252, 0.0
        %v2279 = vmax.f32 %v2255, 0.0
        %v2280 = vmax.f32 %v2260, 0.0
        %v2281 = vmax.f32 %v2263, 0.0
        %v2282 = vpack.c.bf16 %v2267, %v2266
        %v2283 = vpack.c.bf16 %v2269, %v2268
        %v2284 = vpack.c.bf16 %v2271, %v2270
        %v2285 = vpack.c.bf16 %v2273, %v2272
        %v2286 = vpack.c.bf16 %v2275, %v2274
        %v2287 = vpack.c.bf16 %v2277, %v2276
        %v2288 = vpack.c.bf16 %v2279, %v2278
        %v2289 = vpack.c.bf16 %v2281, %v2280
        %v2290 = vld [vmem:[%s4] sm:$0xf]
        %v2291 = vld [vmem:[%s4 + $0x4] sm:$0xf]
        %v2292 = vld [vmem:[%s4 + $0x8] sm:$0xf]
        %v2293 = vld [vmem:[%s4 + $0xc] sm:$0xf]
        %v2294 = vld [vmem:[%s5] sm:$0x1]
        %v2296 = vlaneseq
        %v2297 = vshrl.u32 %v2296, 7
        %v2298 = vsub.s32 0, %v2297
        %v2299 = vrot.slane %v2294, %v2298
        %v2305 = vunpack.c.l.b16 %v2290
        %v2306 = vunpack.c.l.b16 %v2291
        %v2307 = vunpack.c.l.b16 %v2292
        %v2308 = vunpack.c.l.b16 %v2293
        %v2309 = vpack.c.b16 %v2306, %v2305
        %v2310 = vpack.c.b16 %v2308, %v2307
        %vm2313 = vcmask 261120
        %v2315 = vsel %vm2313, %v2282, 0
        %v2318 = vsel %vm2313, %v2283, 0
        %v2321 = vsel %vm2313, %v2284, 0
        %v2324 = vsel %vm2313, %v2285, 0
        %v2327 = vsel %vm2313, %v2286, 0
        %v2330 = vsel %vm2313, %v2287, 0
        %v2333 = vsel %vm2313, %v2288, 0
        %v2336 = vsel %vm2313, %v2289, 0
        %2338 = vmatprep.subr.bf16.mxu0 0
        %2339 = vmatpush1.bf16.msra.mxu0 0
        %2340 = vmatprep.subr.bf16.mxu0 0
        %2341 = vmatpush1.bf16.msra.mxu0 0
        %2342 = vmatprep.subr.bf16.mxu0 0
        %2343 = vmatpush1.bf16.msra.mxu0 0
        %2344 = vmatprep.subr.bf16.mxu0 0
        %2345 = vmatpush1.bf16.msra.mxu0 0
        %2346 = vmatprep.subr.bf16.mxu0 0
        %2347 = vmatpush1.bf16.msra.mxu0 0
        %2348 = vmatprep.subr.bf16.mxu0 0
        %2349 = vmatpush1.bf16.msra.mxu0 0
        %2350 = vmatprep.subr.bf16.mxu0 0
        %2351 = vmatpush1.bf16.msra.mxu0 %v2310
        %2352 = vmatprep.subr.bf16.mxu0 0
        %2353 = vmatpush1.bf16.msra.mxu0 %v2309
        %2354 = vmatprep.subr.bf16.mxu0 0
        %2355 = vmatpush2.bf16.msra.mxu0 0
        %2356 = vmatprep.subr.bf16.mxu0 0
        %2357 = vmatpush2.bf16.msra.mxu0 0
        %2358 = vmatprep.subr.bf16.mxu0 0
        %2359 = vmatpush2.bf16.msra.mxu0 0
        %2360 = vmatprep.subr.bf16.mxu0 0
        %2361 = vmatpush2.bf16.msra.mxu0 0
        %2362 = vmatprep.subr.bf16.mxu0 0
        %2363 = vmatpush2.bf16.msra.mxu0 0
        %2364 = vmatprep.subr.bf16.mxu0 0
        %2365 = vmatpush2.bf16.msra.mxu0 0
        %2366 = vmatprep.subr.bf16.mxu0 0
        %2367 = vmatpush2.bf16.msra.mxu0 0
        %2368 = vmatprep.subr.bf16.mxu0 0
        %2369 = vmatpush2.bf16.msra.mxu0 0
        %2370 = vmatprep.mubr.bf16.mxu0 0
        %2371 = vmatmul.mubr.bf16.gmra.mxu0 %v2315
        %v2372 = vpop.f32.mrf.mxu0
        %v2373 = vadd.f32 %v2299, %v2372
        %v2374 = vpop.f32.mrf.mxu0
        %v2375 = vpop.f32.mrf.mxu0
        %v2376 = vadd.f32 %v2299, %v2375
        %v2377 = vpop.f32.mrf.mxu0
        %2378 = vmatprep.mubr.bf16.mxu0 0
        %2379 = vmatmul.mubr.bf16.gmra.mxu0 %v2318
        %v2380 = vpop.f32.mrf.mxu0
        %v2381 = vadd.f32 %v2299, %v2380
        %v2382 = vpop.f32.mrf.mxu0
        %v2383 = vpop.f32.mrf.mxu0
        %v2384 = vadd.f32 %v2299, %v2383
        %v2385 = vpop.f32.mrf.mxu0
        %2386 = vmatprep.mubr.bf16.mxu0 0
        %2387 = vmatmul.mubr.bf16.gmra.mxu0 %v2321
        %v2388 = vpop.f32.mrf.mxu0
        %v2389 = vadd.f32 %v2299, %v2388
        %v2390 = vpop.f32.mrf.mxu0
        %v2391 = vpop.f32.mrf.mxu0
        %v2392 = vadd.f32 %v2299, %v2391
        %v2393 = vpop.f32.mrf.mxu0
        %2394 = vmatprep.mubr.bf16.mxu0 0
        %2395 = vmatmul.mubr.bf16.gmra.mxu0 %v2324
        %v2396 = vpop.f32.mrf.mxu0
        %v2397 = vadd.f32 %v2299, %v2396
        %v2398 = vpop.f32.mrf.mxu0
        %v2399 = vpop.f32.mrf.mxu0
        %v2400 = vadd.f32 %v2299, %v2399
        %v2401 = vpop.f32.mrf.mxu0
        %2402 = vmatprep.mubr.bf16.mxu0 0
        %2403 = vmatmul.mubr.bf16.gmra.mxu0 %v2327
        %v2404 = vpop.f32.mrf.mxu0
        %v2405 = vadd.f32 %v2299, %v2404
        %v2406 = vpop.f32.mrf.mxu0
        %v2407 = vpop.f32.mrf.mxu0
        %v2408 = vadd.f32 %v2299, %v2407
        %v2409 = vpop.f32.mrf.mxu0
        %2410 = vmatprep.mubr.bf16.mxu0 0
        %2411 = vmatmul.mubr.bf16.gmra.mxu0 %v2330
        %v2412 = vpop.f32.mrf.mxu0
        %v2413 = vadd.f32 %v2299, %v2412
        %v2414 = vpop.f32.mrf.mxu0
        %v2415 = vpop.f32.mrf.mxu0
        %v2416 = vadd.f32 %v2299, %v2415
        %v2417 = vpop.f32.mrf.mxu0
        %2418 = vmatprep.mubr.bf16.mxu0 0
        %2419 = vmatmul.mubr.bf16.gmra.mxu0 %v2333
        %v2420 = vpop.f32.mrf.mxu0
        %v2421 = vadd.f32 %v2299, %v2420
        %v2422 = vpop.f32.mrf.mxu0
        %v2423 = vpop.f32.mrf.mxu0
        %v2424 = vadd.f32 %v2299, %v2423
        %v2425 = vpop.f32.mrf.mxu0
        %2426 = vmatprep.mubr.bf16.mxu0 0
        %2427 = vmatmul.mubr.bf16.gmra.mxu0 %v2336
        %v2428 = vpop.f32.mrf.mxu0
        %v2429 = vadd.f32 %v2299, %v2428
        %v2430 = vpop.f32.mrf.mxu0
        %v2431 = vpop.f32.mrf.mxu0
        %v2432 = vadd.f32 %v2299, %v2431
        %v2433 = vpop.f32.mrf.mxu0
        %2434 = vdwg.mxu0
        %2435 = vst [vmem:[%s324] sm:$0xff] %v2373
        %2436 = vst [vmem:[%s324 + $0x8] sm:$0xff] %v2376
        %2437 = vst [vmem:[%s324 + $0x10] sm:$0xff] %v2381
        %2438 = vst [vmem:[%s324 + $0x18] sm:$0xff] %v2384
        %2439 = vst [vmem:[%s324 + $0x20] sm:$0xff] %v2389
        %2440 = vst [vmem:[%s324 + $0x28] sm:$0xff] %v2392
        %2441 = vst [vmem:[%s324 + $0x30] sm:$0xff] %v2397
        %2442 = vst [vmem:[%s324 + $0x38] sm:$0xff] %v2400
        %2443 = vst [vmem:[%s324 + $0x40] sm:$0xff] %v2405
        %2444 = vst [vmem:[%s324 + $0x48] sm:$0xff] %v2408
        %2445 = vst [vmem:[%s324 + $0x50] sm:$0xff] %v2413
        %2446 = vst [vmem:[%s324 + $0x58] sm:$0xff] %v2416
        %2447 = vst [vmem:[%s324 + $0x60] sm:$0xff] %v2421
        %2448 = vst [vmem:[%s324 + $0x68] sm:$0xff] %v2424
        %2449 = vst [vmem:[%s324 + $0x70] sm:$0xff] %v2429
        %2450 = vst [vmem:[%s324 + $0x78] sm:$0xff] %v2432
        %s2451 = sand.u32 %s186, 1
        %s2452 = scalar_lea.sflag [#allocation5], %s2451
        %s2453 = sand.u32 %s186, 1
        %s2454 = smul.addr %s2453, 128
        %s2455 = scalar_lea.vmem [#allocation4], %s2454
        // Predicated region
        $region45: #{tpu_custom_call.1} parent=43 // pred_check
          %p2456 = pneg %p196
        $region46: #{tpu_custom_call.1} parent=43 // pred_check_branch
          %2458 = sbr.rel (%p2456) target = $region48
        $region47: #{tpu_custom_call.1} parent=43 // pred_region
          %s2459 = smul.u32 16, %s25
          %s2461 = ssub.s32 2048, 2048
          %2462 = vsyncadd %s2452, %s2461
          %s2463 = smul.addr %s24, 32
          %s2464 = sadd.s32 %s2459, %s2463
          %s2465 = smul.addr %s2464, 128
          %s2466 = scalar_lea.hbm %s6, %s2465
          %s2467 = sshll.u32 %s2455, 4
          %s2468 = int_to_ptr.vmem [resolvable:$true] %s2467
          %2473 = dma.vmem_to_hbm [thread:$0]  %s2468, 2048, %s2466, %s2452, 128, 128, 8
        $region48: #{tpu_custom_call.1} parent=43 // pred_fallthru
          _
      $region44: #{tpu_custom_call.1} parent=5 // pred_fallthru
        _
      %p2474 = scmp.le.s32.totalorder 2, %s15
      // Predicated region
      $region49: #{tpu_custom_call.1} parent=5 // pred_check
        %p2475 = pneg %p2474
      $region50: #{tpu_custom_call.1} parent=5 // pred_check_branch
        %2477 = sbr.rel (%p2475) target = $region52
      $region51: #{tpu_custom_call.1} parent=5 // pred_region
        %s2478 = ssub.s32 %s15, 2
        // Predicated region
        $region53: #{tpu_custom_call.1} parent=51 // pred_check
          %p2479 = pneg %p202
        $region54: #{tpu_custom_call.1} parent=51 // pred_check_branch
          %2481 = sbr.rel (%p2479) target = $region56
        $region55: #{tpu_custom_call.1} parent=51 // pred_region
          %s2482 = sand.u32 %s187, 1
          %s2483 = scalar_lea.sflag [#allocation5], %s2482
          %s2484 = sand.u32 %s187, 1
          %s2485 = smul.addr %s2484, 128
          %s2486 = scalar_lea.vmem [#allocation4], %s2485
          %2487 = dma.done %s2483, 2048
        $region56: #{tpu_custom_call.1} parent=51 // pred_fallthru
          _
      $region52: #{tpu_custom_call.1} parent=5 // pred_fallthru
        _
    $region6: #{tpu_custom_call.1} parent=1 // loop_footer
      %s19 = sadd.s32 1, %s15
    $region7: #{tpu_custom_call.1} parent=1 // loop_footer_branch
      %14 = sbr.rel target = $region3
    $region8: #{tpu_custom_call.1} parent=1 // loop_exit
      _
    %2488 = vsyncpa [#allocation5], 1
    %s2489 = scalar_lea.sflag [#allocation5], 1
    %2490 = vsyncpa %s2489, 1

</llo_original>
